<compile_context>
chip_gen: v5e
topology: v5e:2x2
jax: 0.10.0
libtpu: 0.0.40
codegen_flags: <defaults>
</compile_context>

<pallas_src>
import numpy as np
import jax
import jax.numpy as jnp
from jax.experimental import pallas as pl
from jax.experimental.pallas import tpu as pltpu

EPS = 1e-5
_KSIZES = (7, 3, 3, 3)
_STRIDE = 2
_PAD = 1


def _build_row_select(n, hp, ho, k, stride):
    """T[ky, n*ho + oy, n*hp + stride*oy + ky] = 1 : row gather expressed as an MXU matmul."""
    t = np.zeros((k, n * ho, n * hp), np.float32)
    for ky in range(k):
        for b in range(n):
            for oy in range(ho):
                t[ky, b * ho + oy, b * hp + stride * oy + ky] = 1.0
    return jnp.asarray(t)


def _build_row_weights(w_hwio, wp, wo, stride):
    """Block-Toeplitz repack of one conv's HWIO weights.

    W[ky, w*cin + ci, ox*cout + co] = w_hwio[ky, w - stride*ox, ci, co] (zero outside the
    kx window), so (one padded input row) @ W[ky] produces that row's contribution to
    every output column of the stride-2 conv in a single matmul.
    """
    k = w_hwio.shape[0]
    cin, cout = w_hwio.shape[2], w_hwio.shape[3]
    wnp = np.asarray(w_hwio, np.float32)
    m = np.zeros((k, wp * cin, wo * cout), np.float32)
    for ky in range(k):
        for ox in range(wo):
            for kx in range(k):
                col = ox * stride + kx
                m[ky, col * cin:(col + 1) * cin, ox * cout:(ox + 1) * cout] = wnp[ky, kx]
    return jnp.asarray(m)


def _make_kernel(n, stages):
    def kernel(x_ref,
               t1, wm1, g1, b1,
               t2, wm2, g2, b2,
               t3, wm3, g3, b3,
               t4, wm4, g4, b4,
               o_ref, p2, p3, p4):
        t_refs = (t1, t2, t3, t4)
        w_refs = (wm1, wm2, wm3, wm4)
        g_refs = (g1, g2, g3, g4)
        b_refs = (b1, b2, b3, b4)
        src_refs = (x_ref, p2, p3, p4)
        dst_refs = (p2, p3, p4, None)

        # zero the padded scratch activations once: their 1-pixel border IS the conv padding
        p2[...] = jnp.zeros_like(p2)
        p3[...] = jnp.zeros_like(p3)
        p4[...] = jnp.zeros_like(p4)

        for s, st in enumerate(stages):
            k, ho, wo, cout = st["k"], st["ho"], st["wo"], st["cout"]
            m_rows = n * ho

            x = src_refs[s][...]                                        # (n*hp, wp*cin)

            # ---- conv: K pairs of lane-dense MXU matmuls ----
            acc = jnp.zeros((m_rows, wo * cout), jnp.float32)
            for ky in range(k):
                rows = jnp.dot(t_refs[s][ky], x,
                               preferred_element_type=jnp.float32)       # (m, wp*cin)
                acc = acc + jnp.dot(rows, w_refs[s][ky],
                                    preferred_element_type=jnp.float32)  # (m, wo*cout)

            # ---- training-mode BatchNorm folded into scale/shift (one-pass stats) ----
            s1 = jnp.sum(acc, axis=0, keepdims=True)                    # (1, wo*cout)
            s2 = jnp.sum(acc * acc, axis=0, keepdims=True)
            c1 = jnp.zeros((1, cout), jnp.float32)
            c2 = jnp.zeros((1, cout), jnp.float32)
            for ox in range(wo):                                        # fold the Wo column blocks
                c1 = c1 + s1[:, ox * cout:(ox + 1) * cout]
                c2 = c2 + s2[:, ox * cout:(ox + 1) * cout]
            cnt = float(n * ho * wo)
            mean = c1 / cnt
            var = jnp.maximum(c2 / cnt - mean * mean, 0.0)
            scale = g_refs[s][...] * jax.lax.rsqrt(var + EPS)           # (1, cout)
            shift = b_refs[s][...] - mean * scale

            if dst_refs[s] is None:
                # last stage: lane-dense (n*ho, wo*cout) output write
                for ox in range(wo):
                    blk = acc[:, ox * cout:(ox + 1) * cout] * scale + shift
                    o_ref[:, ox * cout:(ox + 1) * cout] = jnp.maximum(blk, 0.0)
            else:
                # BN + ReLU fused with the interior write of the next padded activation
                hp_next = stages[s + 1]["hp"]
                for bi in range(n):
                    for ox in range(wo):
                        blk = acc[bi * ho:(bi + 1) * ho,
                                  ox * cout:(ox + 1) * cout] * scale + shift
                        blk = jnp.maximum(blk, 0.0)
                        dst_refs[s][bi * hp_next + 1: bi * hp_next + 1 + ho,
                                    (1 + ox) * cout:(2 + ox) * cout] = blk

    return kernel


def four_conv_larger_forward(x_nchw, weights, gammas, betas):
    """x_nchw: (N, C, H, W) f32; weights: 4 HWIO conv kernels; gammas/betas: 4 x (1, C_out)."""
    n, c0, h0, w0 = x_nchw.shape

    # per-stage geometry (PyTorch conv arithmetic: stride 2, padding 1)
    stages = []
    h, w, cin = h0, w0, c0
    for i, k in enumerate(_KSIZES):
        cout = weights[i].shape[-1]
        hp, wp = h + 2 * _PAD, w + 2 * _PAD
        ho = (hp - k) // _STRIDE + 1
        wo = (wp - k) // _STRIDE + 1
        stages.append(dict(k=k, cin=cin, cout=cout, hp=hp, wp=wp, ho=ho, wo=wo))
        h, w, cin = ho, wo, cout

    # host-side one-time packing: row-select matrices + block-Toeplitz weights
    t_list = [_build_row_select(n, st["hp"], st["ho"], st["k"], _STRIDE) for st in stages]
    wm_list = [_build_row_weights(wt, st["wp"], st["wo"], _STRIDE)
               for wt, st in zip(weights, stages)]

    # NCHW -> NHWC, zero-pad spatially once, collapse to the lane-dense 2-D layout
    x = jnp.transpose(x_nchw, (0, 2, 3, 1)).astype(jnp.float32)
    x = jnp.pad(x, ((0, 0), (_PAD, _PAD), (_PAD, _PAD), (0, 0)))
    x2d = x.reshape(n * stages[0]["hp"], stages[0]["wp"] * c0)

    kernel = _make_kernel(n, stages)
    vm = pl.BlockSpec(memory_space=pltpu.MemorySpace.VMEM)
    last = stages[-1]

    out2d = pl.pallas_call(
        kernel,
        out_shape=jax.ShapeDtypeStruct((n * last["ho"], last["wo"] * last["cout"]),
                                       jnp.float32),
        in_specs=[vm] * 17,
        out_specs=vm,
        scratch_shapes=[
            pltpu.VMEM((n * stages[i + 1]["hp"],
                        stages[i + 1]["wp"] * stages[i]["cout"]), jnp.float32)
            for i in range(3)
        ],
    )(x2d,
      t_list[0], wm_list[0], gammas[0], betas[0],
      t_list[1], wm_list[1], gammas[1], betas[1],
      t_list[2], wm_list[2], gammas[2], betas[2],
      t_list[3], wm_list[3], gammas[3], betas[3])

    # (N*Ho, Wo*C) rows=(n,oy), cols=(ox,co) -> NHWC -> NCHW flatten (matches torch .view(B,-1))
    out = out2d.reshape(n, last["ho"], last["wo"], last["cout"])
    return jnp.transpose(out, (0, 3, 1, 2)).reshape(n, -1)


def reference_forward(x_nchw, weights, gammas, betas):
    """Pure-JAX reference with identical semantics (conv -> training BN -> ReLU, x4, flatten)."""
    x = jnp.transpose(x_nchw, (0, 2, 3, 1)).astype(jnp.float32)
    for w, g, b in zip(weights, gammas, betas):
        x = jax.lax.conv_general_dilated(
            x, w, window_strides=(_STRIDE, _STRIDE),
            padding=((_PAD, _PAD), (_PAD, _PAD)),
            dimension_numbers=("NHWC", "HWIO", "NHWC"))
        m = jnp.mean(x, axis=(0, 1, 2), keepdims=True)
        v = jnp.mean((x - m) ** 2, axis=(0, 1, 2), keepdims=True)
        x = (x - m) * jax.lax.rsqrt(v + EPS) * g.reshape(1, 1, 1, -1) + b.reshape(1, 1, 1, -1)
        x = jnp.maximum(x, 0.0)
    x = jnp.transpose(x, (0, 3, 1, 2))
    return x.reshape(x.shape[0], -1)


if __name__ == "__main__":
    N, C, H, W = 2, 4, 16, 16          # small test shape; 16x16 -> 6 -> 3 -> 2 -> 1 spatially
    chans = [C, 32, 64, 64, 128]

    key = jax.random.PRNGKey(0)
    keys = jax.random.split(key, 13)
    x = jax.random.normal(keys[0], (N, C, H, W), dtype=jnp.float32)

    weights, gammas, betas = [], [], []
    idx = 1
    for i in range(4):
        k = _KSIZES[i]
        weights.append(jax.random.normal(
            keys[idx], (k, k, chans[i], chans[i + 1]), dtype=jnp.float32) * 0.1)
        idx += 1
        gammas.append(1.0 + 0.1 * jax.random.normal(
            keys[idx], (1, chans[i + 1]), dtype=jnp.float32))
        idx += 1
        betas.append(0.1 * jax.random.normal(
            keys[idx], (1, chans[i + 1]), dtype=jnp.float32))
        idx += 1

    out = jax.block_until_ready(four_conv_larger_forward(x, weights, gammas, betas))
    ref = jax.block_until_ready(reference_forward(x, weights, gammas, betas))
    np.testing.assert_allclose(np.asarray(out), np.asarray(ref), rtol=2e-3, atol=2e-3)

    print("KERNEL_OK")
</pallas_src>

<mosaic_0001>
module attributes {stable_mosaic.version = 11 : i64} {
  func.func @kernel(%arg0: memref<36x72xf32, #tpu.memory_space<vmem>>, %arg1: memref<7x12x36xf32, #tpu.memory_space<vmem>>, %arg2: memref<7x72x192xf32, #tpu.memory_space<vmem>>, %arg3: memref<1x32xf32, #tpu.memory_space<vmem>>, %arg4: memref<1x32xf32, #tpu.memory_space<vmem>>, %arg5: memref<3x6x16xf32, #tpu.memory_space<vmem>>, %arg6: memref<3x256x192xf32, #tpu.memory_space<vmem>>, %arg7: memref<1x64xf32, #tpu.memory_space<vmem>>, %arg8: memref<1x64xf32, #tpu.memory_space<vmem>>, %arg9: memref<3x4x10xf32, #tpu.memory_space<vmem>>, %arg10: memref<3x320x128xf32, #tpu.memory_space<vmem>>, %arg11: memref<1x64xf32, #tpu.memory_space<vmem>>, %arg12: memref<1x64xf32, #tpu.memory_space<vmem>>, %arg13: memref<3x2x8xf32, #tpu.memory_space<vmem>>, %arg14: memref<3x256x128xf32, #tpu.memory_space<vmem>>, %arg15: memref<1x128xf32, #tpu.memory_space<vmem>>, %arg16: memref<1x128xf32, #tpu.memory_space<vmem>>, %arg17: memref<2x128xf32, #tpu.memory_space<vmem>>, %arg18: memref<16x256xf32, #tpu.memory_space<vmem>>, %arg19: memref<10x320xf32, #tpu.memory_space<vmem>>, %arg20: memref<8x256xf32, #tpu.memory_space<vmem>>) attributes {dimension_semantics = [], scalar_prefetch = 0 : i64, scratch_operands = 3 : i64, tpu.core_type = #tpu.core_type<tc>} {
    %cst = arith.constant 0.000000e+00 : f32
    %0 = vector.broadcast %cst : f32 to vector<16x256xf32>
    %c0 = arith.constant 0 : index
    %c0_0 = arith.constant 0 : index
    %1 = vector.load %arg18[%c0, %c0_0] : memref<16x256xf32, #tpu.memory_space<vmem>>, vector<16x256xf32>
    tpu.vector_store %arg18[%c0, %c0_0], %0 {strides = array<i32>} : memref<16x256xf32, #tpu.memory_space<vmem>>, vector<16x256xf32>,
    %cst_1 = arith.constant 0.000000e+00 : f32
    %2 = vector.broadcast %cst_1 : f32 to vector<10x320xf32>
    %c0_2 = arith.constant 0 : index
    %c0_3 = arith.constant 0 : index
    %3 = vector.load %arg19[%c0_2, %c0_3] : memref<10x320xf32, #tpu.memory_space<vmem>>, vector<10x320xf32>
    tpu.vector_store %arg19[%c0_2, %c0_3], %2 {strides = array<i32>} : memref<10x320xf32, #tpu.memory_space<vmem>>, vector<10x320xf32>,
    %cst_4 = arith.constant 0.000000e+00 : f32
    %4 = vector.broadcast %cst_4 : f32 to vector<8x256xf32>
    %c0_5 = arith.constant 0 : index
    %c0_6 = arith.constant 0 : index
    %5 = vector.load %arg20[%c0_5, %c0_6] : memref<8x256xf32, #tpu.memory_space<vmem>>, vector<8x256xf32>
    tpu.vector_store %arg20[%c0_5, %c0_6], %4 {strides = array<i32>} : memref<8x256xf32, #tpu.memory_space<vmem>>, vector<8x256xf32>,
    %c0_7 = arith.constant 0 : index
    %c0_8 = arith.constant 0 : index
    %6 = vector.load %arg0[%c0_7, %c0_8] : memref<36x72xf32, #tpu.memory_space<vmem>>, vector<36x72xf32>
    %cst_9 = arith.constant 0.000000e+00 : f32
    %7 = vector.broadcast %cst_9 : f32 to vector<12x192xf32>
    %c0_10 = arith.constant 0 : index
    %c0_11 = arith.constant 0 : index
    %c0_12 = arith.constant 0 : index
    %8 = vector.load %arg1[%c0_10, %c0_11, %c0_12] : memref<7x12x36xf32, #tpu.memory_space<vmem>>, vector<1x12x36xf32>
    %9 = vector.shape_cast %8 : vector<1x12x36xf32> to vector<12x36xf32>
    %cst_13 = arith.constant dense<0.000000e+00> : vector<12x72xf32>
    %10 = tpu.matmul %9, %6, %cst_13 {dimension_numbers = #tpu.dot_dimension_numbers<[1], [0], [0], [1], [0, 0, 1, 1], [], []>} : vector<12x36xf32>, vector<36x72xf32>, vector<12x72xf32> -> vector<12x72xf32>
    %c0_14 = arith.constant 0 : index
    %c0_15 = arith.constant 0 : index
    %c0_16 = arith.constant 0 : index
    %11 = vector.load %arg2[%c0_14, %c0_15, %c0_16] : memref<7x72x192xf32, #tpu.memory_space<vmem>>, vector<1x72x192xf32>
    %12 = vector.shape_cast %11 : vector<1x72x192xf32> to vector<72x192xf32>
    %cst_17 = arith.constant dense<0.000000e+00> : vector<12x192xf32>
    %13 = tpu.matmul %10, %12, %cst_17 {dimension_numbers = #tpu.dot_dimension_numbers<[1], [0], [0], [1], [0, 0, 1, 1], [], []>} : vector<12x72xf32>, vector<72x192xf32>, vector<12x192xf32> -> vector<12x192xf32>
    %14 = arith.addf %7, %13 : vector<12x192xf32>
    %c1 = arith.constant 1 : index
    %c0_18 = arith.constant 0 : index
    %c0_19 = arith.constant 0 : index
    %15 = vector.load %arg1[%c1, %c0_18, %c0_19] : memref<7x12x36xf32, #tpu.memory_space<vmem>>, vector<1x12x36xf32>
    %16 = vector.shape_cast %15 : vector<1x12x36xf32> to vector<12x36xf32>
    %cst_20 = arith.constant dense<0.000000e+00> : vector<12x72xf32>
    %17 = tpu.matmul %16, %6, %cst_20 {dimension_numbers = #tpu.dot_dimension_numbers<[1], [0], [0], [1], [0, 0, 1, 1], [], []>} : vector<12x36xf32>, vector<36x72xf32>, vector<12x72xf32> -> vector<12x72xf32>
    %c1_21 = arith.constant 1 : index
    %c0_22 = arith.constant 0 : index
    %c0_23 = arith.constant 0 : index
    %18 = vector.load %arg2[%c1_21, %c0_22, %c0_23] : memref<7x72x192xf32, #tpu.memory_space<vmem>>, vector<1x72x192xf32>
    %19 = vector.shape_cast %18 : vector<1x72x192xf32> to vector<72x192xf32>
    %cst_24 = arith.constant dense<0.000000e+00> : vector<12x192xf32>
    %20 = tpu.matmul %17, %19, %cst_24 {dimension_numbers = #tpu.dot_dimension_numbers<[1], [0], [0], [1], [0, 0, 1, 1], [], []>} : vector<12x72xf32>, vector<72x192xf32>, vector<12x192xf32> -> vector<12x192xf32>
    %21 = arith.addf %14, %20 : vector<12x192xf32>
    %c2 = arith.constant 2 : index
    %c0_25 = arith.constant 0 : index
    %c0_26 = arith.constant 0 : index
    %22 = vector.load %arg1[%c2, %c0_25, %c0_26] : memref<7x12x36xf32, #tpu.memory_space<vmem>>, vector<1x12x36xf32>
    %23 = vector.shape_cast %22 : vector<1x12x36xf32> to vector<12x36xf32>
    %cst_27 = arith.constant dense<0.000000e+00> : vector<12x72xf32>
    %24 = tpu.matmul %23, %6, %cst_27 {dimension_numbers = #tpu.dot_dimension_numbers<[1], [0], [0], [1], [0, 0, 1, 1], [], []>} : vector<12x36xf32>, vector<36x72xf32>, vector<12x72xf32> -> vector<12x72xf32>
    %c2_28 = arith.constant 2 : index
    %c0_29 = arith.constant 0 : index
    %c0_30 = arith.constant 0 : index
    %25 = vector.load %arg2[%c2_28, %c0_29, %c0_30] : memref<7x72x192xf32, #tpu.memory_space<vmem>>, vector<1x72x192xf32>
    %26 = vector.shape_cast %25 : vector<1x72x192xf32> to vector<72x192xf32>
    %cst_31 = arith.constant dense<0.000000e+00> : vector<12x192xf32>
    %27 = tpu.matmul %24, %26, %cst_31 {dimension_numbers = #tpu.dot_dimension_numbers<[1], [0], [0], [1], [0, 0, 1, 1], [], []>} : vector<12x72xf32>, vector<72x192xf32>, vector<12x192xf32> -> vector<12x192xf32>
    %28 = arith.addf %21, %27 : vector<12x192xf32>
    %c3 = arith.constant 3 : index
    %c0_32 = arith.constant 0 : index
    %c0_33 = arith.constant 0 : index
    %29 = vector.load %arg1[%c3, %c0_32, %c0_33] : memref<7x12x36xf32, #tpu.memory_space<vmem>>, vector<1x12x36xf32>
    %30 = vector.shape_cast %29 : vector<1x12x36xf32> to vector<12x36xf32>
    %cst_34 = arith.constant dense<0.000000e+00> : vector<12x72xf32>
    %31 = tpu.matmul %30, %6, %cst_34 {dimension_numbers = #tpu.dot_dimension_numbers<[1], [0], [0], [1], [0, 0, 1, 1], [], []>} : vector<12x36xf32>, vector<36x72xf32>, vector<12x72xf32> -> vector<12x72xf32>
    %c3_35 = arith.constant 3 : index
    %c0_36 = arith.constant 0 : index
    %c0_37 = arith.constant 0 : index
    %32 = vector.load %arg2[%c3_35, %c0_36, %c0_37] : memref<7x72x192xf32, #tpu.memory_space<vmem>>, vector<1x72x192xf32>
    %33 = vector.shape_cast %32 : vector<1x72x192xf32> to vector<72x192xf32>
    %cst_38 = arith.constant dense<0.000000e+00> : vector<12x192xf32>
    %34 = tpu.matmul %31, %33, %cst_38 {dimension_numbers = #tpu.dot_dimension_numbers<[1], [0], [0], [1], [0, 0, 1, 1], [], []>} : vector<12x72xf32>, vector<72x192xf32>, vector<12x192xf32> -> vector<12x192xf32>
    %35 = arith.addf %28, %34 : vector<12x192xf32>
    %c4 = arith.constant 4 : index
    %c0_39 = arith.constant 0 : index
    %c0_40 = arith.constant 0 : index
    %36 = vector.load %arg1[%c4, %c0_39, %c0_40] : memref<7x12x36xf32, #tpu.memory_space<vmem>>, vector<1x12x36xf32>
    %37 = vector.shape_cast %36 : vector<1x12x36xf32> to vector<12x36xf32>
    %cst_41 = arith.constant dense<0.000000e+00> : vector<12x72xf32>
    %38 = tpu.matmul %37, %6, %cst_41 {dimension_numbers = #tpu.dot_dimension_numbers<[1], [0], [0], [1], [0, 0, 1, 1], [], []>} : vector<12x36xf32>, vector<36x72xf32>, vector<12x72xf32> -> vector<12x72xf32>
    %c4_42 = arith.constant 4 : index
    %c0_43 = arith.constant 0 : index
    %c0_44 = arith.constant 0 : index
    %39 = vector.load %arg2[%c4_42, %c0_43, %c0_44] : memref<7x72x192xf32, #tpu.memory_space<vmem>>, vector<1x72x192xf32>
    %40 = vector.shape_cast %39 : vector<1x72x192xf32> to vector<72x192xf32>
    %cst_45 = arith.constant dense<0.000000e+00> : vector<12x192xf32>
    %41 = tpu.matmul %38, %40, %cst_45 {dimension_numbers = #tpu.dot_dimension_numbers<[1], [0], [0], [1], [0, 0, 1, 1], [], []>} : vector<12x72xf32>, vector<72x192xf32>, vector<12x192xf32> -> vector<12x192xf32>
    %42 = arith.addf %35, %41 : vector<12x192xf32>
    %c5 = arith.constant 5 : index
    %c0_46 = arith.constant 0 : index
    %c0_47 = arith.constant 0 : index
    %43 = vector.load %arg1[%c5, %c0_46, %c0_47] : memref<7x12x36xf32, #tpu.memory_space<vmem>>, vector<1x12x36xf32>
    %44 = vector.shape_cast %43 : vector<1x12x36xf32> to vector<12x36xf32>
    %cst_48 = arith.constant dense<0.000000e+00> : vector<12x72xf32>
    %45 = tpu.matmul %44, %6, %cst_48 {dimension_numbers = #tpu.dot_dimension_numbers<[1], [0], [0], [1], [0, 0, 1, 1], [], []>} : vector<12x36xf32>, vector<36x72xf32>, vector<12x72xf32> -> vector<12x72xf32>
    %c5_49 = arith.constant 5 : index
    %c0_50 = arith.constant 0 : index
    %c0_51 = arith.constant 0 : index
    %46 = vector.load %arg2[%c5_49, %c0_50, %c0_51] : memref<7x72x192xf32, #tpu.memory_space<vmem>>, vector<1x72x192xf32>
    %47 = vector.shape_cast %46 : vector<1x72x192xf32> to vector<72x192xf32>
    %cst_52 = arith.constant dense<0.000000e+00> : vector<12x192xf32>
    %48 = tpu.matmul %45, %47, %cst_52 {dimension_numbers = #tpu.dot_dimension_numbers<[1], [0], [0], [1], [0, 0, 1, 1], [], []>} : vector<12x72xf32>, vector<72x192xf32>, vector<12x192xf32> -> vector<12x192xf32>
    %49 = arith.addf %42, %48 : vector<12x192xf32>
    %c6 = arith.constant 6 : index
    %c0_53 = arith.constant 0 : index
    %c0_54 = arith.constant 0 : index
    %50 = vector.load %arg1[%c6, %c0_53, %c0_54] : memref<7x12x36xf32, #tpu.memory_space<vmem>>, vector<1x12x36xf32>
    %51 = vector.shape_cast %50 : vector<1x12x36xf32> to vector<12x36xf32>
    %cst_55 = arith.constant dense<0.000000e+00> : vector<12x72xf32>
    %52 = tpu.matmul %51, %6, %cst_55 {dimension_numbers = #tpu.dot_dimension_numbers<[1], [0], [0], [1], [0, 0, 1, 1], [], []>} : vector<12x36xf32>, vector<36x72xf32>, vector<12x72xf32> -> vector<12x72xf32>
    %c6_56 = arith.constant 6 : index
    %c0_57 = arith.constant 0 : index
    %c0_58 = arith.constant 0 : index
    %53 = vector.load %arg2[%c6_56, %c0_57, %c0_58] : memref<7x72x192xf32, #tpu.memory_space<vmem>>, vector<1x72x192xf32>
    %54 = vector.shape_cast %53 : vector<1x72x192xf32> to vector<72x192xf32>
    %cst_59 = arith.constant dense<0.000000e+00> : vector<12x192xf32>
    %55 = tpu.matmul %52, %54, %cst_59 {dimension_numbers = #tpu.dot_dimension_numbers<[1], [0], [0], [1], [0, 0, 1, 1], [], []>} : vector<12x72xf32>, vector<72x192xf32>, vector<12x192xf32> -> vector<12x192xf32>
    %56 = arith.addf %49, %55 : vector<12x192xf32>
    %cst_60 = arith.constant dense<0.000000e+00> : vector<192xf32>
    %57 = vector.multi_reduction <add>, %56, %cst_60 [0] : vector<12x192xf32> to vector<192xf32>
    %58 = vector.shape_cast %57 : vector<192xf32> to vector<1x192xf32>
    %59 = arith.mulf %56, %56 : vector<12x192xf32>
    %cst_61 = arith.constant dense<0.000000e+00> : vector<192xf32>
    %60 = vector.multi_reduction <add>, %59, %cst_61 [0] : vector<12x192xf32> to vector<192xf32>
    %61 = vector.shape_cast %60 : vector<192xf32> to vector<1x192xf32>
    %cst_62 = arith.constant 0.000000e+00 : f32
    %62 = vector.broadcast %cst_62 : f32 to vector<1x32xf32>
    %cst_63 = arith.constant 0.000000e+00 : f32
    %63 = vector.broadcast %cst_63 : f32 to vector<1x32xf32>
    %64 = vector.extract_strided_slice %58 {offsets = [0, 0], sizes = [1, 32], strides = [1, 1]} : vector<1x192xf32> to vector<1x32xf32>
    %65 = arith.addf %62, %64 : vector<1x32xf32>
    %66 = vector.extract_strided_slice %61 {offsets = [0, 0], sizes = [1, 32], strides = [1, 1]} : vector<1x192xf32> to vector<1x32xf32>
    %67 = arith.addf %63, %66 : vector<1x32xf32>
    %68 = vector.extract_strided_slice %58 {offsets = [0, 32], sizes = [1, 32], strides = [1, 1]} : vector<1x192xf32> to vector<1x32xf32>
    %69 = arith.addf %65, %68 : vector<1x32xf32>
    %70 = vector.extract_strided_slice %61 {offsets = [0, 32], sizes = [1, 32], strides = [1, 1]} : vector<1x192xf32> to vector<1x32xf32>
    %71 = arith.addf %67, %70 : vector<1x32xf32>
    %72 = vector.extract_strided_slice %58 {offsets = [0, 64], sizes = [1, 32], strides = [1, 1]} : vector<1x192xf32> to vector<1x32xf32>
    %73 = arith.addf %69, %72 : vector<1x32xf32>
    %74 = vector.extract_strided_slice %61 {offsets = [0, 64], sizes = [1, 32], strides = [1, 1]} : vector<1x192xf32> to vector<1x32xf32>
    %75 = arith.addf %71, %74 : vector<1x32xf32>
    %76 = vector.extract_strided_slice %58 {offsets = [0, 96], sizes = [1, 32], strides = [1, 1]} : vector<1x192xf32> to vector<1x32xf32>
    %77 = arith.addf %73, %76 : vector<1x32xf32>
    %78 = vector.extract_strided_slice %61 {offsets = [0, 96], sizes = [1, 32], strides = [1, 1]} : vector<1x192xf32> to vector<1x32xf32>
    %79 = arith.addf %75, %78 : vector<1x32xf32>
    %80 = vector.extract_strided_slice %58 {offsets = [0, 128], sizes = [1, 32], strides = [1, 1]} : vector<1x192xf32> to vector<1x32xf32>
    %81 = arith.addf %77, %80 : vector<1x32xf32>
    %82 = vector.extract_strided_slice %61 {offsets = [0, 128], sizes = [1, 32], strides = [1, 1]} : vector<1x192xf32> to vector<1x32xf32>
    %83 = arith.addf %79, %82 : vector<1x32xf32>
    %84 = vector.extract_strided_slice %58 {offsets = [0, 160], sizes = [1, 32], strides = [1, 1]} : vector<1x192xf32> to vector<1x32xf32>
    %85 = arith.addf %81, %84 : vector<1x32xf32>
    %86 = vector.extract_strided_slice %61 {offsets = [0, 160], sizes = [1, 32], strides = [1, 1]} : vector<1x192xf32> to vector<1x32xf32>
    %87 = arith.addf %83, %86 : vector<1x32xf32>
    %cst_64 = arith.constant 7.200000e+01 : f32
    %88 = vector.broadcast %cst_64 : f32 to vector<1x32xf32>
    %89 = arith.divf %85, %88 : vector<1x32xf32>
    %cst_65 = arith.constant 7.200000e+01 : f32
    %90 = vector.broadcast %cst_65 : f32 to vector<1x32xf32>
    %91 = arith.divf %87, %90 : vector<1x32xf32>
    %92 = arith.mulf %89, %89 : vector<1x32xf32>
    %93 = arith.subf %91, %92 : vector<1x32xf32>
    %cst_66 = arith.constant 0.000000e+00 : f32
    %94 = vector.broadcast %cst_66 : f32 to vector<1x32xf32>
    %95 = arith.maximumf %93, %94 : vector<1x32xf32>
    %c0_67 = arith.constant 0 : index
    %c0_68 = arith.constant 0 : index
    %96 = vector.load %arg3[%c0_67, %c0_68] : memref<1x32xf32, #tpu.memory_space<vmem>>, vector<1x32xf32>
    %cst_69 = arith.constant 9.99999974E-6 : f32
    %97 = vector.broadcast %cst_69 : f32 to vector<1x32xf32>
    %98 = arith.addf %95, %97 : vector<1x32xf32>
    %99 = math.rsqrt %98 : vector<1x32xf32>
    %100 = arith.mulf %96, %99 : vector<1x32xf32>
    %c0_70 = arith.constant 0 : index
    %c0_71 = arith.constant 0 : index
    %101 = vector.load %arg4[%c0_70, %c0_71] : memref<1x32xf32, #tpu.memory_space<vmem>>, vector<1x32xf32>
    %102 = arith.mulf %89, %100 : vector<1x32xf32>
    %103 = arith.subf %101, %102 : vector<1x32xf32>
    %104 = vector.extract_strided_slice %56 {offsets = [0, 0], sizes = [6, 32], strides = [1, 1]} : vector<12x192xf32> to vector<6x32xf32>
    %105 = vector.broadcast %100 : vector<1x32xf32> to vector<6x32xf32>
    %106 = arith.mulf %104, %105 : vector<6x32xf32>
    %107 = vector.broadcast %103 : vector<1x32xf32> to vector<6x32xf32>
    %108 = arith.addf %106, %107 : vector<6x32xf32>
    %cst_72 = arith.constant 0.000000e+00 : f32
    %109 = vector.broadcast %cst_72 : f32 to vector<6x32xf32>
    %110 = arith.maximumf %108, %109 : vector<6x32xf32>
    %c1_73 = arith.constant 1 : index
    %c32 = arith.constant 32 : index
    %111 = vector.load %arg18[%c1_73, %c32] : memref<16x256xf32, #tpu.memory_space<vmem>>, vector<6x32xf32>
    tpu.vector_store %arg18[%c1_73, %c32], %110 {strides = array<i32>} : memref<16x256xf32, #tpu.memory_space<vmem>>, vector<6x32xf32>,
    %112 = vector.extract_strided_slice %56 {offsets = [0, 32], sizes = [6, 32], strides = [1, 1]} : vector<12x192xf32> to vector<6x32xf32>
    %113 = vector.broadcast %100 : vector<1x32xf32> to vector<6x32xf32>
    %114 = arith.mulf %112, %113 : vector<6x32xf32>
    %115 = vector.broadcast %103 : vector<1x32xf32> to vector<6x32xf32>
    %116 = arith.addf %114, %115 : vector<6x32xf32>
    %cst_74 = arith.constant 0.000000e+00 : f32
    %117 = vector.broadcast %cst_74 : f32 to vector<6x32xf32>
    %118 = arith.maximumf %116, %117 : vector<6x32xf32>
    %c1_75 = arith.constant 1 : index
    %c64 = arith.constant 64 : index
    %119 = vector.load %arg18[%c1_75, %c64] : memref<16x256xf32, #tpu.memory_space<vmem>>, vector<6x32xf32>
    tpu.vector_store %arg18[%c1_75, %c64], %118 {strides = array<i32>} : memref<16x256xf32, #tpu.memory_space<vmem>>, vector<6x32xf32>,
    %120 = vector.extract_strided_slice %56 {offsets = [0, 64], sizes = [6, 32], strides = [1, 1]} : vector<12x192xf32> to vector<6x32xf32>
    %121 = vector.broadcast %100 : vector<1x32xf32> to vector<6x32xf32>
    %122 = arith.mulf %120, %121 : vector<6x32xf32>
    %123 = vector.broadcast %103 : vector<1x32xf32> to vector<6x32xf32>
    %124 = arith.addf %122, %123 : vector<6x32xf32>
    %cst_76 = arith.constant 0.000000e+00 : f32
    %125 = vector.broadcast %cst_76 : f32 to vector<6x32xf32>
    %126 = arith.maximumf %124, %125 : vector<6x32xf32>
    %c1_77 = arith.constant 1 : index
    %c96 = arith.constant 96 : index
    %127 = vector.load %arg18[%c1_77, %c96] : memref<16x256xf32, #tpu.memory_space<vmem>>, vector<6x32xf32>
    tpu.vector_store %arg18[%c1_77, %c96], %126 {strides = array<i32>} : memref<16x256xf32, #tpu.memory_space<vmem>>, vector<6x32xf32>,
    %128 = vector.extract_strided_slice %56 {offsets = [0, 96], sizes = [6, 32], strides = [1, 1]} : vector<12x192xf32> to vector<6x32xf32>
    %129 = vector.broadcast %100 : vector<1x32xf32> to vector<6x32xf32>
    %130 = arith.mulf %128, %129 : vector<6x32xf32>
    %131 = vector.broadcast %103 : vector<1x32xf32> to vector<6x32xf32>
    %132 = arith.addf %130, %131 : vector<6x32xf32>
    %cst_78 = arith.constant 0.000000e+00 : f32
    %133 = vector.broadcast %cst_78 : f32 to vector<6x32xf32>
    %134 = arith.maximumf %132, %133 : vector<6x32xf32>
    %c1_79 = arith.constant 1 : index
    %c128 = arith.constant 128 : index
    %135 = vector.load %arg18[%c1_79, %c128] : memref<16x256xf32, #tpu.memory_space<vmem>>, vector<6x32xf32>
    tpu.vector_store %arg18[%c1_79, %c128], %134 {strides = array<i32>} : memref<16x256xf32, #tpu.memory_space<vmem>>, vector<6x32xf32>,
    %136 = vector.extract_strided_slice %56 {offsets = [0, 128], sizes = [6, 32], strides = [1, 1]} : vector<12x192xf32> to vector<6x32xf32>
    %137 = vector.broadcast %100 : vector<1x32xf32> to vector<6x32xf32>
    %138 = arith.mulf %136, %137 : vector<6x32xf32>
    %139 = vector.broadcast %103 : vector<1x32xf32> to vector<6x32xf32>
    %140 = arith.addf %138, %139 : vector<6x32xf32>
    %cst_80 = arith.constant 0.000000e+00 : f32
    %141 = vector.broadcast %cst_80 : f32 to vector<6x32xf32>
    %142 = arith.maximumf %140, %141 : vector<6x32xf32>
    %c1_81 = arith.constant 1 : index
    %c160 = arith.constant 160 : index
    %143 = vector.load %arg18[%c1_81, %c160] : memref<16x256xf32, #tpu.memory_space<vmem>>, vector<6x32xf32>
    tpu.vector_store %arg18[%c1_81, %c160], %142 {strides = array<i32>} : memref<16x256xf32, #tpu.memory_space<vmem>>, vector<6x32xf32>,
    %144 = vector.extract_strided_slice %56 {offsets = [0, 160], sizes = [6, 32], strides = [1, 1]} : vector<12x192xf32> to vector<6x32xf32>
    %145 = vector.broadcast %100 : vector<1x32xf32> to vector<6x32xf32>
    %146 = arith.mulf %144, %145 : vector<6x32xf32>
    %147 = vector.broadcast %103 : vector<1x32xf32> to vector<6x32xf32>
    %148 = arith.addf %146, %147 : vector<6x32xf32>
    %cst_82 = arith.constant 0.000000e+00 : f32
    %149 = vector.broadcast %cst_82 : f32 to vector<6x32xf32>
    %150 = arith.maximumf %148, %149 : vector<6x32xf32>
    %c1_83 = arith.constant 1 : index
    %c192 = arith.constant 192 : index
    %151 = vector.load %arg18[%c1_83, %c192] : memref<16x256xf32, #tpu.memory_space<vmem>>, vector<6x32xf32>
    tpu.vector_store %arg18[%c1_83, %c192], %150 {strides = array<i32>} : memref<16x256xf32, #tpu.memory_space<vmem>>, vector<6x32xf32>,
    %152 = vector.extract_strided_slice %56 {offsets = [6, 0], sizes = [6, 32], strides = [1, 1]} : vector<12x192xf32> to vector<6x32xf32>
    %153 = vector.broadcast %100 : vector<1x32xf32> to vector<6x32xf32>
    %154 = arith.mulf %152, %153 : vector<6x32xf32>
    %155 = vector.broadcast %103 : vector<1x32xf32> to vector<6x32xf32>
    %156 = arith.addf %154, %155 : vector<6x32xf32>
    %cst_84 = arith.constant 0.000000e+00 : f32
    %157 = vector.broadcast %cst_84 : f32 to vector<6x32xf32>
    %158 = arith.maximumf %156, %157 : vector<6x32xf32>
    %c9 = arith.constant 9 : index
    %c32_85 = arith.constant 32 : index
    %159 = vector.load %arg18[%c9, %c32_85] : memref<16x256xf32, #tpu.memory_space<vmem>>, vector<6x32xf32>
    tpu.vector_store %arg18[%c9, %c32_85], %158 {strides = array<i32>} : memref<16x256xf32, #tpu.memory_space<vmem>>, vector<6x32xf32>,
    %160 = vector.extract_strided_slice %56 {offsets = [6, 32], sizes = [6, 32], strides = [1, 1]} : vector<12x192xf32> to vector<6x32xf32>
    %161 = vector.broadcast %100 : vector<1x32xf32> to vector<6x32xf32>
    %162 = arith.mulf %160, %161 : vector<6x32xf32>
    %163 = vector.broadcast %103 : vector<1x32xf32> to vector<6x32xf32>
    %164 = arith.addf %162, %163 : vector<6x32xf32>
    %cst_86 = arith.constant 0.000000e+00 : f32
    %165 = vector.broadcast %cst_86 : f32 to vector<6x32xf32>
    %166 = arith.maximumf %164, %165 : vector<6x32xf32>
    %c9_87 = arith.constant 9 : index
    %c64_88 = arith.constant 64 : index
    %167 = vector.load %arg18[%c9_87, %c64_88] : memref<16x256xf32, #tpu.memory_space<vmem>>, vector<6x32xf32>
    tpu.vector_store %arg18[%c9_87, %c64_88], %166 {strides = array<i32>} : memref<16x256xf32, #tpu.memory_space<vmem>>, vector<6x32xf32>,
    %168 = vector.extract_strided_slice %56 {offsets = [6, 64], sizes = [6, 32], strides = [1, 1]} : vector<12x192xf32> to vector<6x32xf32>
    %169 = vector.broadcast %100 : vector<1x32xf32> to vector<6x32xf32>
    %170 = arith.mulf %168, %169 : vector<6x32xf32>
    %171 = vector.broadcast %103 : vector<1x32xf32> to vector<6x32xf32>
    %172 = arith.addf %170, %171 : vector<6x32xf32>
    %cst_89 = arith.constant 0.000000e+00 : f32
    %173 = vector.broadcast %cst_89 : f32 to vector<6x32xf32>
    %174 = arith.maximumf %172, %173 : vector<6x32xf32>
    %c9_90 = arith.constant 9 : index
    %c96_91 = arith.constant 96 : index
    %175 = vector.load %arg18[%c9_90, %c96_91] : memref<16x256xf32, #tpu.memory_space<vmem>>, vector<6x32xf32>
    tpu.vector_store %arg18[%c9_90, %c96_91], %174 {strides = array<i32>} : memref<16x256xf32, #tpu.memory_space<vmem>>, vector<6x32xf32>,
    %176 = vector.extract_strided_slice %56 {offsets = [6, 96], sizes = [6, 32], strides = [1, 1]} : vector<12x192xf32> to vector<6x32xf32>
    %177 = vector.broadcast %100 : vector<1x32xf32> to vector<6x32xf32>
    %178 = arith.mulf %176, %177 : vector<6x32xf32>
    %179 = vector.broadcast %103 : vector<1x32xf32> to vector<6x32xf32>
    %180 = arith.addf %178, %179 : vector<6x32xf32>
    %cst_92 = arith.constant 0.000000e+00 : f32
    %181 = vector.broadcast %cst_92 : f32 to vector<6x32xf32>
    %182 = arith.maximumf %180, %181 : vector<6x32xf32>
    %c9_93 = arith.constant 9 : index
    %c128_94 = arith.constant 128 : index
    %183 = vector.load %arg18[%c9_93, %c128_94] : memref<16x256xf32, #tpu.memory_space<vmem>>, vector<6x32xf32>
    tpu.vector_store %arg18[%c9_93, %c128_94], %182 {strides = array<i32>} : memref<16x256xf32, #tpu.memory_space<vmem>>, vector<6x32xf32>,
    %184 = vector.extract_strided_slice %56 {offsets = [6, 128], sizes = [6, 32], strides = [1, 1]} : vector<12x192xf32> to vector<6x32xf32>
    %185 = vector.broadcast %100 : vector<1x32xf32> to vector<6x32xf32>
    %186 = arith.mulf %184, %185 : vector<6x32xf32>
    %187 = vector.broadcast %103 : vector<1x32xf32> to vector<6x32xf32>
    %188 = arith.addf %186, %187 : vector<6x32xf32>
    %cst_95 = arith.constant 0.000000e+00 : f32
    %189 = vector.broadcast %cst_95 : f32 to vector<6x32xf32>
    %190 = arith.maximumf %188, %189 : vector<6x32xf32>
    %c9_96 = arith.constant 9 : index
    %c160_97 = arith.constant 160 : index
    %191 = vector.load %arg18[%c9_96, %c160_97] : memref<16x256xf32, #tpu.memory_space<vmem>>, vector<6x32xf32>
    tpu.vector_store %arg18[%c9_96, %c160_97], %190 {strides = array<i32>} : memref<16x256xf32, #tpu.memory_space<vmem>>, vector<6x32xf32>,
    %192 = vector.extract_strided_slice %56 {offsets = [6, 160], sizes = [6, 32], strides = [1, 1]} : vector<12x192xf32> to vector<6x32xf32>
    %193 = vector.broadcast %100 : vector<1x32xf32> to vector<6x32xf32>
    %194 = arith.mulf %192, %193 : vector<6x32xf32>
    %195 = vector.broadcast %103 : vector<1x32xf32> to vector<6x32xf32>
    %196 = arith.addf %194, %195 : vector<6x32xf32>
    %cst_98 = arith.constant 0.000000e+00 : f32
    %197 = vector.broadcast %cst_98 : f32 to vector<6x32xf32>
    %198 = arith.maximumf %196, %197 : vector<6x32xf32>
    %c9_99 = arith.constant 9 : index
    %c192_100 = arith.constant 192 : index
    %199 = vector.load %arg18[%c9_99, %c192_100] : memref<16x256xf32, #tpu.memory_space<vmem>>, vector<6x32xf32>
    tpu.vector_store %arg18[%c9_99, %c192_100], %198 {strides = array<i32>} : memref<16x256xf32, #tpu.memory_space<vmem>>, vector<6x32xf32>,
    %c0_101 = arith.constant 0 : index
    %c0_102 = arith.constant 0 : index
    %200 = vector.load %arg18[%c0_101, %c0_102] : memref<16x256xf32, #tpu.memory_space<vmem>>, vector<16x256xf32>
    %cst_103 = arith.constant 0.000000e+00 : f32
    %201 = vector.broadcast %cst_103 : f32 to vector<6x192xf32>
    %c0_104 = arith.constant 0 : index
    %c0_105 = arith.constant 0 : index
    %c0_106 = arith.constant 0 : index
    %202 = vector.load %arg5[%c0_104, %c0_105, %c0_106] : memref<3x6x16xf32, #tpu.memory_space<vmem>>, vector<1x6x16xf32>
    %203 = vector.shape_cast %202 : vector<1x6x16xf32> to vector<6x16xf32>
    %cst_107 = arith.constant dense<0.000000e+00> : vector<6x256xf32>
    %204 = tpu.matmul %203, %200, %cst_107 {dimension_numbers = #tpu.dot_dimension_numbers<[1], [0], [0], [1], [0, 0, 1, 1], [], []>} : vector<6x16xf32>, vector<16x256xf32>, vector<6x256xf32> -> vector<6x256xf32>
    %c0_108 = arith.constant 0 : index
    %c0_109 = arith.constant 0 : index
    %c0_110 = arith.constant 0 : index
    %205 = vector.load %arg6[%c0_108, %c0_109, %c0_110] : memref<3x256x192xf32, #tpu.memory_space<vmem>>, vector<1x256x192xf32>
    %206 = vector.shape_cast %205 : vector<1x256x192xf32> to vector<256x192xf32>
    %cst_111 = arith.constant dense<0.000000e+00> : vector<6x192xf32>
    %207 = tpu.matmul %204, %206, %cst_111 {dimension_numbers = #tpu.dot_dimension_numbers<[1], [0], [0], [1], [0, 0, 1, 1], [], []>} : vector<6x256xf32>, vector<256x192xf32>, vector<6x192xf32> -> vector<6x192xf32>
    %208 = arith.addf %201, %207 : vector<6x192xf32>
    %c1_112 = arith.constant 1 : index
    %c0_113 = arith.constant 0 : index
    %c0_114 = arith.constant 0 : index
    %209 = vector.load %arg5[%c1_112, %c0_113, %c0_114] : memref<3x6x16xf32, #tpu.memory_space<vmem>>, vector<1x6x16xf32>
    %210 = vector.shape_cast %209 : vector<1x6x16xf32> to vector<6x16xf32>
    %cst_115 = arith.constant dense<0.000000e+00> : vector<6x256xf32>
    %211 = tpu.matmul %210, %200, %cst_115 {dimension_numbers = #tpu.dot_dimension_numbers<[1], [0], [0], [1], [0, 0, 1, 1], [], []>} : vector<6x16xf32>, vector<16x256xf32>, vector<6x256xf32> -> vector<6x256xf32>
    %c1_116 = arith.constant 1 : index
    %c0_117 = arith.constant 0 : index
    %c0_118 = arith.constant 0 : index
    %212 = vector.load %arg6[%c1_116, %c0_117, %c0_118] : memref<3x256x192xf32, #tpu.memory_space<vmem>>, vector<1x256x192xf32>
    %213 = vector.shape_cast %212 : vector<1x256x192xf32> to vector<256x192xf32>
    %cst_119 = arith.constant dense<0.000000e+00> : vector<6x192xf32>
    %214 = tpu.matmul %211, %213, %cst_119 {dimension_numbers = #tpu.dot_dimension_numbers<[1], [0], [0], [1], [0, 0, 1, 1], [], []>} : vector<6x256xf32>, vector<256x192xf32>, vector<6x192xf32> -> vector<6x192xf32>
    %215 = arith.addf %208, %214 : vector<6x192xf32>
    %c2_120 = arith.constant 2 : index
    %c0_121 = arith.constant 0 : index
    %c0_122 = arith.constant 0 : index
    %216 = vector.load %arg5[%c2_120, %c0_121, %c0_122] : memref<3x6x16xf32, #tpu.memory_space<vmem>>, vector<1x6x16xf32>
    %217 = vector.shape_cast %216 : vector<1x6x16xf32> to vector<6x16xf32>
    %cst_123 = arith.constant dense<0.000000e+00> : vector<6x256xf32>
    %218 = tpu.matmul %217, %200, %cst_123 {dimension_numbers = #tpu.dot_dimension_numbers<[1], [0], [0], [1], [0, 0, 1, 1], [], []>} : vector<6x16xf32>, vector<16x256xf32>, vector<6x256xf32> -> vector<6x256xf32>
    %c2_124 = arith.constant 2 : index
    %c0_125 = arith.constant 0 : index
    %c0_126 = arith.constant 0 : index
    %219 = vector.load %arg6[%c2_124, %c0_125, %c0_126] : memref<3x256x192xf32, #tpu.memory_space<vmem>>, vector<1x256x192xf32>
    %220 = vector.shape_cast %219 : vector<1x256x192xf32> to vector<256x192xf32>
    %cst_127 = arith.constant dense<0.000000e+00> : vector<6x192xf32>
    %221 = tpu.matmul %218, %220, %cst_127 {dimension_numbers = #tpu.dot_dimension_numbers<[1], [0], [0], [1], [0, 0, 1, 1], [], []>} : vector<6x256xf32>, vector<256x192xf32>, vector<6x192xf32> -> vector<6x192xf32>
    %222 = arith.addf %215, %221 : vector<6x192xf32>
    %cst_128 = arith.constant dense<0.000000e+00> : vector<192xf32>
    %223 = vector.multi_reduction <add>, %222, %cst_128 [0] : vector<6x192xf32> to vector<192xf32>
    %224 = vector.shape_cast %223 : vector<192xf32> to vector<1x192xf32>
    %225 = arith.mulf %222, %222 : vector<6x192xf32>
    %cst_129 = arith.constant dense<0.000000e+00> : vector<192xf32>
    %226 = vector.multi_reduction <add>, %225, %cst_129 [0] : vector<6x192xf32> to vector<192xf32>
    %227 = vector.shape_cast %226 : vector<192xf32> to vector<1x192xf32>
    %cst_130 = arith.constant 0.000000e+00 : f32
    %228 = vector.broadcast %cst_130 : f32 to vector<1x64xf32>
    %cst_131 = arith.constant 0.000000e+00 : f32
    %229 = vector.broadcast %cst_131 : f32 to vector<1x64xf32>
    %230 = vector.extract_strided_slice %224 {offsets = [0, 0], sizes = [1, 64], strides = [1, 1]} : vector<1x192xf32> to vector<1x64xf32>
    %231 = arith.addf %228, %230 : vector<1x64xf32>
    %232 = vector.extract_strided_slice %227 {offsets = [0, 0], sizes = [1, 64], strides = [1, 1]} : vector<1x192xf32> to vector<1x64xf32>
    %233 = arith.addf %229, %232 : vector<1x64xf32>
    %234 = vector.extract_strided_slice %224 {offsets = [0, 64], sizes = [1, 64], strides = [1, 1]} : vector<1x192xf32> to vector<1x64xf32>
    %235 = arith.addf %231, %234 : vector<1x64xf32>
    %236 = vector.extract_strided_slice %227 {offsets = [0, 64], sizes = [1, 64], strides = [1, 1]} : vector<1x192xf32> to vector<1x64xf32>
    %237 = arith.addf %233, %236 : vector<1x64xf32>
    %238 = vector.extract_strided_slice %224 {offsets = [0, 128], sizes = [1, 64], strides = [1, 1]} : vector<1x192xf32> to vector<1x64xf32>
    %239 = arith.addf %235, %238 : vector<1x64xf32>
    %240 = vector.extract_strided_slice %227 {offsets = [0, 128], sizes = [1, 64], strides = [1, 1]} : vector<1x192xf32> to vector<1x64xf32>
    %241 = arith.addf %237, %240 : vector<1x64xf32>
    %cst_132 = arith.constant 1.800000e+01 : f32
    %242 = vector.broadcast %cst_132 : f32 to vector<1x64xf32>
    %243 = arith.divf %239, %242 : vector<1x64xf32>
    %cst_133 = arith.constant 1.800000e+01 : f32
    %244 = vector.broadcast %cst_133 : f32 to vector<1x64xf32>
    %245 = arith.divf %241, %244 : vector<1x64xf32>
    %246 = arith.mulf %243, %243 : vector<1x64xf32>
    %247 = arith.subf %245, %246 : vector<1x64xf32>
    %cst_134 = arith.constant 0.000000e+00 : f32
    %248 = vector.broadcast %cst_134 : f32 to vector<1x64xf32>
    %249 = arith.maximumf %247, %248 : vector<1x64xf32>
    %c0_135 = arith.constant 0 : index
    %c0_136 = arith.constant 0 : index
    %250 = vector.load %arg7[%c0_135, %c0_136] : memref<1x64xf32, #tpu.memory_space<vmem>>, vector<1x64xf32>
    %cst_137 = arith.constant 9.99999974E-6 : f32
    %251 = vector.broadcast %cst_137 : f32 to vector<1x64xf32>
    %252 = arith.addf %249, %251 : vector<1x64xf32>
    %253 = math.rsqrt %252 : vector<1x64xf32>
    %254 = arith.mulf %250, %253 : vector<1x64xf32>
    %c0_138 = arith.constant 0 : index
    %c0_139 = arith.constant 0 : index
    %255 = vector.load %arg8[%c0_138, %c0_139] : memref<1x64xf32, #tpu.memory_space<vmem>>, vector<1x64xf32>
    %256 = arith.mulf %243, %254 : vector<1x64xf32>
    %257 = arith.subf %255, %256 : vector<1x64xf32>
    %258 = vector.extract_strided_slice %222 {offsets = [0, 0], sizes = [3, 64], strides = [1, 1]} : vector<6x192xf32> to vector<3x64xf32>
    %259 = vector.broadcast %254 : vector<1x64xf32> to vector<3x64xf32>
    %260 = arith.mulf %258, %259 : vector<3x64xf32>
    %261 = vector.broadcast %257 : vector<1x64xf32> to vector<3x64xf32>
    %262 = arith.addf %260, %261 : vector<3x64xf32>
    %cst_140 = arith.constant 0.000000e+00 : f32
    %263 = vector.broadcast %cst_140 : f32 to vector<3x64xf32>
    %264 = arith.maximumf %262, %263 : vector<3x64xf32>
    %c1_141 = arith.constant 1 : index
    %c64_142 = arith.constant 64 : index
    %265 = vector.load %arg19[%c1_141, %c64_142] : memref<10x320xf32, #tpu.memory_space<vmem>>, vector<3x64xf32>
    tpu.vector_store %arg19[%c1_141, %c64_142], %264 {strides = array<i32>} : memref<10x320xf32, #tpu.memory_space<vmem>>, vector<3x64xf32>,
    %266 = vector.extract_strided_slice %222 {offsets = [0, 64], sizes = [3, 64], strides = [1, 1]} : vector<6x192xf32> to vector<3x64xf32>
    %267 = vector.broadcast %254 : vector<1x64xf32> to vector<3x64xf32>
    %268 = arith.mulf %266, %267 : vector<3x64xf32>
    %269 = vector.broadcast %257 : vector<1x64xf32> to vector<3x64xf32>
    %270 = arith.addf %268, %269 : vector<3x64xf32>
    %cst_143 = arith.constant 0.000000e+00 : f32
    %271 = vector.broadcast %cst_143 : f32 to vector<3x64xf32>
    %272 = arith.maximumf %270, %271 : vector<3x64xf32>
    %c1_144 = arith.constant 1 : index
    %c128_145 = arith.constant 128 : index
    %273 = vector.load %arg19[%c1_144, %c128_145] : memref<10x320xf32, #tpu.memory_space<vmem>>, vector<3x64xf32>
    tpu.vector_store %arg19[%c1_144, %c128_145], %272 {strides = array<i32>} : memref<10x320xf32, #tpu.memory_space<vmem>>, vector<3x64xf32>,
    %274 = vector.extract_strided_slice %222 {offsets = [0, 128], sizes = [3, 64], strides = [1, 1]} : vector<6x192xf32> to vector<3x64xf32>
    %275 = vector.broadcast %254 : vector<1x64xf32> to vector<3x64xf32>
    %276 = arith.mulf %274, %275 : vector<3x64xf32>
    %277 = vector.broadcast %257 : vector<1x64xf32> to vector<3x64xf32>
    %278 = arith.addf %276, %277 : vector<3x64xf32>
    %cst_146 = arith.constant 0.000000e+00 : f32
    %279 = vector.broadcast %cst_146 : f32 to vector<3x64xf32>
    %280 = arith.maximumf %278, %279 : vector<3x64xf32>
    %c1_147 = arith.constant 1 : index
    %c192_148 = arith.constant 192 : index
    %281 = vector.load %arg19[%c1_147, %c192_148] : memref<10x320xf32, #tpu.memory_space<vmem>>, vector<3x64xf32>
    tpu.vector_store %arg19[%c1_147, %c192_148], %280 {strides = array<i32>} : memref<10x320xf32, #tpu.memory_space<vmem>>, vector<3x64xf32>,
    %282 = vector.extract_strided_slice %222 {offsets = [3, 0], sizes = [3, 64], strides = [1, 1]} : vector<6x192xf32> to vector<3x64xf32>
    %283 = vector.broadcast %254 : vector<1x64xf32> to vector<3x64xf32>
    %284 = arith.mulf %282, %283 : vector<3x64xf32>
    %285 = vector.broadcast %257 : vector<1x64xf32> to vector<3x64xf32>
    %286 = arith.addf %284, %285 : vector<3x64xf32>
    %cst_149 = arith.constant 0.000000e+00 : f32
    %287 = vector.broadcast %cst_149 : f32 to vector<3x64xf32>
    %288 = arith.maximumf %286, %287 : vector<3x64xf32>
    %c6_150 = arith.constant 6 : index
    %c64_151 = arith.constant 64 : index
    %289 = vector.load %arg19[%c6_150, %c64_151] : memref<10x320xf32, #tpu.memory_space<vmem>>, vector<3x64xf32>
    tpu.vector_store %arg19[%c6_150, %c64_151], %288 {strides = array<i32>} : memref<10x320xf32, #tpu.memory_space<vmem>>, vector<3x64xf32>,
    %290 = vector.extract_strided_slice %222 {offsets = [3, 64], sizes = [3, 64], strides = [1, 1]} : vector<6x192xf32> to vector<3x64xf32>
    %291 = vector.broadcast %254 : vector<1x64xf32> to vector<3x64xf32>
    %292 = arith.mulf %290, %291 : vector<3x64xf32>
    %293 = vector.broadcast %257 : vector<1x64xf32> to vector<3x64xf32>
    %294 = arith.addf %292, %293 : vector<3x64xf32>
    %cst_152 = arith.constant 0.000000e+00 : f32
    %295 = vector.broadcast %cst_152 : f32 to vector<3x64xf32>
    %296 = arith.maximumf %294, %295 : vector<3x64xf32>
    %c6_153 = arith.constant 6 : index
    %c128_154 = arith.constant 128 : index
    %297 = vector.load %arg19[%c6_153, %c128_154] : memref<10x320xf32, #tpu.memory_space<vmem>>, vector<3x64xf32>
    tpu.vector_store %arg19[%c6_153, %c128_154], %296 {strides = array<i32>} : memref<10x320xf32, #tpu.memory_space<vmem>>, vector<3x64xf32>,
    %298 = vector.extract_strided_slice %222 {offsets = [3, 128], sizes = [3, 64], strides = [1, 1]} : vector<6x192xf32> to vector<3x64xf32>
    %299 = vector.broadcast %254 : vector<1x64xf32> to vector<3x64xf32>
    %300 = arith.mulf %298, %299 : vector<3x64xf32>
    %301 = vector.broadcast %257 : vector<1x64xf32> to vector<3x64xf32>
    %302 = arith.addf %300, %301 : vector<3x64xf32>
    %cst_155 = arith.constant 0.000000e+00 : f32
    %303 = vector.broadcast %cst_155 : f32 to vector<3x64xf32>
    %304 = arith.maximumf %302, %303 : vector<3x64xf32>
    %c6_156 = arith.constant 6 : index
    %c192_157 = arith.constant 192 : index
    %305 = vector.load %arg19[%c6_156, %c192_157] : memref<10x320xf32, #tpu.memory_space<vmem>>, vector<3x64xf32>
    tpu.vector_store %arg19[%c6_156, %c192_157], %304 {strides = array<i32>} : memref<10x320xf32, #tpu.memory_space<vmem>>, vector<3x64xf32>,
    %c0_158 = arith.constant 0 : index
    %c0_159 = arith.constant 0 : index
    %306 = vector.load %arg19[%c0_158, %c0_159] : memref<10x320xf32, #tpu.memory_space<vmem>>, vector<10x320xf32>
    %cst_160 = arith.constant 0.000000e+00 : f32
    %307 = vector.broadcast %cst_160 : f32 to vector<4x128xf32>
    %c0_161 = arith.constant 0 : index
    %c0_162 = arith.constant 0 : index
    %c0_163 = arith.constant 0 : index
    %308 = vector.load %arg9[%c0_161, %c0_162, %c0_163] : memref<3x4x10xf32, #tpu.memory_space<vmem>>, vector<1x4x10xf32>
    %309 = vector.shape_cast %308 : vector<1x4x10xf32> to vector<4x10xf32>
    %cst_164 = arith.constant dense<0.000000e+00> : vector<4x320xf32>
    %310 = tpu.matmul %309, %306, %cst_164 {dimension_numbers = #tpu.dot_dimension_numbers<[1], [0], [0], [1], [0, 0, 1, 1], [], []>} : vector<4x10xf32>, vector<10x320xf32>, vector<4x320xf32> -> vector<4x320xf32>
    %c0_165 = arith.constant 0 : index
    %c0_166 = arith.constant 0 : index
    %c0_167 = arith.constant 0 : index
    %311 = vector.load %arg10[%c0_165, %c0_166, %c0_167] : memref<3x320x128xf32, #tpu.memory_space<vmem>>, vector<1x320x128xf32>
    %312 = vector.shape_cast %311 : vector<1x320x128xf32> to vector<320x128xf32>
    %cst_168 = arith.constant dense<0.000000e+00> : vector<4x128xf32>
    %313 = tpu.matmul %310, %312, %cst_168 {dimension_numbers = #tpu.dot_dimension_numbers<[1], [0], [0], [1], [0, 0, 1, 1], [], []>} : vector<4x320xf32>, vector<320x128xf32>, vector<4x128xf32> -> vector<4x128xf32>
    %314 = arith.addf %307, %313 : vector<4x128xf32>
    %c1_169 = arith.constant 1 : index
    %c0_170 = arith.constant 0 : index
    %c0_171 = arith.constant 0 : index
    %315 = vector.load %arg9[%c1_169, %c0_170, %c0_171] : memref<3x4x10xf32, #tpu.memory_space<vmem>>, vector<1x4x10xf32>
    %316 = vector.shape_cast %315 : vector<1x4x10xf32> to vector<4x10xf32>
    %cst_172 = arith.constant dense<0.000000e+00> : vector<4x320xf32>
    %317 = tpu.matmul %316, %306, %cst_172 {dimension_numbers = #tpu.dot_dimension_numbers<[1], [0], [0], [1], [0, 0, 1, 1], [], []>} : vector<4x10xf32>, vector<10x320xf32>, vector<4x320xf32> -> vector<4x320xf32>
    %c1_173 = arith.constant 1 : index
    %c0_174 = arith.constant 0 : index
    %c0_175 = arith.constant 0 : index
    %318 = vector.load %arg10[%c1_173, %c0_174, %c0_175] : memref<3x320x128xf32, #tpu.memory_space<vmem>>, vector<1x320x128xf32>
    %319 = vector.shape_cast %318 : vector<1x320x128xf32> to vector<320x128xf32>
    %cst_176 = arith.constant dense<0.000000e+00> : vector<4x128xf32>
    %320 = tpu.matmul %317, %319, %cst_176 {dimension_numbers = #tpu.dot_dimension_numbers<[1], [0], [0], [1], [0, 0, 1, 1], [], []>} : vector<4x320xf32>, vector<320x128xf32>, vector<4x128xf32> -> vector<4x128xf32>
    %321 = arith.addf %314, %320 : vector<4x128xf32>
    %c2_177 = arith.constant 2 : index
    %c0_178 = arith.constant 0 : index
    %c0_179 = arith.constant 0 : index
    %322 = vector.load %arg9[%c2_177, %c0_178, %c0_179] : memref<3x4x10xf32, #tpu.memory_space<vmem>>, vector<1x4x10xf32>
    %323 = vector.shape_cast %322 : vector<1x4x10xf32> to vector<4x10xf32>
    %cst_180 = arith.constant dense<0.000000e+00> : vector<4x320xf32>
    %324 = tpu.matmul %323, %306, %cst_180 {dimension_numbers = #tpu.dot_dimension_numbers<[1], [0], [0], [1], [0, 0, 1, 1], [], []>} : vector<4x10xf32>, vector<10x320xf32>, vector<4x320xf32> -> vector<4x320xf32>
    %c2_181 = arith.constant 2 : index
    %c0_182 = arith.constant 0 : index
    %c0_183 = arith.constant 0 : index
    %325 = vector.load %arg10[%c2_181, %c0_182, %c0_183] : memref<3x320x128xf32, #tpu.memory_space<vmem>>, vector<1x320x128xf32>
    %326 = vector.shape_cast %325 : vector<1x320x128xf32> to vector<320x128xf32>
    %cst_184 = arith.constant dense<0.000000e+00> : vector<4x128xf32>
    %327 = tpu.matmul %324, %326, %cst_184 {dimension_numbers = #tpu.dot_dimension_numbers<[1], [0], [0], [1], [0, 0, 1, 1], [], []>} : vector<4x320xf32>, vector<320x128xf32>, vector<4x128xf32> -> vector<4x128xf32>
    %328 = arith.addf %321, %327 : vector<4x128xf32>
    %cst_185 = arith.constant dense<0.000000e+00> : vector<128xf32>
    %329 = vector.multi_reduction <add>, %328, %cst_185 [0] : vector<4x128xf32> to vector<128xf32>
    %330 = vector.shape_cast %329 : vector<128xf32> to vector<1x128xf32>
    %331 = arith.mulf %328, %328 : vector<4x128xf32>
    %cst_186 = arith.constant dense<0.000000e+00> : vector<128xf32>
    %332 = vector.multi_reduction <add>, %331, %cst_186 [0] : vector<4x128xf32> to vector<128xf32>
    %333 = vector.shape_cast %332 : vector<128xf32> to vector<1x128xf32>
    %cst_187 = arith.constant 0.000000e+00 : f32
    %334 = vector.broadcast %cst_187 : f32 to vector<1x64xf32>
    %cst_188 = arith.constant 0.000000e+00 : f32
    %335 = vector.broadcast %cst_188 : f32 to vector<1x64xf32>
    %336 = vector.extract_strided_slice %330 {offsets = [0, 0], sizes = [1, 64], strides = [1, 1]} : vector<1x128xf32> to vector<1x64xf32>
    %337 = arith.addf %334, %336 : vector<1x64xf32>
    %338 = vector.extract_strided_slice %333 {offsets = [0, 0], sizes = [1, 64], strides = [1, 1]} : vector<1x128xf32> to vector<1x64xf32>
    %339 = arith.addf %335, %338 : vector<1x64xf32>
    %340 = vector.extract_strided_slice %330 {offsets = [0, 64], sizes = [1, 64], strides = [1, 1]} : vector<1x128xf32> to vector<1x64xf32>
    %341 = arith.addf %337, %340 : vector<1x64xf32>
    %342 = vector.extract_strided_slice %333 {offsets = [0, 64], sizes = [1, 64], strides = [1, 1]} : vector<1x128xf32> to vector<1x64xf32>
    %343 = arith.addf %339, %342 : vector<1x64xf32>
    %cst_189 = arith.constant 8.000000e+00 : f32
    %344 = vector.broadcast %cst_189 : f32 to vector<1x64xf32>
    %345 = arith.divf %341, %344 : vector<1x64xf32>
    %cst_190 = arith.constant 8.000000e+00 : f32
    %346 = vector.broadcast %cst_190 : f32 to vector<1x64xf32>
    %347 = arith.divf %343, %346 : vector<1x64xf32>
    %348 = arith.mulf %345, %345 : vector<1x64xf32>
    %349 = arith.subf %347, %348 : vector<1x64xf32>
    %cst_191 = arith.constant 0.000000e+00 : f32
    %350 = vector.broadcast %cst_191 : f32 to vector<1x64xf32>
    %351 = arith.maximumf %349, %350 : vector<1x64xf32>
    %c0_192 = arith.constant 0 : index
    %c0_193 = arith.constant 0 : index
    %352 = vector.load %arg11[%c0_192, %c0_193] : memref<1x64xf32, #tpu.memory_space<vmem>>, vector<1x64xf32>
    %cst_194 = arith.constant 9.99999974E-6 : f32
    %353 = vector.broadcast %cst_194 : f32 to vector<1x64xf32>
    %354 = arith.addf %351, %353 : vector<1x64xf32>
    %355 = math.rsqrt %354 : vector<1x64xf32>
    %356 = arith.mulf %352, %355 : vector<1x64xf32>
    %c0_195 = arith.constant 0 : index
    %c0_196 = arith.constant 0 : index
    %357 = vector.load %arg12[%c0_195, %c0_196] : memref<1x64xf32, #tpu.memory_space<vmem>>, vector<1x64xf32>
    %358 = arith.mulf %345, %356 : vector<1x64xf32>
    %359 = arith.subf %357, %358 : vector<1x64xf32>
    %360 = vector.extract_strided_slice %328 {offsets = [0, 0], sizes = [2, 64], strides = [1, 1]} : vector<4x128xf32> to vector<2x64xf32>
    %361 = vector.broadcast %356 : vector<1x64xf32> to vector<2x64xf32>
    %362 = arith.mulf %360, %361 : vector<2x64xf32>
    %363 = vector.broadcast %359 : vector<1x64xf32> to vector<2x64xf32>
    %364 = arith.addf %362, %363 : vector<2x64xf32>
    %cst_197 = arith.constant 0.000000e+00 : f32
    %365 = vector.broadcast %cst_197 : f32 to vector<2x64xf32>
    %366 = arith.maximumf %364, %365 : vector<2x64xf32>
    %c1_198 = arith.constant 1 : index
    %c64_199 = arith.constant 64 : index
    %367 = vector.load %arg20[%c1_198, %c64_199] : memref<8x256xf32, #tpu.memory_space<vmem>>, vector<2x64xf32>
    tpu.vector_store %arg20[%c1_198, %c64_199], %366 {strides = array<i32>} : memref<8x256xf32, #tpu.memory_space<vmem>>, vector<2x64xf32>,
    %368 = vector.extract_strided_slice %328 {offsets = [0, 64], sizes = [2, 64], strides = [1, 1]} : vector<4x128xf32> to vector<2x64xf32>
    %369 = vector.broadcast %356 : vector<1x64xf32> to vector<2x64xf32>
    %370 = arith.mulf %368, %369 : vector<2x64xf32>
    %371 = vector.broadcast %359 : vector<1x64xf32> to vector<2x64xf32>
    %372 = arith.addf %370, %371 : vector<2x64xf32>
    %cst_200 = arith.constant 0.000000e+00 : f32
    %373 = vector.broadcast %cst_200 : f32 to vector<2x64xf32>
    %374 = arith.maximumf %372, %373 : vector<2x64xf32>
    %c1_201 = arith.constant 1 : index
    %c128_202 = arith.constant 128 : index
    %375 = vector.load %arg20[%c1_201, %c128_202] : memref<8x256xf32, #tpu.memory_space<vmem>>, vector<2x64xf32>
    tpu.vector_store %arg20[%c1_201, %c128_202], %374 {strides = array<i32>} : memref<8x256xf32, #tpu.memory_space<vmem>>, vector<2x64xf32>,
    %376 = vector.extract_strided_slice %328 {offsets = [2, 0], sizes = [2, 64], strides = [1, 1]} : vector<4x128xf32> to vector<2x64xf32>
    %377 = vector.broadcast %356 : vector<1x64xf32> to vector<2x64xf32>
    %378 = arith.mulf %376, %377 : vector<2x64xf32>
    %379 = vector.broadcast %359 : vector<1x64xf32> to vector<2x64xf32>
    %380 = arith.addf %378, %379 : vector<2x64xf32>
    %cst_203 = arith.constant 0.000000e+00 : f32
    %381 = vector.broadcast %cst_203 : f32 to vector<2x64xf32>
    %382 = arith.maximumf %380, %381 : vector<2x64xf32>
    %c5_204 = arith.constant 5 : index
    %c64_205 = arith.constant 64 : index
    %383 = vector.load %arg20[%c5_204, %c64_205] : memref<8x256xf32, #tpu.memory_space<vmem>>, vector<2x64xf32>
    tpu.vector_store %arg20[%c5_204, %c64_205], %382 {strides = array<i32>} : memref<8x256xf32, #tpu.memory_space<vmem>>, vector<2x64xf32>,
    %384 = vector.extract_strided_slice %328 {offsets = [2, 64], sizes = [2, 64], strides = [1, 1]} : vector<4x128xf32> to vector<2x64xf32>
    %385 = vector.broadcast %356 : vector<1x64xf32> to vector<2x64xf32>
    %386 = arith.mulf %384, %385 : vector<2x64xf32>
    %387 = vector.broadcast %359 : vector<1x64xf32> to vector<2x64xf32>
    %388 = arith.addf %386, %387 : vector<2x64xf32>
    %cst_206 = arith.constant 0.000000e+00 : f32
    %389 = vector.broadcast %cst_206 : f32 to vector<2x64xf32>
    %390 = arith.maximumf %388, %389 : vector<2x64xf32>
    %c5_207 = arith.constant 5 : index
    %c128_208 = arith.constant 128 : index
    %391 = vector.load %arg20[%c5_207, %c128_208] : memref<8x256xf32, #tpu.memory_space<vmem>>, vector<2x64xf32>
    tpu.vector_store %arg20[%c5_207, %c128_208], %390 {strides = array<i32>} : memref<8x256xf32, #tpu.memory_space<vmem>>, vector<2x64xf32>,
    %c0_209 = arith.constant 0 : index
    %c0_210 = arith.constant 0 : index
    %392 = vector.load %arg20[%c0_209, %c0_210] : memref<8x256xf32, #tpu.memory_space<vmem>>, vector<8x256xf32>
    %cst_211 = arith.constant 0.000000e+00 : f32
    %393 = vector.broadcast %cst_211 : f32 to vector<2x128xf32>
    %c0_212 = arith.constant 0 : index
    %c0_213 = arith.constant 0 : index
    %c0_214 = arith.constant 0 : index
    %394 = vector.load %arg13[%c0_212, %c0_213, %c0_214] : memref<3x2x8xf32, #tpu.memory_space<vmem>>, vector<1x2x8xf32>
    %395 = vector.shape_cast %394 : vector<1x2x8xf32> to vector<2x8xf32>
    %cst_215 = arith.constant dense<0.000000e+00> : vector<2x256xf32>
    %396 = tpu.matmul %395, %392, %cst_215 {dimension_numbers = #tpu.dot_dimension_numbers<[1], [0], [0], [1], [0, 0, 1, 1], [], []>} : vector<2x8xf32>, vector<8x256xf32>, vector<2x256xf32> -> vector<2x256xf32>
    %c0_216 = arith.constant 0 : index
    %c0_217 = arith.constant 0 : index
    %c0_218 = arith.constant 0 : index
    %397 = vector.load %arg14[%c0_216, %c0_217, %c0_218] : memref<3x256x128xf32, #tpu.memory_space<vmem>>, vector<1x256x128xf32>
    %398 = vector.shape_cast %397 : vector<1x256x128xf32> to vector<256x128xf32>
    %cst_219 = arith.constant dense<0.000000e+00> : vector<2x128xf32>
    %399 = tpu.matmul %396, %398, %cst_219 {dimension_numbers = #tpu.dot_dimension_numbers<[1], [0], [0], [1], [0, 0, 1, 1], [], []>} : vector<2x256xf32>, vector<256x128xf32>, vector<2x128xf32> -> vector<2x128xf32>
    %400 = arith.addf %393, %399 : vector<2x128xf32>
    %c1_220 = arith.constant 1 : index
    %c0_221 = arith.constant 0 : index
    %c0_222 = arith.constant 0 : index
    %401 = vector.load %arg13[%c1_220, %c0_221, %c0_222] : memref<3x2x8xf32, #tpu.memory_space<vmem>>, vector<1x2x8xf32>
    %402 = vector.shape_cast %401 : vector<1x2x8xf32> to vector<2x8xf32>
    %cst_223 = arith.constant dense<0.000000e+00> : vector<2x256xf32>
    %403 = tpu.matmul %402, %392, %cst_223 {dimension_numbers = #tpu.dot_dimension_numbers<[1], [0], [0], [1], [0, 0, 1, 1], [], []>} : vector<2x8xf32>, vector<8x256xf32>, vector<2x256xf32> -> vector<2x256xf32>
    %c1_224 = arith.constant 1 : index
    %c0_225 = arith.constant 0 : index
    %c0_226 = arith.constant 0 : index
    %404 = vector.load %arg14[%c1_224, %c0_225, %c0_226] : memref<3x256x128xf32, #tpu.memory_space<vmem>>, vector<1x256x128xf32>
    %405 = vector.shape_cast %404 : vector<1x256x128xf32> to vector<256x128xf32>
    %cst_227 = arith.constant dense<0.000000e+00> : vector<2x128xf32>
    %406 = tpu.matmul %403, %405, %cst_227 {dimension_numbers = #tpu.dot_dimension_numbers<[1], [0], [0], [1], [0, 0, 1, 1], [], []>} : vector<2x256xf32>, vector<256x128xf32>, vector<2x128xf32> -> vector<2x128xf32>
    %407 = arith.addf %400, %406 : vector<2x128xf32>
    %c2_228 = arith.constant 2 : index
    %c0_229 = arith.constant 0 : index
    %c0_230 = arith.constant 0 : index
    %408 = vector.load %arg13[%c2_228, %c0_229, %c0_230] : memref<3x2x8xf32, #tpu.memory_space<vmem>>, vector<1x2x8xf32>
    %409 = vector.shape_cast %408 : vector<1x2x8xf32> to vector<2x8xf32>
    %cst_231 = arith.constant dense<0.000000e+00> : vector<2x256xf32>
    %410 = tpu.matmul %409, %392, %cst_231 {dimension_numbers = #tpu.dot_dimension_numbers<[1], [0], [0], [1], [0, 0, 1, 1], [], []>} : vector<2x8xf32>, vector<8x256xf32>, vector<2x256xf32> -> vector<2x256xf32>
    %c2_232 = arith.constant 2 : index
    %c0_233 = arith.constant 0 : index
    %c0_234 = arith.constant 0 : index
    %411 = vector.load %arg14[%c2_232, %c0_233, %c0_234] : memref<3x256x128xf32, #tpu.memory_space<vmem>>, vector<1x256x128xf32>
    %412 = vector.shape_cast %411 : vector<1x256x128xf32> to vector<256x128xf32>
    %cst_235 = arith.constant dense<0.000000e+00> : vector<2x128xf32>
    %413 = tpu.matmul %410, %412, %cst_235 {dimension_numbers = #tpu.dot_dimension_numbers<[1], [0], [0], [1], [0, 0, 1, 1], [], []>} : vector<2x256xf32>, vector<256x128xf32>, vector<2x128xf32> -> vector<2x128xf32>
    %414 = arith.addf %407, %413 : vector<2x128xf32>
    %cst_236 = arith.constant dense<0.000000e+00> : vector<128xf32>
    %415 = vector.multi_reduction <add>, %414, %cst_236 [0] : vector<2x128xf32> to vector<128xf32>
    %416 = vector.shape_cast %415 : vector<128xf32> to vector<1x128xf32>
    %417 = arith.mulf %414, %414 : vector<2x128xf32>
    %cst_237 = arith.constant dense<0.000000e+00> : vector<128xf32>
    %418 = vector.multi_reduction <add>, %417, %cst_237 [0] : vector<2x128xf32> to vector<128xf32>
    %419 = vector.shape_cast %418 : vector<128xf32> to vector<1x128xf32>
    %cst_238 = arith.constant 0.000000e+00 : f32
    %420 = vector.broadcast %cst_238 : f32 to vector<1x128xf32>
    %cst_239 = arith.constant 0.000000e+00 : f32
    %421 = vector.broadcast %cst_239 : f32 to vector<1x128xf32>
    %422 = arith.addf %420, %416 : vector<1x128xf32>
    %423 = arith.addf %421, %419 : vector<1x128xf32>
    %cst_240 = arith.constant 2.000000e+00 : f32
    %424 = vector.broadcast %cst_240 : f32 to vector<1x128xf32>
    %425 = arith.divf %422, %424 : vector<1x128xf32>
    %cst_241 = arith.constant 2.000000e+00 : f32
    %426 = vector.broadcast %cst_241 : f32 to vector<1x128xf32>
    %427 = arith.divf %423, %426 : vector<1x128xf32>
    %428 = arith.mulf %425, %425 : vector<1x128xf32>
    %429 = arith.subf %427, %428 : vector<1x128xf32>
    %cst_242 = arith.constant 0.000000e+00 : f32
    %430 = vector.broadcast %cst_242 : f32 to vector<1x128xf32>
    %431 = arith.maximumf %429, %430 : vector<1x128xf32>
    %c0_243 = arith.constant 0 : index
    %c0_244 = arith.constant 0 : index
    %432 = vector.load %arg15[%c0_243, %c0_244] : memref<1x128xf32, #tpu.memory_space<vmem>>, vector<1x128xf32>
    %cst_245 = arith.constant 9.99999974E-6 : f32
    %433 = vector.broadcast %cst_245 : f32 to vector<1x128xf32>
    %434 = arith.addf %431, %433 : vector<1x128xf32>
    %435 = math.rsqrt %434 : vector<1x128xf32>
    %436 = arith.mulf %432, %435 : vector<1x128xf32>
    %c0_246 = arith.constant 0 : index
    %c0_247 = arith.constant 0 : index
    %437 = vector.load %arg16[%c0_246, %c0_247] : memref<1x128xf32, #tpu.memory_space<vmem>>, vector<1x128xf32>
    %438 = arith.mulf %425, %436 : vector<1x128xf32>
    %439 = arith.subf %437, %438 : vector<1x128xf32>
    %440 = vector.broadcast %436 : vector<1x128xf32> to vector<2x128xf32>
    %441 = arith.mulf %414, %440 : vector<2x128xf32>
    %442 = vector.broadcast %439 : vector<1x128xf32> to vector<2x128xf32>
    %443 = arith.addf %441, %442 : vector<2x128xf32>
    %cst_248 = arith.constant 0.000000e+00 : f32
    %444 = vector.broadcast %cst_248 : f32 to vector<2x128xf32>
    %445 = arith.maximumf %443, %444 : vector<2x128xf32>
    %c0_249 = arith.constant 0 : index
    %c0_250 = arith.constant 0 : index
    %446 = vector.load %arg17[%c0_249, %c0_250] : memref<2x128xf32, #tpu.memory_space<vmem>>, vector<2x128xf32>
    tpu.vector_store %arg17[%c0_249, %c0_250], %445 {strides = array<i32>} : memref<2x128xf32, #tpu.memory_space<vmem>>, vector<2x128xf32>,
    return
  }
}

</mosaic_0001>

<llo_original>
// kernel: tpu_custom_call.1
$region0: #{tpu_custom_call.1}
  #allocation0 [shape = 'u32[]', space=smem, size = 0x4, offset = 0x4, fixed_abs, tag = 'smem constant byte address 0x4 - core index']
  #allocation1 [shape = 'u32[72,128]{1,0:T(1,128)}', space=vmem, size = 0x9000, scoped, tag = 'internal scratch']
  #allocation2 [shape = 'f32[16,256]{1,0:T(8,128)}', space=vmem, size = 0x4000, scoped, tag = 'scratch operand']
  #allocation3 [shape = 'f32[10,320]{1,0:T(8,128)}', space=vmem, size = 0x6000, scoped, tag = 'scratch operand']
  #allocation4 [shape = 'f32[8,256]{1,0:T(8,128)}', space=vmem, size = 0x2000, scoped, tag = 'scratch operand']
  %s0 = inlined_call_operand.vmem [shape: f32[36,72], index: 0, kind: input, shape index: {}]
  %s1 = inlined_call_operand.vmem [shape: f32[7,12,36], index: 1, kind: input, shape index: {}]
  %s2 = inlined_call_operand.vmem [shape: f32[7,72,192], index: 2, kind: input, shape index: {}]
  %s3 = inlined_call_operand.vmem [shape: f32[1,32], index: 3, kind: input, shape index: {}]
  %s4 = inlined_call_operand.vmem [shape: f32[1,32], index: 4, kind: input, shape index: {}]
  %s5 = inlined_call_operand.vmem [shape: f32[3,6,16], index: 5, kind: input, shape index: {}]
  %s6 = inlined_call_operand.vmem [shape: f32[3,256,192], index: 6, kind: input, shape index: {}]
  %s7 = inlined_call_operand.vmem [shape: f32[1,64], index: 7, kind: input, shape index: {}]
  %s8 = inlined_call_operand.vmem [shape: f32[1,64], index: 8, kind: input, shape index: {}]
  %s9 = inlined_call_operand.vmem [shape: f32[3,4,10], index: 9, kind: input, shape index: {}]
  %s10 = inlined_call_operand.vmem [shape: f32[3,320,128], index: 10, kind: input, shape index: {}]
  %s11 = inlined_call_operand.vmem [shape: f32[1,64], index: 11, kind: input, shape index: {}]
  %s12 = inlined_call_operand.vmem [shape: f32[1,64], index: 12, kind: input, shape index: {}]
  %s13 = inlined_call_operand.vmem [shape: f32[3,2,8], index: 13, kind: input, shape index: {}]
  %s14 = inlined_call_operand.vmem [shape: f32[3,256,128], index: 14, kind: input, shape index: {}]
  %s15 = inlined_call_operand.vmem [shape: f32[1,128], index: 15, kind: input, shape index: {}]
  %s16 = inlined_call_operand.vmem [shape: f32[1,128], index: 16, kind: input, shape index: {}]
  %s17 = inlined_call_operand.hbm [shape: f32[2,128], index: 17, kind: output, shape index: {}]
  %s18 = sld [smem:[#allocation0]]
  $region78: #{tpu_custom_call.1} parent=0
    _
  %s20 = ssub.s32 1, %s18
  %s21 = scalar_select 0, %s20, %s18
  $region1: #{tpu_custom_call.1} parent=0
    #allocation5 [shape = 'u8[1024]{0}', space=vmem, size = 0x400, scoped, tag = 'output window, operand 0, single buffered']
    #allocation6 [shape = 's32[1]{0}', space=sflag, size = 0x4, scoped, tag = 'scoped memory for tpu_custom_call.1']
    %22 = vsyncpa [#allocation6], 0
    // Predicated region
    $region2: #{tpu_custom_call.1} parent=1 // pred_check
      _
    $region3: #{tpu_custom_call.1} parent=1 // pred_check_branch
      %24 = sbr.rel (0) target = $region5
    $region4: #{tpu_custom_call.1} parent=1 // pred_region
      _
    $region5: #{tpu_custom_call.1} parent=1 // pred_fallthru
      _
    // Predicated region
    $region6: #{tpu_custom_call.1} parent=1 // pred_check
      _
    $region7: #{tpu_custom_call.1} parent=1 // pred_check_branch
      %26 = sbr.rel (0) target = $region9
    $region8: #{tpu_custom_call.1} parent=1 // pred_region
      _
    $region9: #{tpu_custom_call.1} parent=1 // pred_fallthru
      _
    // Predicated region
    $region10: #{tpu_custom_call.1} parent=1 // pred_check
      _
    $region11: #{tpu_custom_call.1} parent=1 // pred_check_branch
      %28 = sbr.rel (0) target = $region13
    $region12: #{tpu_custom_call.1} parent=1 // pred_region
      _
    $region13: #{tpu_custom_call.1} parent=1 // pred_fallthru
      _
    // Predicated region
    $region14: #{tpu_custom_call.1} parent=1 // pred_check
      _
    $region15: #{tpu_custom_call.1} parent=1 // pred_check_branch
      %30 = sbr.rel (0) target = $region17
    $region16: #{tpu_custom_call.1} parent=1 // pred_region
      _
    $region17: #{tpu_custom_call.1} parent=1 // pred_fallthru
      _
    // Predicated region
    $region18: #{tpu_custom_call.1} parent=1 // pred_check
      _
    $region19: #{tpu_custom_call.1} parent=1 // pred_check_branch
      %32 = sbr.rel (0) target = $region21
    $region20: #{tpu_custom_call.1} parent=1 // pred_region
      _
    $region21: #{tpu_custom_call.1} parent=1 // pred_fallthru
      _
    // Predicated region
    $region22: #{tpu_custom_call.1} parent=1 // pred_check
      _
    $region23: #{tpu_custom_call.1} parent=1 // pred_check_branch
      %34 = sbr.rel (0) target = $region25
    $region24: #{tpu_custom_call.1} parent=1 // pred_region
      _
    $region25: #{tpu_custom_call.1} parent=1 // pred_fallthru
      _
    // Predicated region
    $region26: #{tpu_custom_call.1} parent=1 // pred_check
      _
    $region27: #{tpu_custom_call.1} parent=1 // pred_check_branch
      %36 = sbr.rel (0) target = $region29
    $region28: #{tpu_custom_call.1} parent=1 // pred_region
      _
    $region29: #{tpu_custom_call.1} parent=1 // pred_fallthru
      _
    // Predicated region
    $region30: #{tpu_custom_call.1} parent=1 // pred_check
      _
    $region31: #{tpu_custom_call.1} parent=1 // pred_check_branch
      %38 = sbr.rel (0) target = $region33
    $region32: #{tpu_custom_call.1} parent=1 // pred_region
      _
    $region33: #{tpu_custom_call.1} parent=1 // pred_fallthru
      _
    // Predicated region
    $region34: #{tpu_custom_call.1} parent=1 // pred_check
      _
    $region35: #{tpu_custom_call.1} parent=1 // pred_check_branch
      %40 = sbr.rel (0) target = $region37
    $region36: #{tpu_custom_call.1} parent=1 // pred_region
      _
    $region37: #{tpu_custom_call.1} parent=1 // pred_fallthru
      _
    // Predicated region
    $region38: #{tpu_custom_call.1} parent=1 // pred_check
      _
    $region39: #{tpu_custom_call.1} parent=1 // pred_check_branch
      %42 = sbr.rel (0) target = $region41
    $region40: #{tpu_custom_call.1} parent=1 // pred_region
      _
    $region41: #{tpu_custom_call.1} parent=1 // pred_fallthru
      _
    // Predicated region
    $region42: #{tpu_custom_call.1} parent=1 // pred_check
      _
    $region43: #{tpu_custom_call.1} parent=1 // pred_check_branch
      %44 = sbr.rel (0) target = $region45
    $region44: #{tpu_custom_call.1} parent=1 // pred_region
      _
    $region45: #{tpu_custom_call.1} parent=1 // pred_fallthru
      _
    // Predicated region
    $region46: #{tpu_custom_call.1} parent=1 // pred_check
      _
    $region47: #{tpu_custom_call.1} parent=1 // pred_check_branch
      %46 = sbr.rel (0) target = $region49
    $region48: #{tpu_custom_call.1} parent=1 // pred_region
      _
    $region49: #{tpu_custom_call.1} parent=1 // pred_fallthru
      _
    // Predicated region
    $region50: #{tpu_custom_call.1} parent=1 // pred_check
      _
    $region51: #{tpu_custom_call.1} parent=1 // pred_check_branch
      %48 = sbr.rel (0) target = $region53
    $region52: #{tpu_custom_call.1} parent=1 // pred_region
      _
    $region53: #{tpu_custom_call.1} parent=1 // pred_fallthru
      _
    // Predicated region
    $region54: #{tpu_custom_call.1} parent=1 // pred_check
      _
    $region55: #{tpu_custom_call.1} parent=1 // pred_check_branch
      %50 = sbr.rel (0) target = $region57
    $region56: #{tpu_custom_call.1} parent=1 // pred_region
      _
    $region57: #{tpu_custom_call.1} parent=1 // pred_fallthru
      _
    // Predicated region
    $region58: #{tpu_custom_call.1} parent=1 // pred_check
      _
    $region59: #{tpu_custom_call.1} parent=1 // pred_check_branch
      %52 = sbr.rel (0) target = $region61
    $region60: #{tpu_custom_call.1} parent=1 // pred_region
      _
    $region61: #{tpu_custom_call.1} parent=1 // pred_fallthru
      _
    // Predicated region
    $region62: #{tpu_custom_call.1} parent=1 // pred_check
      _
    $region63: #{tpu_custom_call.1} parent=1 // pred_check_branch
      %54 = sbr.rel (0) target = $region65
    $region64: #{tpu_custom_call.1} parent=1 // pred_region
      _
    $region65: #{tpu_custom_call.1} parent=1 // pred_fallthru
      _
    // Predicated region
    $region66: #{tpu_custom_call.1} parent=1 // pred_check
      _
    $region67: #{tpu_custom_call.1} parent=1 // pred_check_branch
      %56 = sbr.rel (0) target = $region69
    $region68: #{tpu_custom_call.1} parent=1 // pred_region
      _
    $region69: #{tpu_custom_call.1} parent=1 // pred_fallthru
      _
    %57 = vst [vmem:[#allocation2] sm:$0xff] 0.0
    %58 = vst [vmem:[#allocation2 + $0x8] sm:$0xff] 0.0
    %59 = vst [vmem:[#allocation2 + $0x10] sm:$0xff] 0.0
    %60 = vst [vmem:[#allocation2 + $0x18] sm:$0xff] 0.0
    %61 = vst [vmem:[#allocation3] sm:$0xff] 0.0
    %62 = vst [vmem:[#allocation3 + $0x8] sm:$0xff] 0.0
    %vm63 = vcmask 523264
    %64 = vst.msk [vmem:[#allocation3 + $0x10] sm:$0xff] %vm63, 0.0
    %65 = vst [vmem:[#allocation3 + $0x18] sm:$0x3] 0.0
    %66 = vst [vmem:[#allocation3 + $0x20] sm:$0x3] 0.0
    %vm67 = vcmask 517120
    %68 = vst.msk [vmem:[#allocation3 + $0x28] sm:$0x3] %vm67, 0.0
    %69 = vst [vmem:[#allocation4] sm:$0xff] 0.0
    %70 = vst [vmem:[#allocation4 + $0x8] sm:$0xff] 0.0
    %v71 = vld [vmem:[%s0] sm:$0xff]
    %v72 = vld [vmem:[%s0 + $0x8] sm:$0xff]
    %v73 = vld [vmem:[%s0 + $0x10] sm:$0xff]
    %v74 = vld [vmem:[%s0 + $0x18] sm:$0xff]
    %v75 = vld [vmem:[%s0 + $0x20] sm:$0xf]
    %v76 = vld [vmem:[%s1] sm:$0xff]
    %v77 = vld [vmem:[%s1 + $0x8] sm:$0xf]
    %vm78 = vcmask 293888
    %v80 = vsel %vm78, %v76, 0
    %v83 = vsel %vm78, %v77, 0
    %vm85 = vcmask 1043456
    %v87 = vsel %vm85, %v75, 0
    %89 = vmatpush.msra.mxu0 0.0
    %90 = vmatpush.msra.mxu0 0.0
    %91 = vmatpush.msra.mxu0 0.0
    %92 = vmatpush.msra.mxu0 0.0
    %93 = vmatpush.msra.mxu0 0.0
    %94 = vmatpush.msra.mxu0 0.0
    %95 = vmatpush.msra.mxu0 0.0
    %96 = vmatpush.msra.mxu0 0.0
    %97 = vmatpush.msra.mxu0 0.0
    %98 = vmatpush.msra.mxu0 0.0
    %99 = vmatpush.msra.mxu0 0.0
    %100 = vmatpush.msra.mxu0 %v87
    %101 = vmatpush.msra.mxu0 %v74
    %102 = vmatpush.msra.mxu0 %v73
    %103 = vmatpush.msra.mxu0 %v72
    %104 = vmatpush.msra.mxu0 %v71
    %105 = vmatmul.f32.gmra.mxu0 %v80
    %v106 = vpop.f32.mrf.mxu0
    %v107 = vadd.f32 0.0, %v106
    %108 = vmatmul.f32.gmra.mxu0 %v83
    %v109 = vpop.f32.mrf.mxu0
    %v110 = vadd.f32 0.0, %v109
    %111 = vdwg.mxu0
    %v112 = vld [vmem:[%s2] sm:$0xff]
    %v113 = vld [vmem:[%s2 + $0x8] sm:$0xff]
    %v114 = vld [vmem:[%s2 + $0x10] sm:$0xff]
    %v115 = vld [vmem:[%s2 + $0x18] sm:$0xff]
    %v116 = vld [vmem:[%s2 + $0x20] sm:$0xff]
    %v117 = vld [vmem:[%s2 + $0x28] sm:$0xff]
    %v118 = vld [vmem:[%s2 + $0x30] sm:$0xff]
    %v119 = vld [vmem:[%s2 + $0x38] sm:$0xff]
    %v120 = vld [vmem:[%s2 + $0x40] sm:$0xff]
    %v121 = vld [vmem:[%s2 + $0x48] sm:$0xff]
    %v122 = vld [vmem:[%s2 + $0x50] sm:$0xff]
    %v123 = vld [vmem:[%s2 + $0x58] sm:$0xff]
    %v124 = vld [vmem:[%s2 + $0x60] sm:$0xff]
    %v125 = vld [vmem:[%s2 + $0x68] sm:$0xff]
    %v126 = vld [vmem:[%s2 + $0x70] sm:$0xff]
    %v127 = vld [vmem:[%s2 + $0x78] sm:$0xff]
    %v128 = vld [vmem:[%s2 + $0x80] sm:$0xff]
    %v129 = vld [vmem:[%s2 + $0x88] sm:$0xff]
    %s130 = scalar_lea.vmem %s1, 16
    %v131 = vld [vmem:[%s130] sm:$0xff]
    %v132 = vld [vmem:[%s130 + $0x8] sm:$0xf]
    %v134 = vsel %vm78, %v131, 0
    %v137 = vsel %vm78, %v132, 0
    %139 = vmatpush.msra.mxu0 0.0
    %140 = vmatpush.msra.mxu0 0.0
    %141 = vmatpush.msra.mxu0 0.0
    %142 = vmatpush.msra.mxu0 0.0
    %143 = vmatpush.msra.mxu0 0.0
    %144 = vmatpush.msra.mxu0 0.0
    %145 = vmatpush.msra.mxu0 0.0
    %146 = vmatpush.msra.mxu0 0.0
    %147 = vmatpush.msra.mxu0 0.0
    %148 = vmatpush.msra.mxu0 0.0
    %149 = vmatpush.msra.mxu0 0.0
    %150 = vmatpush.msra.mxu0 %v87
    %151 = vmatpush.msra.mxu0 %v74
    %152 = vmatpush.msra.mxu0 %v73
    %153 = vmatpush.msra.mxu0 %v72
    %154 = vmatpush.msra.mxu0 %v71
    %155 = vmatmul.f32.gmra.mxu0 %v134
    %v156 = vpop.f32.mrf.mxu0
    %v157 = vadd.f32 0.0, %v156
    %158 = vmatmul.f32.gmra.mxu0 %v137
    %v159 = vpop.f32.mrf.mxu0
    %v160 = vadd.f32 0.0, %v159
    %161 = vdwg.mxu0
    %s162 = scalar_lea.vmem %s2, 144
    %v163 = vld [vmem:[%s162] sm:$0xff]
    %v164 = vld [vmem:[%s162 + $0x8] sm:$0xff]
    %v165 = vld [vmem:[%s162 + $0x10] sm:$0xff]
    %v166 = vld [vmem:[%s162 + $0x18] sm:$0xff]
    %v167 = vld [vmem:[%s162 + $0x20] sm:$0xff]
    %v168 = vld [vmem:[%s162 + $0x28] sm:$0xff]
    %v169 = vld [vmem:[%s162 + $0x30] sm:$0xff]
    %v170 = vld [vmem:[%s162 + $0x38] sm:$0xff]
    %v171 = vld [vmem:[%s162 + $0x40] sm:$0xff]
    %v172 = vld [vmem:[%s162 + $0x48] sm:$0xff]
    %v173 = vld [vmem:[%s162 + $0x50] sm:$0xff]
    %v174 = vld [vmem:[%s162 + $0x58] sm:$0xff]
    %v175 = vld [vmem:[%s162 + $0x60] sm:$0xff]
    %v176 = vld [vmem:[%s162 + $0x68] sm:$0xff]
    %v177 = vld [vmem:[%s162 + $0x70] sm:$0xff]
    %v178 = vld [vmem:[%s162 + $0x78] sm:$0xff]
    %v179 = vld [vmem:[%s162 + $0x80] sm:$0xff]
    %v180 = vld [vmem:[%s162 + $0x88] sm:$0xff]
    %vm181 = vcmask 588800
    %v183 = vsel %vm181, %v157, 0
    %v186 = vsel %vm181, %v160, 0
    %188 = vmatpush.msra.mxu0 0.0
    %189 = vmatpush.msra.mxu0 0.0
    %190 = vmatpush.msra.mxu0 0.0
    %191 = vmatpush.msra.mxu0 0.0
    %192 = vmatpush.msra.mxu0 0.0
    %193 = vmatpush.msra.mxu0 0.0
    %194 = vmatpush.msra.mxu0 0.0
    %195 = vmatpush.msra.mxu0 %v179
    %196 = vmatpush.msra.mxu0 %v177
    %197 = vmatpush.msra.mxu0 %v175
    %198 = vmatpush.msra.mxu0 %v173
    %199 = vmatpush.msra.mxu0 %v171
    %200 = vmatpush.msra.mxu0 %v169
    %201 = vmatpush.msra.mxu0 %v167
    %202 = vmatpush.msra.mxu0 %v165
    %203 = vmatpush.msra.mxu0 %v163
    %204 = vmatmul.f32.gmra.mxu0 %v183
    %v205 = vpop.f32.mrf.mxu0
    %v206 = vadd.f32 0.0, %v205
    %207 = vmatmul.f32.gmra.mxu0 %v186
    %v208 = vpop.f32.mrf.mxu0
    %v209 = vadd.f32 0.0, %v208
    %210 = vdwg.mxu0
    %211 = vmatpush.msra.mxu0 0.0
    %212 = vmatpush.msra.mxu0 0.0
    %213 = vmatpush.msra.mxu0 0.0
    %214 = vmatpush.msra.mxu0 0.0
    %215 = vmatpush.msra.mxu0 0.0
    %216 = vmatpush.msra.mxu0 0.0
    %217 = vmatpush.msra.mxu0 0.0
    %218 = vmatpush.msra.mxu0 %v180
    %219 = vmatpush.msra.mxu0 %v178
    %220 = vmatpush.msra.mxu0 %v176
    %221 = vmatpush.msra.mxu0 %v174
    %222 = vmatpush.msra.mxu0 %v172
    %223 = vmatpush.msra.mxu0 %v170
    %224 = vmatpush.msra.mxu0 %v168
    %225 = vmatpush.msra.mxu0 %v166
    %226 = vmatpush.msra.mxu0 %v164
    %227 = vmatmul.f32.gmra.mxu0 %v183
    %v228 = vpop.f32.mrf.mxu0
    %v229 = vadd.f32 0.0, %v228
    %230 = vmatmul.f32.gmra.mxu0 %v186
    %v231 = vpop.f32.mrf.mxu0
    %v232 = vadd.f32 0.0, %v231
    %233 = vdwg.mxu0
    %v235 = vsel %vm181, %v107, 0
    %v238 = vsel %vm181, %v110, 0
    %240 = vmatpush.msra.mxu0 0.0
    %241 = vmatpush.msra.mxu0 0.0
    %242 = vmatpush.msra.mxu0 0.0
    %243 = vmatpush.msra.mxu0 0.0
    %244 = vmatpush.msra.mxu0 0.0
    %245 = vmatpush.msra.mxu0 0.0
    %246 = vmatpush.msra.mxu0 0.0
    %247 = vmatpush.msra.mxu0 %v128
    %248 = vmatpush.msra.mxu0 %v126
    %249 = vmatpush.msra.mxu0 %v124
    %250 = vmatpush.msra.mxu0 %v122
    %251 = vmatpush.msra.mxu0 %v120
    %252 = vmatpush.msra.mxu0 %v118
    %253 = vmatpush.msra.mxu0 %v116
    %254 = vmatpush.msra.mxu0 %v114
    %255 = vmatpush.msra.mxu0 %v112
    %256 = vmatmul.f32.gmra.mxu0 %v235
    %v257 = vpop.f32.mrf.mxu0
    %v258 = vadd.f32 %v206, %v257
    %259 = vmatmul.f32.gmra.mxu0 %v238
    %v260 = vpop.f32.mrf.mxu0
    %v261 = vadd.f32 %v209, %v260
    %262 = vdwg.mxu0
    %263 = vmatpush.msra.mxu0 0.0
    %264 = vmatpush.msra.mxu0 0.0
    %265 = vmatpush.msra.mxu0 0.0
    %266 = vmatpush.msra.mxu0 0.0
    %267 = vmatpush.msra.mxu0 0.0
    %268 = vmatpush.msra.mxu0 0.0
    %269 = vmatpush.msra.mxu0 0.0
    %270 = vmatpush.msra.mxu0 %v129
    %271 = vmatpush.msra.mxu0 %v127
    %272 = vmatpush.msra.mxu0 %v125
    %273 = vmatpush.msra.mxu0 %v123
    %274 = vmatpush.msra.mxu0 %v121
    %275 = vmatpush.msra.mxu0 %v119
    %276 = vmatpush.msra.mxu0 %v117
    %277 = vmatpush.msra.mxu0 %v115
    %278 = vmatpush.msra.mxu0 %v113
    %279 = vmatmul.f32.gmra.mxu0 %v235
    %v280 = vpop.f32.mrf.mxu0
    %v281 = vadd.f32 %v229, %v280
    %282 = vmatmul.f32.gmra.mxu0 %v238
    %v283 = vpop.f32.mrf.mxu0
    %v284 = vadd.f32 %v232, %v283
    %285 = vdwg.mxu0
    %s286 = scalar_lea.vmem %s1, 32
    %v287 = vld [vmem:[%s286] sm:$0xff]
    %v288 = vld [vmem:[%s286 + $0x8] sm:$0xf]
    %v290 = vsel %vm78, %v287, 0
    %v293 = vsel %vm78, %v288, 0
    %295 = vmatpush.msra.mxu0 0.0
    %296 = vmatpush.msra.mxu0 0.0
    %297 = vmatpush.msra.mxu0 0.0
    %298 = vmatpush.msra.mxu0 0.0
    %299 = vmatpush.msra.mxu0 0.0
    %300 = vmatpush.msra.mxu0 0.0
    %301 = vmatpush.msra.mxu0 0.0
    %302 = vmatpush.msra.mxu0 0.0
    %303 = vmatpush.msra.mxu0 0.0
    %304 = vmatpush.msra.mxu0 0.0
    %305 = vmatpush.msra.mxu0 0.0
    %306 = vmatpush.msra.mxu0 %v87
    %307 = vmatpush.msra.mxu0 %v74
    %308 = vmatpush.msra.mxu0 %v73
    %309 = vmatpush.msra.mxu0 %v72
    %310 = vmatpush.msra.mxu0 %v71
    %311 = vmatmul.f32.gmra.mxu0 %v290
    %v312 = vpop.f32.mrf.mxu0
    %v313 = vadd.f32 0.0, %v312
    %314 = vmatmul.f32.gmra.mxu0 %v293
    %v315 = vpop.f32.mrf.mxu0
    %v316 = vadd.f32 0.0, %v315
    %317 = vdwg.mxu0
    %s318 = scalar_lea.vmem %s2, 288
    %v319 = vld [vmem:[%s318] sm:$0xff]
    %v320 = vld [vmem:[%s318 + $0x8] sm:$0xff]
    %v321 = vld [vmem:[%s318 + $0x10] sm:$0xff]
    %v322 = vld [vmem:[%s318 + $0x18] sm:$0xff]
    %v323 = vld [vmem:[%s318 + $0x20] sm:$0xff]
    %v324 = vld [vmem:[%s318 + $0x28] sm:$0xff]
    %v325 = vld [vmem:[%s318 + $0x30] sm:$0xff]
    %v326 = vld [vmem:[%s318 + $0x38] sm:$0xff]
    %v327 = vld [vmem:[%s318 + $0x40] sm:$0xff]
    %v328 = vld [vmem:[%s318 + $0x48] sm:$0xff]
    %v329 = vld [vmem:[%s318 + $0x50] sm:$0xff]
    %v330 = vld [vmem:[%s318 + $0x58] sm:$0xff]
    %v331 = vld [vmem:[%s318 + $0x60] sm:$0xff]
    %v332 = vld [vmem:[%s318 + $0x68] sm:$0xff]
    %v333 = vld [vmem:[%s318 + $0x70] sm:$0xff]
    %v334 = vld [vmem:[%s318 + $0x78] sm:$0xff]
    %v335 = vld [vmem:[%s318 + $0x80] sm:$0xff]
    %v336 = vld [vmem:[%s318 + $0x88] sm:$0xff]
    %v338 = vsel %vm181, %v313, 0
    %v341 = vsel %vm181, %v316, 0
    %343 = vmatpush.msra.mxu0 0.0
    %344 = vmatpush.msra.mxu0 0.0
    %345 = vmatpush.msra.mxu0 0.0
    %346 = vmatpush.msra.mxu0 0.0
    %347 = vmatpush.msra.mxu0 0.0
    %348 = vmatpush.msra.mxu0 0.0
    %349 = vmatpush.msra.mxu0 0.0
    %350 = vmatpush.msra.mxu0 %v335
    %351 = vmatpush.msra.mxu0 %v333
    %352 = vmatpush.msra.mxu0 %v331
    %353 = vmatpush.msra.mxu0 %v329
    %354 = vmatpush.msra.mxu0 %v327
    %355 = vmatpush.msra.mxu0 %v325
    %356 = vmatpush.msra.mxu0 %v323
    %357 = vmatpush.msra.mxu0 %v321
    %358 = vmatpush.msra.mxu0 %v319
    %359 = vmatmul.f32.gmra.mxu0 %v338
    %v360 = vpop.f32.mrf.mxu0
    %v361 = vadd.f32 0.0, %v360
    %362 = vmatmul.f32.gmra.mxu0 %v341
    %v363 = vpop.f32.mrf.mxu0
    %v364 = vadd.f32 0.0, %v363
    %365 = vdwg.mxu0
    %366 = vmatpush.msra.mxu0 0.0
    %367 = vmatpush.msra.mxu0 0.0
    %368 = vmatpush.msra.mxu0 0.0
    %369 = vmatpush.msra.mxu0 0.0
    %370 = vmatpush.msra.mxu0 0.0
    %371 = vmatpush.msra.mxu0 0.0
    %372 = vmatpush.msra.mxu0 0.0
    %373 = vmatpush.msra.mxu0 %v336
    %374 = vmatpush.msra.mxu0 %v334
    %375 = vmatpush.msra.mxu0 %v332
    %376 = vmatpush.msra.mxu0 %v330
    %377 = vmatpush.msra.mxu0 %v328
    %378 = vmatpush.msra.mxu0 %v326
    %379 = vmatpush.msra.mxu0 %v324
    %380 = vmatpush.msra.mxu0 %v322
    %381 = vmatpush.msra.mxu0 %v320
    %382 = vmatmul.f32.gmra.mxu0 %v338
    %v383 = vpop.f32.mrf.mxu0
    %v384 = vadd.f32 0.0, %v383
    %385 = vmatmul.f32.gmra.mxu0 %v341
    %v386 = vpop.f32.mrf.mxu0
    %v387 = vadd.f32 0.0, %v386
    %388 = vdwg.mxu0
    %v389 = vadd.f32 %v258, %v361
    %v390 = vadd.f32 %v281, %v384
    %v391 = vadd.f32 %v261, %v364
    %v392 = vadd.f32 %v284, %v387
    %s393 = scalar_lea.vmem %s1, 48
    %v394 = vld [vmem:[%s393] sm:$0xff]
    %v395 = vld [vmem:[%s393 + $0x8] sm:$0xf]
    %v397 = vsel %vm78, %v394, 0
    %v400 = vsel %vm78, %v395, 0
    %402 = vmatpush.msra.mxu0 0.0
    %403 = vmatpush.msra.mxu0 0.0
    %404 = vmatpush.msra.mxu0 0.0
    %405 = vmatpush.msra.mxu0 0.0
    %406 = vmatpush.msra.mxu0 0.0
    %407 = vmatpush.msra.mxu0 0.0
    %408 = vmatpush.msra.mxu0 0.0
    %409 = vmatpush.msra.mxu0 0.0
    %410 = vmatpush.msra.mxu0 0.0
    %411 = vmatpush.msra.mxu0 0.0
    %412 = vmatpush.msra.mxu0 0.0
    %413 = vmatpush.msra.mxu0 %v87
    %414 = vmatpush.msra.mxu0 %v74
    %415 = vmatpush.msra.mxu0 %v73
    %416 = vmatpush.msra.mxu0 %v72
    %417 = vmatpush.msra.mxu0 %v71
    %418 = vmatmul.f32.gmra.mxu0 %v397
    %v419 = vpop.f32.mrf.mxu0
    %v420 = vadd.f32 0.0, %v419
    %421 = vmatmul.f32.gmra.mxu0 %v400
    %v422 = vpop.f32.mrf.mxu0
    %v423 = vadd.f32 0.0, %v422
    %424 = vdwg.mxu0
    %s425 = scalar_lea.vmem %s2, 432
    %v426 = vld [vmem:[%s425] sm:$0xff]
    %v427 = vld [vmem:[%s425 + $0x8] sm:$0xff]
    %v428 = vld [vmem:[%s425 + $0x10] sm:$0xff]
    %v429 = vld [vmem:[%s425 + $0x18] sm:$0xff]
    %v430 = vld [vmem:[%s425 + $0x20] sm:$0xff]
    %v431 = vld [vmem:[%s425 + $0x28] sm:$0xff]
    %v432 = vld [vmem:[%s425 + $0x30] sm:$0xff]
    %v433 = vld [vmem:[%s425 + $0x38] sm:$0xff]
    %v434 = vld [vmem:[%s425 + $0x40] sm:$0xff]
    %v435 = vld [vmem:[%s425 + $0x48] sm:$0xff]
    %v436 = vld [vmem:[%s425 + $0x50] sm:$0xff]
    %v437 = vld [vmem:[%s425 + $0x58] sm:$0xff]
    %v438 = vld [vmem:[%s425 + $0x60] sm:$0xff]
    %v439 = vld [vmem:[%s425 + $0x68] sm:$0xff]
    %v440 = vld [vmem:[%s425 + $0x70] sm:$0xff]
    %v441 = vld [vmem:[%s425 + $0x78] sm:$0xff]
    %v442 = vld [vmem:[%s425 + $0x80] sm:$0xff]
    %v443 = vld [vmem:[%s425 + $0x88] sm:$0xff]
    %v445 = vsel %vm181, %v420, 0
    %v448 = vsel %vm181, %v423, 0
    %450 = vmatpush.msra.mxu0 0.0
    %451 = vmatpush.msra.mxu0 0.0
    %452 = vmatpush.msra.mxu0 0.0
    %453 = vmatpush.msra.mxu0 0.0
    %454 = vmatpush.msra.mxu0 0.0
    %455 = vmatpush.msra.mxu0 0.0
    %456 = vmatpush.msra.mxu0 0.0
    %457 = vmatpush.msra.mxu0 %v442
    %458 = vmatpush.msra.mxu0 %v440
    %459 = vmatpush.msra.mxu0 %v438
    %460 = vmatpush.msra.mxu0 %v436
    %461 = vmatpush.msra.mxu0 %v434
    %462 = vmatpush.msra.mxu0 %v432
    %463 = vmatpush.msra.mxu0 %v430
    %464 = vmatpush.msra.mxu0 %v428
    %465 = vmatpush.msra.mxu0 %v426
    %466 = vmatmul.f32.gmra.mxu0 %v445
    %v467 = vpop.f32.mrf.mxu0
    %v468 = vadd.f32 0.0, %v467
    %469 = vmatmul.f32.gmra.mxu0 %v448
    %v470 = vpop.f32.mrf.mxu0
    %v471 = vadd.f32 0.0, %v470
    %472 = vdwg.mxu0
    %473 = vmatpush.msra.mxu0 0.0
    %474 = vmatpush.msra.mxu0 0.0
    %475 = vmatpush.msra.mxu0 0.0
    %476 = vmatpush.msra.mxu0 0.0
    %477 = vmatpush.msra.mxu0 0.0
    %478 = vmatpush.msra.mxu0 0.0
    %479 = vmatpush.msra.mxu0 0.0
    %480 = vmatpush.msra.mxu0 %v443
    %481 = vmatpush.msra.mxu0 %v441
    %482 = vmatpush.msra.mxu0 %v439
    %483 = vmatpush.msra.mxu0 %v437
    %484 = vmatpush.msra.mxu0 %v435
    %485 = vmatpush.msra.mxu0 %v433
    %486 = vmatpush.msra.mxu0 %v431
    %487 = vmatpush.msra.mxu0 %v429
    %488 = vmatpush.msra.mxu0 %v427
    %489 = vmatmul.f32.gmra.mxu0 %v445
    %v490 = vpop.f32.mrf.mxu0
    %v491 = vadd.f32 0.0, %v490
    %492 = vmatmul.f32.gmra.mxu0 %v448
    %v493 = vpop.f32.mrf.mxu0
    %v494 = vadd.f32 0.0, %v493
    %495 = vdwg.mxu0
    %v496 = vadd.f32 %v389, %v468
    %v497 = vadd.f32 %v390, %v491
    %v498 = vadd.f32 %v391, %v471
    %v499 = vadd.f32 %v392, %v494
    %s500 = scalar_lea.vmem %s1, 64
    %v501 = vld [vmem:[%s500] sm:$0xff]
    %v502 = vld [vmem:[%s500 + $0x8] sm:$0xf]
    %v504 = vsel %vm78, %v501, 0
    %v507 = vsel %vm78, %v502, 0
    %509 = vmatpush.msra.mxu0 0.0
    %510 = vmatpush.msra.mxu0 0.0
    %511 = vmatpush.msra.mxu0 0.0
    %512 = vmatpush.msra.mxu0 0.0
    %513 = vmatpush.msra.mxu0 0.0
    %514 = vmatpush.msra.mxu0 0.0
    %515 = vmatpush.msra.mxu0 0.0
    %516 = vmatpush.msra.mxu0 0.0
    %517 = vmatpush.msra.mxu0 0.0
    %518 = vmatpush.msra.mxu0 0.0
    %519 = vmatpush.msra.mxu0 0.0
    %520 = vmatpush.msra.mxu0 %v87
    %521 = vmatpush.msra.mxu0 %v74
    %522 = vmatpush.msra.mxu0 %v73
    %523 = vmatpush.msra.mxu0 %v72
    %524 = vmatpush.msra.mxu0 %v71
    %525 = vmatmul.f32.gmra.mxu0 %v504
    %v526 = vpop.f32.mrf.mxu0
    %v527 = vadd.f32 0.0, %v526
    %528 = vmatmul.f32.gmra.mxu0 %v507
    %v529 = vpop.f32.mrf.mxu0
    %v530 = vadd.f32 0.0, %v529
    %531 = vdwg.mxu0
    %s532 = scalar_lea.vmem %s2, 576
    %v533 = vld [vmem:[%s532] sm:$0xff]
    %v534 = vld [vmem:[%s532 + $0x8] sm:$0xff]
    %v535 = vld [vmem:[%s532 + $0x10] sm:$0xff]
    %v536 = vld [vmem:[%s532 + $0x18] sm:$0xff]
    %v537 = vld [vmem:[%s532 + $0x20] sm:$0xff]
    %v538 = vld [vmem:[%s532 + $0x28] sm:$0xff]
    %v539 = vld [vmem:[%s532 + $0x30] sm:$0xff]
    %v540 = vld [vmem:[%s532 + $0x38] sm:$0xff]
    %v541 = vld [vmem:[%s532 + $0x40] sm:$0xff]
    %v542 = vld [vmem:[%s532 + $0x48] sm:$0xff]
    %v543 = vld [vmem:[%s532 + $0x50] sm:$0xff]
    %v544 = vld [vmem:[%s532 + $0x58] sm:$0xff]
    %v545 = vld [vmem:[%s532 + $0x60] sm:$0xff]
    %v546 = vld [vmem:[%s532 + $0x68] sm:$0xff]
    %v547 = vld [vmem:[%s532 + $0x70] sm:$0xff]
    %v548 = vld [vmem:[%s532 + $0x78] sm:$0xff]
    %v549 = vld [vmem:[%s532 + $0x80] sm:$0xff]
    %v550 = vld [vmem:[%s532 + $0x88] sm:$0xff]
    %v552 = vsel %vm181, %v527, 0
    %v555 = vsel %vm181, %v530, 0
    %557 = vmatpush.msra.mxu0 0.0
    %558 = vmatpush.msra.mxu0 0.0
    %559 = vmatpush.msra.mxu0 0.0
    %560 = vmatpush.msra.mxu0 0.0
    %561 = vmatpush.msra.mxu0 0.0
    %562 = vmatpush.msra.mxu0 0.0
    %563 = vmatpush.msra.mxu0 0.0
    %564 = vmatpush.msra.mxu0 %v549
    %565 = vmatpush.msra.mxu0 %v547
    %566 = vmatpush.msra.mxu0 %v545
    %567 = vmatpush.msra.mxu0 %v543
    %568 = vmatpush.msra.mxu0 %v541
    %569 = vmatpush.msra.mxu0 %v539
    %570 = vmatpush.msra.mxu0 %v537
    %571 = vmatpush.msra.mxu0 %v535
    %572 = vmatpush.msra.mxu0 %v533
    %573 = vmatmul.f32.gmra.mxu0 %v552
    %v574 = vpop.f32.mrf.mxu0
    %v575 = vadd.f32 0.0, %v574
    %576 = vmatmul.f32.gmra.mxu0 %v555
    %v577 = vpop.f32.mrf.mxu0
    %v578 = vadd.f32 0.0, %v577
    %579 = vdwg.mxu0
    %580 = vmatpush.msra.mxu0 0.0
    %581 = vmatpush.msra.mxu0 0.0
    %582 = vmatpush.msra.mxu0 0.0
    %583 = vmatpush.msra.mxu0 0.0
    %584 = vmatpush.msra.mxu0 0.0
    %585 = vmatpush.msra.mxu0 0.0
    %586 = vmatpush.msra.mxu0 0.0
    %587 = vmatpush.msra.mxu0 %v550
    %588 = vmatpush.msra.mxu0 %v548
    %589 = vmatpush.msra.mxu0 %v546
    %590 = vmatpush.msra.mxu0 %v544
    %591 = vmatpush.msra.mxu0 %v542
    %592 = vmatpush.msra.mxu0 %v540
    %593 = vmatpush.msra.mxu0 %v538
    %594 = vmatpush.msra.mxu0 %v536
    %595 = vmatpush.msra.mxu0 %v534
    %596 = vmatmul.f32.gmra.mxu0 %v552
    %v597 = vpop.f32.mrf.mxu0
    %v598 = vadd.f32 0.0, %v597
    %599 = vmatmul.f32.gmra.mxu0 %v555
    %v600 = vpop.f32.mrf.mxu0
    %v601 = vadd.f32 0.0, %v600
    %602 = vdwg.mxu0
    %v603 = vadd.f32 %v496, %v575
    %v604 = vadd.f32 %v497, %v598
    %v605 = vadd.f32 %v498, %v578
    %v606 = vadd.f32 %v499, %v601
    %s607 = scalar_lea.vmem %s1, 80
    %v608 = vld [vmem:[%s607] sm:$0xff]
    %v609 = vld [vmem:[%s607 + $0x8] sm:$0xf]
    %v611 = vsel %vm78, %v608, 0
    %v614 = vsel %vm78, %v609, 0
    %616 = vmatpush.msra.mxu0 0.0
    %617 = vmatpush.msra.mxu0 0.0
    %618 = vmatpush.msra.mxu0 0.0
    %619 = vmatpush.msra.mxu0 0.0
    %620 = vmatpush.msra.mxu0 0.0
    %621 = vmatpush.msra.mxu0 0.0
    %622 = vmatpush.msra.mxu0 0.0
    %623 = vmatpush.msra.mxu0 0.0
    %624 = vmatpush.msra.mxu0 0.0
    %625 = vmatpush.msra.mxu0 0.0
    %626 = vmatpush.msra.mxu0 0.0
    %627 = vmatpush.msra.mxu0 %v87
    %628 = vmatpush.msra.mxu0 %v74
    %629 = vmatpush.msra.mxu0 %v73
    %630 = vmatpush.msra.mxu0 %v72
    %631 = vmatpush.msra.mxu0 %v71
    %632 = vmatmul.f32.gmra.mxu0 %v611
    %v633 = vpop.f32.mrf.mxu0
    %v634 = vadd.f32 0.0, %v633
    %635 = vmatmul.f32.gmra.mxu0 %v614
    %v636 = vpop.f32.mrf.mxu0
    %v637 = vadd.f32 0.0, %v636
    %638 = vdwg.mxu0
    %s639 = scalar_lea.vmem %s2, 720
    %v640 = vld [vmem:[%s639] sm:$0xff]
    %v641 = vld [vmem:[%s639 + $0x8] sm:$0xff]
    %v642 = vld [vmem:[%s639 + $0x10] sm:$0xff]
    %v643 = vld [vmem:[%s639 + $0x18] sm:$0xff]
    %v644 = vld [vmem:[%s639 + $0x20] sm:$0xff]
    %v645 = vld [vmem:[%s639 + $0x28] sm:$0xff]
    %v646 = vld [vmem:[%s639 + $0x30] sm:$0xff]
    %v647 = vld [vmem:[%s639 + $0x38] sm:$0xff]
    %v648 = vld [vmem:[%s639 + $0x40] sm:$0xff]
    %v649 = vld [vmem:[%s639 + $0x48] sm:$0xff]
    %v650 = vld [vmem:[%s639 + $0x50] sm:$0xff]
    %v651 = vld [vmem:[%s639 + $0x58] sm:$0xff]
    %v652 = vld [vmem:[%s639 + $0x60] sm:$0xff]
    %v653 = vld [vmem:[%s639 + $0x68] sm:$0xff]
    %v654 = vld [vmem:[%s639 + $0x70] sm:$0xff]
    %v655 = vld [vmem:[%s639 + $0x78] sm:$0xff]
    %v656 = vld [vmem:[%s639 + $0x80] sm:$0xff]
    %v657 = vld [vmem:[%s639 + $0x88] sm:$0xff]
    %v659 = vsel %vm181, %v634, 0
    %v662 = vsel %vm181, %v637, 0
    %664 = vmatpush.msra.mxu0 0.0
    %665 = vmatpush.msra.mxu0 0.0
    %666 = vmatpush.msra.mxu0 0.0
    %667 = vmatpush.msra.mxu0 0.0
    %668 = vmatpush.msra.mxu0 0.0
    %669 = vmatpush.msra.mxu0 0.0
    %670 = vmatpush.msra.mxu0 0.0
    %671 = vmatpush.msra.mxu0 %v656
    %672 = vmatpush.msra.mxu0 %v654
    %673 = vmatpush.msra.mxu0 %v652
    %674 = vmatpush.msra.mxu0 %v650
    %675 = vmatpush.msra.mxu0 %v648
    %676 = vmatpush.msra.mxu0 %v646
    %677 = vmatpush.msra.mxu0 %v644
    %678 = vmatpush.msra.mxu0 %v642
    %679 = vmatpush.msra.mxu0 %v640
    %680 = vmatmul.f32.gmra.mxu0 %v659
    %v681 = vpop.f32.mrf.mxu0
    %v682 = vadd.f32 0.0, %v681
    %683 = vmatmul.f32.gmra.mxu0 %v662
    %v684 = vpop.f32.mrf.mxu0
    %v685 = vadd.f32 0.0, %v684
    %686 = vdwg.mxu0
    %687 = vmatpush.msra.mxu0 0.0
    %688 = vmatpush.msra.mxu0 0.0
    %689 = vmatpush.msra.mxu0 0.0
    %690 = vmatpush.msra.mxu0 0.0
    %691 = vmatpush.msra.mxu0 0.0
    %692 = vmatpush.msra.mxu0 0.0
    %693 = vmatpush.msra.mxu0 0.0
    %694 = vmatpush.msra.mxu0 %v657
    %695 = vmatpush.msra.mxu0 %v655
    %696 = vmatpush.msra.mxu0 %v653
    %697 = vmatpush.msra.mxu0 %v651
    %698 = vmatpush.msra.mxu0 %v649
    %699 = vmatpush.msra.mxu0 %v647
    %700 = vmatpush.msra.mxu0 %v645
    %701 = vmatpush.msra.mxu0 %v643
    %702 = vmatpush.msra.mxu0 %v641
    %703 = vmatmul.f32.gmra.mxu0 %v659
    %v704 = vpop.f32.mrf.mxu0
    %v705 = vadd.f32 0.0, %v704
    %706 = vmatmul.f32.gmra.mxu0 %v662
    %v707 = vpop.f32.mrf.mxu0
    %v708 = vadd.f32 0.0, %v707
    %709 = vdwg.mxu0
    %v710 = vadd.f32 %v603, %v682
    %v711 = vadd.f32 %v604, %v705
    %v712 = vadd.f32 %v605, %v685
    %v713 = vadd.f32 %v606, %v708
    %s714 = scalar_lea.vmem %s1, 96
    %v715 = vld [vmem:[%s714] sm:$0xff]
    %v716 = vld [vmem:[%s714 + $0x8] sm:$0xf]
    %v718 = vsel %vm78, %v715, 0
    %v721 = vsel %vm78, %v716, 0
    %723 = vmatpush.msra.mxu0 0.0
    %724 = vmatpush.msra.mxu0 0.0
    %725 = vmatpush.msra.mxu0 0.0
    %726 = vmatpush.msra.mxu0 0.0
    %727 = vmatpush.msra.mxu0 0.0
    %728 = vmatpush.msra.mxu0 0.0
    %729 = vmatpush.msra.mxu0 0.0
    %730 = vmatpush.msra.mxu0 0.0
    %731 = vmatpush.msra.mxu0 0.0
    %732 = vmatpush.msra.mxu0 0.0
    %733 = vmatpush.msra.mxu0 0.0
    %734 = vmatpush.msra.mxu0 %v87
    %735 = vmatpush.msra.mxu0 %v74
    %736 = vmatpush.msra.mxu0 %v73
    %737 = vmatpush.msra.mxu0 %v72
    %738 = vmatpush.msra.mxu0 %v71
    %739 = vmatmul.f32.gmra.mxu0 %v718
    %v740 = vpop.f32.mrf.mxu0
    %v741 = vadd.f32 0.0, %v740
    %742 = vmatmul.f32.gmra.mxu0 %v721
    %v743 = vpop.f32.mrf.mxu0
    %v744 = vadd.f32 0.0, %v743
    %745 = vdwg.mxu0
    %s746 = scalar_lea.vmem %s2, 864
    %v747 = vld [vmem:[%s746] sm:$0xff]
    %v748 = vld [vmem:[%s746 + $0x8] sm:$0xff]
    %v749 = vld [vmem:[%s746 + $0x10] sm:$0xff]
    %v750 = vld [vmem:[%s746 + $0x18] sm:$0xff]
    %v751 = vld [vmem:[%s746 + $0x20] sm:$0xff]
    %v752 = vld [vmem:[%s746 + $0x28] sm:$0xff]
    %v753 = vld [vmem:[%s746 + $0x30] sm:$0xff]
    %v754 = vld [vmem:[%s746 + $0x38] sm:$0xff]
    %v755 = vld [vmem:[%s746 + $0x40] sm:$0xff]
    %v756 = vld [vmem:[%s746 + $0x48] sm:$0xff]
    %v757 = vld [vmem:[%s746 + $0x50] sm:$0xff]
    %v758 = vld [vmem:[%s746 + $0x58] sm:$0xff]
    %v759 = vld [vmem:[%s746 + $0x60] sm:$0xff]
    %v760 = vld [vmem:[%s746 + $0x68] sm:$0xff]
    %v761 = vld [vmem:[%s746 + $0x70] sm:$0xff]
    %v762 = vld [vmem:[%s746 + $0x78] sm:$0xff]
    %v763 = vld [vmem:[%s746 + $0x80] sm:$0xff]
    %v764 = vld [vmem:[%s746 + $0x88] sm:$0xff]
    %v766 = vsel %vm181, %v741, 0
    %v769 = vsel %vm181, %v744, 0
    %771 = vmatpush.msra.mxu0 0.0
    %772 = vmatpush.msra.mxu0 0.0
    %773 = vmatpush.msra.mxu0 0.0
    %774 = vmatpush.msra.mxu0 0.0
    %775 = vmatpush.msra.mxu0 0.0
    %776 = vmatpush.msra.mxu0 0.0
    %777 = vmatpush.msra.mxu0 0.0
    %778 = vmatpush.msra.mxu0 %v763
    %779 = vmatpush.msra.mxu0 %v761
    %780 = vmatpush.msra.mxu0 %v759
    %781 = vmatpush.msra.mxu0 %v757
    %782 = vmatpush.msra.mxu0 %v755
    %783 = vmatpush.msra.mxu0 %v753
    %784 = vmatpush.msra.mxu0 %v751
    %785 = vmatpush.msra.mxu0 %v749
    %786 = vmatpush.msra.mxu0 %v747
    %787 = vmatmul.f32.gmra.mxu0 %v766
    %v788 = vpop.f32.mrf.mxu0
    %v789 = vadd.f32 0.0, %v788
    %790 = vmatmul.f32.gmra.mxu0 %v769
    %v791 = vpop.f32.mrf.mxu0
    %v792 = vadd.f32 0.0, %v791
    %793 = vdwg.mxu0
    %794 = vmatpush.msra.mxu0 0.0
    %795 = vmatpush.msra.mxu0 0.0
    %796 = vmatpush.msra.mxu0 0.0
    %797 = vmatpush.msra.mxu0 0.0
    %798 = vmatpush.msra.mxu0 0.0
    %799 = vmatpush.msra.mxu0 0.0
    %800 = vmatpush.msra.mxu0 0.0
    %801 = vmatpush.msra.mxu0 %v764
    %802 = vmatpush.msra.mxu0 %v762
    %803 = vmatpush.msra.mxu0 %v760
    %804 = vmatpush.msra.mxu0 %v758
    %805 = vmatpush.msra.mxu0 %v756
    %806 = vmatpush.msra.mxu0 %v754
    %807 = vmatpush.msra.mxu0 %v752
    %808 = vmatpush.msra.mxu0 %v750
    %809 = vmatpush.msra.mxu0 %v748
    %810 = vmatmul.f32.gmra.mxu0 %v766
    %v811 = vpop.f32.mrf.mxu0
    %v812 = vadd.f32 0.0, %v811
    %813 = vmatmul.f32.gmra.mxu0 %v769
    %v814 = vpop.f32.mrf.mxu0
    %v815 = vadd.f32 0.0, %v814
    %816 = vdwg.mxu0
    %v817 = vadd.f32 %v710, %v789
    %v818 = vadd.f32 %v711, %v812
    %v819 = vadd.f32 %v712, %v792
    %v820 = vadd.f32 %v713, %v815
    %v821 = vsel %vm85, %v819, 0.0
    %v822 = vadd.f32 %v817, %v821
    %v823 = vrot.slane %v822, 4
    %v824 = vadd.f32 %v822, %v823
    %v825 = vrot.slane %v824, 2
    %v826 = vadd.f32 %v824, %v825
    %v827 = vrot.slane %v826, 1
    %v828 = vadd.f32 %v826, %v827
    %v829 = vsel %vm63, %v818, 0.0
    %vm830 = vcmask 519168
    %v831 = vsel %vm830, %v820, 0.0
    %v832 = vadd.f32 %v829, %v831
    %v833 = vrot.slane %v832, 4
    %v834 = vadd.f32 %v832, %v833
    %v835 = vrot.slane %v834, 2
    %v836 = vadd.f32 %v834, %v835
    %v837 = vrot.slane %v836, 1
    %v838 = vadd.f32 %v836, %v837
    %v839 = vmul.f32 %v817, %v817
    %v840 = vmul.f32 %v818, %v818
    %v841 = vmul.f32 %v819, %v819
    %v842 = vmul.f32 %v820, %v820
    %v843 = vsel %vm85, %v841, 0.0
    %v844 = vadd.f32 %v839, %v843
    %v845 = vrot.slane %v844, 4
    %v846 = vadd.f32 %v844, %v845
    %v847 = vrot.slane %v846, 2
    %v848 = vadd.f32 %v846, %v847
    %v849 = vrot.slane %v848, 1
    %v850 = vadd.f32 %v848, %v849
    %v851 = vsel %vm63, %v840, 0.0
    %v852 = vsel %vm830, %v842, 0.0
    %v853 = vadd.f32 %v851, %v852
    %v854 = vrot.slane %v853, 4
    %v855 = vadd.f32 %v853, %v854
    %v856 = vrot.slane %v855, 2
    %v857 = vadd.f32 %v855, %v856
    %v858 = vrot.slane %v857, 1
    %v859 = vadd.f32 %v857, %v858
    %v860 = vadd.f32 %v828, 0.0
    %v861 = vadd.f32 %v850, 0.0
    %863 = vrot.lane.b32.xlu0 %v828, 96
    %v864 = vpop.permute.xlu0 %863
    %v866 = vadd.f32 %v860, %v864
    %868 = vrot.lane.b32.xlu0 %v850, 96
    %v869 = vpop.permute.xlu0 %868
    %v871 = vadd.f32 %v861, %v869
    %872 = vrot.lane.b32.xlu0 %v828, 64
    %v873 = vpop.permute.xlu0 %872
    %v875 = vadd.f32 %v866, %v873
    %876 = vrot.lane.b32.xlu0 %v850, 64
    %v877 = vpop.permute.xlu0 %876
    %v879 = vadd.f32 %v871, %v877
    %880 = vrot.lane.b32.xlu0 %v828, 32
    %v881 = vpop.permute.xlu0 %880
    %v883 = vadd.f32 %v875, %v881
    %884 = vrot.lane.b32.xlu0 %v850, 32
    %v885 = vpop.permute.xlu0 %884
    %v887 = vadd.f32 %v879, %v885
    %v888 = vadd.f32 %v883, %v838
    %v889 = vadd.f32 %v887, %v859
    %891 = vrot.lane.b32.xlu0 %v838, 96
    %v892 = vpop.permute.xlu0 %891
    %v894 = vadd.f32 %v888, %v892
    %896 = vrot.lane.b32.xlu0 %v859, 96
    %v897 = vpop.permute.xlu0 %896
    %v899 = vadd.f32 %v889, %v897
    %v900 = vrcp.pop 72.0
    %v901 = vmul.f32 72.0, %v900
    %v902 = vsub.f32 1.0, %v901
    %v903 = vmul.f32 %v900, %v902
    %v904 = vadd.f32 %v900, %v903
    %vm905 = vweird.f32 %v900
    %v906 = vsel %vm905, %v900, %v904
    %v907 = vmul.f32 %v894, %v906
    %v908 = vmul.f32 %v899, %v906
    %v909 = vmul.f32 %v907, %v907
    %v910 = vsub.f32 %v908, %v909
    %v911 = vmax.f32 %v910, 0.0
    %v912 = vld [vmem:[%s3] sm:$0x1]
    %v913 = vadd.f32 %v911, 1e-05
    %v914 = vrsqrt.pop %v913
    %v915 = vmul.f32 %v914, %v913
    %v916 = vmul.f32 %v915, %v914
    %v917 = vmul.f32 0.5, %v916
    %v918 = vsub.f32 1.5, %v917
    %v919 = vmul.f32 %v914, %v918
    %vm920 = vweird.f32 %v913
    %vm921 = vweird.f32 %v914
    %vm922 = vmor %vm920, %vm921
    %v923 = vsel %vm922, %v914, %v919
    %v924 = vmul.f32 %v912, %v923
    %v925 = vld [vmem:[%s4] sm:$0x1]
    %v926 = vmul.f32 %v907, %v924
    %v927 = vsub.f32 %v925, %v926
    %v929 = vperm.slane %v924, 0
    %v931 = vmul.f32 %v817, %v929
    %v933 = vperm.slane %v927, 0
    %v935 = vadd.f32 %v931, %v933
    %v936 = vmax.f32 %v935, 0.0
    %v938 = vrot.slane %v936, 7
    %939 = vrot.lane.b32.xlu0 %v938, 32
    %v940 = vpop.permute.xlu0 %939
    %vm942 = vcmask 522497
    %943 = vst.msk [vmem:[#allocation2] sm:$0x7e] %vm942, %v940
    %944 = vrot.lane.b32.xlu0 %v929, 32
    %v945 = vpop.permute.xlu0 %944
    %v947 = vmul.f32 %v817, %v945
    %948 = vrot.lane.b32.xlu0 %v933, 32
    %v949 = vpop.permute.xlu0 %948
    %v951 = vadd.f32 %v947, %v949
    %v952 = vmax.f32 %v951, 0.0
    %v954 = vrot.slane %v952, 7
    %955 = vrot.lane.b32.xlu0 %v954, 32
    %v956 = vpop.permute.xlu0 %955
    %vm958 = vcmask 784897
    %959 = vst.msk [vmem:[#allocation2] sm:$0x7e] %vm958, %v956
    %960 = vrot.lane.b32.xlu0 %v929, 64
    %v961 = vpop.permute.xlu0 %960
    %v963 = vmul.f32 %v817, %v961
    %964 = vrot.lane.b32.xlu0 %v933, 64
    %v965 = vpop.permute.xlu0 %964
    %v967 = vadd.f32 %v963, %v965
    %v968 = vmax.f32 %v967, 0.0
    %v970 = vrot.slane %v968, 7
    %971 = vrot.lane.b32.xlu0 %v970, 32
    %v972 = vpop.permute.xlu0 %971
    %vm974 = vcmask 1047297
    %975 = vst.msk [vmem:[#allocation2] sm:$0x7e] %vm974, %v972
    %976 = vrot.lane.b32.xlu0 %v929, 96
    %v977 = vpop.permute.xlu0 %976
    %v979 = vmul.f32 %v817, %v977
    %980 = vrot.lane.b32.xlu0 %v933, 96
    %v981 = vpop.permute.xlu0 %980
    %v983 = vadd.f32 %v979, %v981
    %v984 = vmax.f32 %v983, 0.0
    %v986 = vrot.slane %v984, 7
    %987 = vrot.lane.b32.xlu0 %v986, 32
    %v988 = vpop.permute.xlu0 %987
    %vm990 = vcmask 260097
    %991 = vst.msk [vmem:[#allocation2 + $0x8] sm:$0x7e] %vm990, %v988
    %v992 = vmul.f32 %v818, %v929
    %v993 = vadd.f32 %v992, %v933
    %v994 = vmax.f32 %v993, 0.0
    %v996 = vrot.slane %v994, 7
    %997 = vrot.lane.b32.xlu0 %v996, 32
    %v998 = vpop.permute.xlu0 %997
    %1000 = vst.msk [vmem:[#allocation2 + $0x8] sm:$0x7e] %vm942, %v998
    %v1001 = vmul.f32 %v818, %v945
    %v1002 = vadd.f32 %v1001, %v949
    %v1003 = vmax.f32 %v1002, 0.0
    %v1005 = vrot.slane %v1003, 7
    %1006 = vrot.lane.b32.xlu0 %v1005, 32
    %v1007 = vpop.permute.xlu0 %1006
    %1009 = vst.msk [vmem:[#allocation2 + $0x8] sm:$0x7e] %vm958, %v1007
    %v1010 = vmul.f32 %v819, %v929
    %v1011 = vadd.f32 %v1010, %v933
    %v1012 = vmax.f32 %v1011, 0.0
    %vm1014 = vcmask 1042432
    %v1015 = vrot.slane %v936, 5
    %v1016 = vrot.slane %v1012, 5
    %v1017 = vsel %vm1014, %v1015, %v1016
    %1018 = vrot.lane.b32.xlu0 %v1017, 32
    %v1019 = vpop.permute.xlu0 %1018
    %1021 = vst.msk [vmem:[#allocation2 + $0x10] sm:$0x7e] %vm942, %v1019
    %v1022 = vmul.f32 %v819, %v945
    %v1023 = vadd.f32 %v1022, %v949
    %v1024 = vmax.f32 %v1023, 0.0
    %v1026 = vrot.slane %v952, 5
    %v1027 = vrot.slane %v1024, 5
    %v1028 = vsel %vm1014, %v1026, %v1027
    %1029 = vrot.lane.b32.xlu0 %v1028, 32
    %v1030 = vpop.permute.xlu0 %1029
    %1032 = vst.msk [vmem:[#allocation2 + $0x10] sm:$0x7e] %vm958, %v1030
    %v1033 = vmul.f32 %v819, %v961
    %v1034 = vadd.f32 %v1033, %v965
    %v1035 = vmax.f32 %v1034, 0.0
    %v1037 = vrot.slane %v968, 5
    %v1038 = vrot.slane %v1035, 5
    %v1039 = vsel %vm1014, %v1037, %v1038
    %1040 = vrot.lane.b32.xlu0 %v1039, 32
    %v1041 = vpop.permute.xlu0 %1040
    %1043 = vst.msk [vmem:[#allocation2 + $0x10] sm:$0x7e] %vm974, %v1041
    %v1044 = vmul.f32 %v819, %v977
    %v1045 = vadd.f32 %v1044, %v981
    %v1046 = vmax.f32 %v1045, 0.0
    %v1048 = vrot.slane %v984, 5
    %v1049 = vrot.slane %v1046, 5
    %v1050 = vsel %vm1014, %v1048, %v1049
    %1051 = vrot.lane.b32.xlu0 %v1050, 32
    %v1052 = vpop.permute.xlu0 %1051
    %1054 = vst.msk [vmem:[#allocation2 + $0x18] sm:$0x7e] %vm990, %v1052
    %v1055 = vmul.f32 %v820, %v929
    %v1056 = vadd.f32 %v1055, %v933
    %v1057 = vmax.f32 %v1056, 0.0
    %v1059 = vrot.slane %v994, 5
    %v1060 = vrot.slane %v1057, 5
    %v1061 = vsel %vm1014, %v1059, %v1060
    %1062 = vrot.lane.b32.xlu0 %v1061, 32
    %v1063 = vpop.permute.xlu0 %1062
    %1065 = vst.msk [vmem:[#allocation2 + $0x18] sm:$0x7e] %vm942, %v1063
    %v1066 = vmul.f32 %v820, %v945
    %v1067 = vadd.f32 %v1066, %v949
    %v1068 = vmax.f32 %v1067, 0.0
    %v1070 = vrot.slane %v1003, 5
    %v1071 = vrot.slane %v1068, 5
    %v1072 = vsel %vm1014, %v1070, %v1071
    %1073 = vrot.lane.b32.xlu0 %v1072, 32
    %v1074 = vpop.permute.xlu0 %1073
    %1076 = vst.msk [vmem:[#allocation2 + $0x18] sm:$0x7e] %vm958, %v1074
    %v1077 = vld [vmem:[#allocation2] sm:$0xff]
    %v1078 = vld [vmem:[#allocation2 + $0x8] sm:$0xff]
    %v1079 = vld [vmem:[#allocation2 + $0x10] sm:$0xff]
    %v1080 = vld [vmem:[#allocation2 + $0x18] sm:$0xff]
    %v1081 = vld [vmem:[%s5] sm:$0x3f]
    %vm1082 = vcmask 130048
    %v1084 = vsel %vm1082, %v1081, 0
    %1086 = vmatpush.msra.mxu0 0.0
    %1087 = vmatpush.msra.mxu0 0.0
    %1088 = vmatpush.msra.mxu0 0.0
    %1089 = vmatpush.msra.mxu0 0.0
    %1090 = vmatpush.msra.mxu0 0.0
    %1091 = vmatpush.msra.mxu0 0.0
    %1092 = vmatpush.msra.mxu0 0.0
    %1093 = vmatpush.msra.mxu0 0.0
    %1094 = vmatpush.msra.mxu0 0.0
    %1095 = vmatpush.msra.mxu0 0.0
    %1096 = vmatpush.msra.mxu0 0.0
    %1097 = vmatpush.msra.mxu0 0.0
    %1098 = vmatpush.msra.mxu0 0.0
    %1099 = vmatpush.msra.mxu0 0.0
    %1100 = vmatpush.msra.mxu0 %v1079
    %1101 = vmatpush.msra.mxu0 %v1077
    %1102 = vmatmul.f32.gmra.mxu0 %v1084
    %v1103 = vpop.f32.mrf.mxu0
    %v1104 = vadd.f32 0.0, %v1103
    %1105 = vdwg.mxu0
    %1106 = vmatpush.msra.mxu0 0.0
    %1107 = vmatpush.msra.mxu0 0.0
    %1108 = vmatpush.msra.mxu0 0.0
    %1109 = vmatpush.msra.mxu0 0.0
    %1110 = vmatpush.msra.mxu0 0.0
    %1111 = vmatpush.msra.mxu0 0.0
    %1112 = vmatpush.msra.mxu0 0.0
    %1113 = vmatpush.msra.mxu0 0.0
    %1114 = vmatpush.msra.mxu0 0.0
    %1115 = vmatpush.msra.mxu0 0.0
    %1116 = vmatpush.msra.mxu0 0.0
    %1117 = vmatpush.msra.mxu0 0.0
    %1118 = vmatpush.msra.mxu0 0.0
    %1119 = vmatpush.msra.mxu0 0.0
    %1120 = vmatpush.msra.mxu0 %v1080
    %1121 = vmatpush.msra.mxu0 %v1078
    %1122 = vmatmul.f32.gmra.mxu0 %v1084
    %v1123 = vpop.f32.mrf.mxu0
    %v1124 = vadd.f32 0.0, %v1123
    %1125 = vdwg.mxu0
    %v1126 = vld [vmem:[%s6] sm:$0xff]
    %v1127 = vld [vmem:[%s6 + $0x8] sm:$0xff]
    %v1128 = vld [vmem:[%s6 + $0x10] sm:$0xff]
    %v1129 = vld [vmem:[%s6 + $0x18] sm:$0xff]
    %v1130 = vld [vmem:[%s6 + $0x20] sm:$0xff]
    %v1131 = vld [vmem:[%s6 + $0x28] sm:$0xff]
    %v1132 = vld [vmem:[%s6 + $0x30] sm:$0xff]
    %v1133 = vld [vmem:[%s6 + $0x38] sm:$0xff]
    %v1134 = vld [vmem:[%s6 + $0x40] sm:$0xff]
    %v1135 = vld [vmem:[%s6 + $0x48] sm:$0xff]
    %v1136 = vld [vmem:[%s6 + $0x50] sm:$0xff]
    %v1137 = vld [vmem:[%s6 + $0x58] sm:$0xff]
    %v1138 = vld [vmem:[%s6 + $0x60] sm:$0xff]
    %v1139 = vld [vmem:[%s6 + $0x68] sm:$0xff]
    %v1140 = vld [vmem:[%s6 + $0x70] sm:$0xff]
    %v1141 = vld [vmem:[%s6 + $0x78] sm:$0xff]
    %v1142 = vld [vmem:[%s6 + $0x80] sm:$0xff]
    %v1143 = vld [vmem:[%s6 + $0x88] sm:$0xff]
    %v1144 = vld [vmem:[%s6 + $0x90] sm:$0xff]
    %v1145 = vld [vmem:[%s6 + $0x98] sm:$0xff]
    %v1146 = vld [vmem:[%s6 + $0xa0] sm:$0xff]
    %v1147 = vld [vmem:[%s6 + $0xa8] sm:$0xff]
    %v1148 = vld [vmem:[%s6 + $0xb0] sm:$0xff]
    %v1149 = vld [vmem:[%s6 + $0xb8] sm:$0xff]
    %v1150 = vld [vmem:[%s6 + $0xc0] sm:$0xff]
    %v1151 = vld [vmem:[%s6 + $0xc8] sm:$0xff]
    %v1152 = vld [vmem:[%s6 + $0xd0] sm:$0xff]
    %v1153 = vld [vmem:[%s6 + $0xd8] sm:$0xff]
    %v1154 = vld [vmem:[%s6 + $0xe0] sm:$0xff]
    %v1155 = vld [vmem:[%s6 + $0xe8] sm:$0xff]
    %v1156 = vld [vmem:[%s6 + $0xf0] sm:$0xff]
    %v1157 = vld [vmem:[%s6 + $0xf8] sm:$0xff]
    %v1158 = vld [vmem:[%s6 + $0x100] sm:$0xff]
    %v1159 = vld [vmem:[%s6 + $0x108] sm:$0xff]
    %v1160 = vld [vmem:[%s6 + $0x110] sm:$0xff]
    %v1161 = vld [vmem:[%s6 + $0x118] sm:$0xff]
    %v1162 = vld [vmem:[%s6 + $0x120] sm:$0xff]
    %v1163 = vld [vmem:[%s6 + $0x128] sm:$0xff]
    %v1164 = vld [vmem:[%s6 + $0x130] sm:$0xff]
    %v1165 = vld [vmem:[%s6 + $0x138] sm:$0xff]
    %v1166 = vld [vmem:[%s6 + $0x140] sm:$0xff]
    %v1167 = vld [vmem:[%s6 + $0x148] sm:$0xff]
    %v1168 = vld [vmem:[%s6 + $0x150] sm:$0xff]
    %v1169 = vld [vmem:[%s6 + $0x158] sm:$0xff]
    %v1170 = vld [vmem:[%s6 + $0x160] sm:$0xff]
    %v1171 = vld [vmem:[%s6 + $0x168] sm:$0xff]
    %v1172 = vld [vmem:[%s6 + $0x170] sm:$0xff]
    %v1173 = vld [vmem:[%s6 + $0x178] sm:$0xff]
    %v1174 = vld [vmem:[%s6 + $0x180] sm:$0xff]
    %v1175 = vld [vmem:[%s6 + $0x188] sm:$0xff]
    %v1176 = vld [vmem:[%s6 + $0x190] sm:$0xff]
    %v1177 = vld [vmem:[%s6 + $0x198] sm:$0xff]
    %v1178 = vld [vmem:[%s6 + $0x1a0] sm:$0xff]
    %v1179 = vld [vmem:[%s6 + $0x1a8] sm:$0xff]
    %v1180 = vld [vmem:[%s6 + $0x1b0] sm:$0xff]
    %v1181 = vld [vmem:[%s6 + $0x1b8] sm:$0xff]
    %v1182 = vld [vmem:[%s6 + $0x1c0] sm:$0xff]
    %v1183 = vld [vmem:[%s6 + $0x1c8] sm:$0xff]
    %v1184 = vld [vmem:[%s6 + $0x1d0] sm:$0xff]
    %v1185 = vld [vmem:[%s6 + $0x1d8] sm:$0xff]
    %v1186 = vld [vmem:[%s6 + $0x1e0] sm:$0xff]
    %v1187 = vld [vmem:[%s6 + $0x1e8] sm:$0xff]
    %v1188 = vld [vmem:[%s6 + $0x1f0] sm:$0xff]
    %v1189 = vld [vmem:[%s6 + $0x1f8] sm:$0xff]
    %s1190 = scalar_lea.vmem %s5, 8
    %v1191 = vld [vmem:[%s1190] sm:$0x3f]
    %v1193 = vsel %vm1082, %v1191, 0
    %1195 = vmatpush.msra.mxu0 0.0
    %1196 = vmatpush.msra.mxu0 0.0
    %1197 = vmatpush.msra.mxu0 0.0
    %1198 = vmatpush.msra.mxu0 0.0
    %1199 = vmatpush.msra.mxu0 0.0
    %1200 = vmatpush.msra.mxu0 0.0
    %1201 = vmatpush.msra.mxu0 0.0
    %1202 = vmatpush.msra.mxu0 0.0
    %1203 = vmatpush.msra.mxu0 0.0
    %1204 = vmatpush.msra.mxu0 0.0
    %1205 = vmatpush.msra.mxu0 0.0
    %1206 = vmatpush.msra.mxu0 0.0
    %1207 = vmatpush.msra.mxu0 0.0
    %1208 = vmatpush.msra.mxu0 0.0
    %1209 = vmatpush.msra.mxu0 %v1079
    %1210 = vmatpush.msra.mxu0 %v1077
    %1211 = vmatmul.f32.gmra.mxu0 %v1193
    %v1212 = vpop.f32.mrf.mxu0
    %v1213 = vadd.f32 0.0, %v1212
    %1214 = vdwg.mxu0
    %1215 = vmatpush.msra.mxu0 0.0
    %1216 = vmatpush.msra.mxu0 0.0
    %1217 = vmatpush.msra.mxu0 0.0
    %1218 = vmatpush.msra.mxu0 0.0
    %1219 = vmatpush.msra.mxu0 0.0
    %1220 = vmatpush.msra.mxu0 0.0
    %1221 = vmatpush.msra.mxu0 0.0
    %1222 = vmatpush.msra.mxu0 0.0
    %1223 = vmatpush.msra.mxu0 0.0
    %1224 = vmatpush.msra.mxu0 0.0
    %1225 = vmatpush.msra.mxu0 0.0
    %1226 = vmatpush.msra.mxu0 0.0
    %1227 = vmatpush.msra.mxu0 0.0
    %1228 = vmatpush.msra.mxu0 0.0
    %1229 = vmatpush.msra.mxu0 %v1080
    %1230 = vmatpush.msra.mxu0 %v1078
    %1231 = vmatmul.f32.gmra.mxu0 %v1193
    %v1232 = vpop.f32.mrf.mxu0
    %v1233 = vadd.f32 0.0, %v1232
    %1234 = vdwg.mxu0
    %s1235 = scalar_lea.vmem %s6, 512
    %v1236 = vld [vmem:[%s1235] sm:$0xff]
    %v1237 = vld [vmem:[%s1235 + $0x8] sm:$0xff]
    %v1238 = vld [vmem:[%s1235 + $0x10] sm:$0xff]
    %v1239 = vld [vmem:[%s1235 + $0x18] sm:$0xff]
    %v1240 = vld [vmem:[%s1235 + $0x20] sm:$0xff]
    %v1241 = vld [vmem:[%s1235 + $0x28] sm:$0xff]
    %v1242 = vld [vmem:[%s1235 + $0x30] sm:$0xff]
    %v1243 = vld [vmem:[%s1235 + $0x38] sm:$0xff]
    %v1244 = vld [vmem:[%s1235 + $0x40] sm:$0xff]
    %v1245 = vld [vmem:[%s1235 + $0x48] sm:$0xff]
    %v1246 = vld [vmem:[%s1235 + $0x50] sm:$0xff]
    %v1247 = vld [vmem:[%s1235 + $0x58] sm:$0xff]
    %v1248 = vld [vmem:[%s1235 + $0x60] sm:$0xff]
    %v1249 = vld [vmem:[%s1235 + $0x68] sm:$0xff]
    %v1250 = vld [vmem:[%s1235 + $0x70] sm:$0xff]
    %v1251 = vld [vmem:[%s1235 + $0x78] sm:$0xff]
    %v1252 = vld [vmem:[%s1235 + $0x80] sm:$0xff]
    %v1253 = vld [vmem:[%s1235 + $0x88] sm:$0xff]
    %v1254 = vld [vmem:[%s1235 + $0x90] sm:$0xff]
    %v1255 = vld [vmem:[%s1235 + $0x98] sm:$0xff]
    %v1256 = vld [vmem:[%s1235 + $0xa0] sm:$0xff]
    %v1257 = vld [vmem:[%s1235 + $0xa8] sm:$0xff]
    %v1258 = vld [vmem:[%s1235 + $0xb0] sm:$0xff]
    %v1259 = vld [vmem:[%s1235 + $0xb8] sm:$0xff]
    %v1260 = vld [vmem:[%s1235 + $0xc0] sm:$0xff]
    %v1261 = vld [vmem:[%s1235 + $0xc8] sm:$0xff]
    %v1262 = vld [vmem:[%s1235 + $0xd0] sm:$0xff]
    %v1263 = vld [vmem:[%s1235 + $0xd8] sm:$0xff]
    %v1264 = vld [vmem:[%s1235 + $0xe0] sm:$0xff]
    %v1265 = vld [vmem:[%s1235 + $0xe8] sm:$0xff]
    %v1266 = vld [vmem:[%s1235 + $0xf0] sm:$0xff]
    %v1267 = vld [vmem:[%s1235 + $0xf8] sm:$0xff]
    %v1268 = vld [vmem:[%s1235 + $0x100] sm:$0xff]
    %v1269 = vld [vmem:[%s1235 + $0x108] sm:$0xff]
    %v1270 = vld [vmem:[%s1235 + $0x110] sm:$0xff]
    %v1271 = vld [vmem:[%s1235 + $0x118] sm:$0xff]
    %v1272 = vld [vmem:[%s1235 + $0x120] sm:$0xff]
    %v1273 = vld [vmem:[%s1235 + $0x128] sm:$0xff]
    %v1274 = vld [vmem:[%s1235 + $0x130] sm:$0xff]
    %v1275 = vld [vmem:[%s1235 + $0x138] sm:$0xff]
    %v1276 = vld [vmem:[%s1235 + $0x140] sm:$0xff]
    %v1277 = vld [vmem:[%s1235 + $0x148] sm:$0xff]
    %v1278 = vld [vmem:[%s1235 + $0x150] sm:$0xff]
    %v1279 = vld [vmem:[%s1235 + $0x158] sm:$0xff]
    %v1280 = vld [vmem:[%s1235 + $0x160] sm:$0xff]
    %v1281 = vld [vmem:[%s1235 + $0x168] sm:$0xff]
    %v1282 = vld [vmem:[%s1235 + $0x170] sm:$0xff]
    %v1283 = vld [vmem:[%s1235 + $0x178] sm:$0xff]
    %v1284 = vld [vmem:[%s1235 + $0x180] sm:$0xff]
    %v1285 = vld [vmem:[%s1235 + $0x188] sm:$0xff]
    %v1286 = vld [vmem:[%s1235 + $0x190] sm:$0xff]
    %v1287 = vld [vmem:[%s1235 + $0x198] sm:$0xff]
    %v1288 = vld [vmem:[%s1235 + $0x1a0] sm:$0xff]
    %v1289 = vld [vmem:[%s1235 + $0x1a8] sm:$0xff]
    %v1290 = vld [vmem:[%s1235 + $0x1b0] sm:$0xff]
    %v1291 = vld [vmem:[%s1235 + $0x1b8] sm:$0xff]
    %v1292 = vld [vmem:[%s1235 + $0x1c0] sm:$0xff]
    %v1293 = vld [vmem:[%s1235 + $0x1c8] sm:$0xff]
    %v1294 = vld [vmem:[%s1235 + $0x1d0] sm:$0xff]
    %v1295 = vld [vmem:[%s1235 + $0x1d8] sm:$0xff]
    %v1296 = vld [vmem:[%s1235 + $0x1e0] sm:$0xff]
    %v1297 = vld [vmem:[%s1235 + $0x1e8] sm:$0xff]
    %v1298 = vld [vmem:[%s1235 + $0x1f0] sm:$0xff]
    %v1299 = vld [vmem:[%s1235 + $0x1f8] sm:$0xff]
    %1300 = vmatpush.msra.mxu0 %v1266
    %1301 = vmatpush.msra.mxu0 %v1264
    %1302 = vmatpush.msra.mxu0 %v1262
    %1303 = vmatpush.msra.mxu0 %v1260
    %1304 = vmatpush.msra.mxu0 %v1258
    %1305 = vmatpush.msra.mxu0 %v1256
    %1306 = vmatpush.msra.mxu0 %v1254
    %1307 = vmatpush.msra.mxu0 %v1252
    %1308 = vmatpush.msra.mxu0 %v1250
    %1309 = vmatpush.msra.mxu0 %v1248
    %1310 = vmatpush.msra.mxu0 %v1246
    %1311 = vmatpush.msra.mxu0 %v1244
    %1312 = vmatpush.msra.mxu0 %v1242
    %1313 = vmatpush.msra.mxu0 %v1240
    %1314 = vmatpush.msra.mxu0 %v1238
    %1315 = vmatpush.msra.mxu0 %v1236
    %1316 = vmatmul.f32.gmra.mxu0 %v1213
    %v1317 = vpop.f32.mrf.mxu0
    %v1318 = vadd.f32 0.0, %v1317
    %1319 = vdwg.mxu0
    %1320 = vmatpush.msra.mxu0 %v1298
    %1321 = vmatpush.msra.mxu0 %v1296
    %1322 = vmatpush.msra.mxu0 %v1294
    %1323 = vmatpush.msra.mxu0 %v1292
    %1324 = vmatpush.msra.mxu0 %v1290
    %1325 = vmatpush.msra.mxu0 %v1288
    %1326 = vmatpush.msra.mxu0 %v1286
    %1327 = vmatpush.msra.mxu0 %v1284
    %1328 = vmatpush.msra.mxu0 %v1282
    %1329 = vmatpush.msra.mxu0 %v1280
    %1330 = vmatpush.msra.mxu0 %v1278
    %1331 = vmatpush.msra.mxu0 %v1276
    %1332 = vmatpush.msra.mxu0 %v1274
    %1333 = vmatpush.msra.mxu0 %v1272
    %1334 = vmatpush.msra.mxu0 %v1270
    %1335 = vmatpush.msra.mxu0 %v1268
    %1336 = vmatmul.f32.gmra.mxu0 %v1233
    %v1337 = vpop.f32.mrf.mxu0
    %v1338 = vadd.f32 %v1318, %v1337
    %1339 = vdwg.mxu0
    %1340 = vmatpush.msra.mxu0 %v1267
    %1341 = vmatpush.msra.mxu0 %v1265
    %1342 = vmatpush.msra.mxu0 %v1263
    %1343 = vmatpush.msra.mxu0 %v1261
    %1344 = vmatpush.msra.mxu0 %v1259
    %1345 = vmatpush.msra.mxu0 %v1257
    %1346 = vmatpush.msra.mxu0 %v1255
    %1347 = vmatpush.msra.mxu0 %v1253
    %1348 = vmatpush.msra.mxu0 %v1251
    %1349 = vmatpush.msra.mxu0 %v1249
    %1350 = vmatpush.msra.mxu0 %v1247
    %1351 = vmatpush.msra.mxu0 %v1245
    %1352 = vmatpush.msra.mxu0 %v1243
    %1353 = vmatpush.msra.mxu0 %v1241
    %1354 = vmatpush.msra.mxu0 %v1239
    %1355 = vmatpush.msra.mxu0 %v1237
    %1356 = vmatmul.f32.gmra.mxu0 %v1213
    %v1357 = vpop.f32.mrf.mxu0
    %v1358 = vadd.f32 0.0, %v1357
    %1359 = vdwg.mxu0
    %1360 = vmatpush.msra.mxu0 %v1299
    %1361 = vmatpush.msra.mxu0 %v1297
    %1362 = vmatpush.msra.mxu0 %v1295
    %1363 = vmatpush.msra.mxu0 %v1293
    %1364 = vmatpush.msra.mxu0 %v1291
    %1365 = vmatpush.msra.mxu0 %v1289
    %1366 = vmatpush.msra.mxu0 %v1287
    %1367 = vmatpush.msra.mxu0 %v1285
    %1368 = vmatpush.msra.mxu0 %v1283
    %1369 = vmatpush.msra.mxu0 %v1281
    %1370 = vmatpush.msra.mxu0 %v1279
    %1371 = vmatpush.msra.mxu0 %v1277
    %1372 = vmatpush.msra.mxu0 %v1275
    %1373 = vmatpush.msra.mxu0 %v1273
    %1374 = vmatpush.msra.mxu0 %v1271
    %1375 = vmatpush.msra.mxu0 %v1269
    %1376 = vmatmul.f32.gmra.mxu0 %v1233
    %v1377 = vpop.f32.mrf.mxu0
    %v1378 = vadd.f32 %v1358, %v1377
    %1379 = vdwg.mxu0
    %1380 = vmatpush.msra.mxu0 %v1156
    %1381 = vmatpush.msra.mxu0 %v1154
    %1382 = vmatpush.msra.mxu0 %v1152
    %1383 = vmatpush.msra.mxu0 %v1150
    %1384 = vmatpush.msra.mxu0 %v1148
    %1385 = vmatpush.msra.mxu0 %v1146
    %1386 = vmatpush.msra.mxu0 %v1144
    %1387 = vmatpush.msra.mxu0 %v1142
    %1388 = vmatpush.msra.mxu0 %v1140
    %1389 = vmatpush.msra.mxu0 %v1138
    %1390 = vmatpush.msra.mxu0 %v1136
    %1391 = vmatpush.msra.mxu0 %v1134
    %1392 = vmatpush.msra.mxu0 %v1132
    %1393 = vmatpush.msra.mxu0 %v1130
    %1394 = vmatpush.msra.mxu0 %v1128
    %1395 = vmatpush.msra.mxu0 %v1126
    %1396 = vmatmul.f32.gmra.mxu0 %v1104
    %v1397 = vpop.f32.mrf.mxu0
    %v1398 = vadd.f32 %v1338, %v1397
    %1399 = vdwg.mxu0
    %1400 = vmatpush.msra.mxu0 %v1188
    %1401 = vmatpush.msra.mxu0 %v1186
    %1402 = vmatpush.msra.mxu0 %v1184
    %1403 = vmatpush.msra.mxu0 %v1182
    %1404 = vmatpush.msra.mxu0 %v1180
    %1405 = vmatpush.msra.mxu0 %v1178
    %1406 = vmatpush.msra.mxu0 %v1176
    %1407 = vmatpush.msra.mxu0 %v1174
    %1408 = vmatpush.msra.mxu0 %v1172
    %1409 = vmatpush.msra.mxu0 %v1170
    %1410 = vmatpush.msra.mxu0 %v1168
    %1411 = vmatpush.msra.mxu0 %v1166
    %1412 = vmatpush.msra.mxu0 %v1164
    %1413 = vmatpush.msra.mxu0 %v1162
    %1414 = vmatpush.msra.mxu0 %v1160
    %1415 = vmatpush.msra.mxu0 %v1158
    %1416 = vmatmul.f32.gmra.mxu0 %v1124
    %v1417 = vpop.f32.mrf.mxu0
    %v1418 = vadd.f32 %v1398, %v1417
    %1419 = vdwg.mxu0
    %1420 = vmatpush.msra.mxu0 %v1157
    %1421 = vmatpush.msra.mxu0 %v1155
    %1422 = vmatpush.msra.mxu0 %v1153
    %1423 = vmatpush.msra.mxu0 %v1151
    %1424 = vmatpush.msra.mxu0 %v1149
    %1425 = vmatpush.msra.mxu0 %v1147
    %1426 = vmatpush.msra.mxu0 %v1145
    %1427 = vmatpush.msra.mxu0 %v1143
    %1428 = vmatpush.msra.mxu0 %v1141
    %1429 = vmatpush.msra.mxu0 %v1139
    %1430 = vmatpush.msra.mxu0 %v1137
    %1431 = vmatpush.msra.mxu0 %v1135
    %1432 = vmatpush.msra.mxu0 %v1133
    %1433 = vmatpush.msra.mxu0 %v1131
    %1434 = vmatpush.msra.mxu0 %v1129
    %1435 = vmatpush.msra.mxu0 %v1127
    %1436 = vmatmul.f32.gmra.mxu0 %v1104
    %v1437 = vpop.f32.mrf.mxu0
    %v1438 = vadd.f32 %v1378, %v1437
    %1439 = vdwg.mxu0
    %1440 = vmatpush.msra.mxu0 %v1189
    %1441 = vmatpush.msra.mxu0 %v1187
    %1442 = vmatpush.msra.mxu0 %v1185
    %1443 = vmatpush.msra.mxu0 %v1183
    %1444 = vmatpush.msra.mxu0 %v1181
    %1445 = vmatpush.msra.mxu0 %v1179
    %1446 = vmatpush.msra.mxu0 %v1177
    %1447 = vmatpush.msra.mxu0 %v1175
    %1448 = vmatpush.msra.mxu0 %v1173
    %1449 = vmatpush.msra.mxu0 %v1171
    %1450 = vmatpush.msra.mxu0 %v1169
    %1451 = vmatpush.msra.mxu0 %v1167
    %1452 = vmatpush.msra.mxu0 %v1165
    %1453 = vmatpush.msra.mxu0 %v1163
    %1454 = vmatpush.msra.mxu0 %v1161
    %1455 = vmatpush.msra.mxu0 %v1159
    %1456 = vmatmul.f32.gmra.mxu0 %v1124
    %v1457 = vpop.f32.mrf.mxu0
    %v1458 = vadd.f32 %v1438, %v1457
    %1459 = vdwg.mxu0
    %s1460 = scalar_lea.vmem %s5, 16
    %v1461 = vld [vmem:[%s1460] sm:$0x3f]
    %v1463 = vsel %vm1082, %v1461, 0
    %1465 = vmatpush.msra.mxu0 0.0
    %1466 = vmatpush.msra.mxu0 0.0
    %1467 = vmatpush.msra.mxu0 0.0
    %1468 = vmatpush.msra.mxu0 0.0
    %1469 = vmatpush.msra.mxu0 0.0
    %1470 = vmatpush.msra.mxu0 0.0
    %1471 = vmatpush.msra.mxu0 0.0
    %1472 = vmatpush.msra.mxu0 0.0
    %1473 = vmatpush.msra.mxu0 0.0
    %1474 = vmatpush.msra.mxu0 0.0
    %1475 = vmatpush.msra.mxu0 0.0
    %1476 = vmatpush.msra.mxu0 0.0
    %1477 = vmatpush.msra.mxu0 0.0
    %1478 = vmatpush.msra.mxu0 0.0
    %1479 = vmatpush.msra.mxu0 %v1079
    %1480 = vmatpush.msra.mxu0 %v1077
    %1481 = vmatmul.f32.gmra.mxu0 %v1463
    %v1482 = vpop.f32.mrf.mxu0
    %v1483 = vadd.f32 0.0, %v1482
    %1484 = vdwg.mxu0
    %1485 = vmatpush.msra.mxu0 0.0
    %1486 = vmatpush.msra.mxu0 0.0
    %1487 = vmatpush.msra.mxu0 0.0
    %1488 = vmatpush.msra.mxu0 0.0
    %1489 = vmatpush.msra.mxu0 0.0
    %1490 = vmatpush.msra.mxu0 0.0
    %1491 = vmatpush.msra.mxu0 0.0
    %1492 = vmatpush.msra.mxu0 0.0
    %1493 = vmatpush.msra.mxu0 0.0
    %1494 = vmatpush.msra.mxu0 0.0
    %1495 = vmatpush.msra.mxu0 0.0
    %1496 = vmatpush.msra.mxu0 0.0
    %1497 = vmatpush.msra.mxu0 0.0
    %1498 = vmatpush.msra.mxu0 0.0
    %1499 = vmatpush.msra.mxu0 %v1080
    %1500 = vmatpush.msra.mxu0 %v1078
    %1501 = vmatmul.f32.gmra.mxu0 %v1463
    %v1502 = vpop.f32.mrf.mxu0
    %v1503 = vadd.f32 0.0, %v1502
    %1504 = vdwg.mxu0
    %s1505 = scalar_lea.vmem %s6, 1024
    %v1506 = vld [vmem:[%s1505] sm:$0xff]
    %v1507 = vld [vmem:[%s1505 + $0x8] sm:$0xff]
    %v1508 = vld [vmem:[%s1505 + $0x10] sm:$0xff]
    %v1509 = vld [vmem:[%s1505 + $0x18] sm:$0xff]
    %v1510 = vld [vmem:[%s1505 + $0x20] sm:$0xff]
    %v1511 = vld [vmem:[%s1505 + $0x28] sm:$0xff]
    %v1512 = vld [vmem:[%s1505 + $0x30] sm:$0xff]
    %v1513 = vld [vmem:[%s1505 + $0x38] sm:$0xff]
    %v1514 = vld [vmem:[%s1505 + $0x40] sm:$0xff]
    %v1515 = vld [vmem:[%s1505 + $0x48] sm:$0xff]
    %v1516 = vld [vmem:[%s1505 + $0x50] sm:$0xff]
    %v1517 = vld [vmem:[%s1505 + $0x58] sm:$0xff]
    %v1518 = vld [vmem:[%s1505 + $0x60] sm:$0xff]
    %v1519 = vld [vmem:[%s1505 + $0x68] sm:$0xff]
    %v1520 = vld [vmem:[%s1505 + $0x70] sm:$0xff]
    %v1521 = vld [vmem:[%s1505 + $0x78] sm:$0xff]
    %v1522 = vld [vmem:[%s1505 + $0x80] sm:$0xff]
    %v1523 = vld [vmem:[%s1505 + $0x88] sm:$0xff]
    %v1524 = vld [vmem:[%s1505 + $0x90] sm:$0xff]
    %v1525 = vld [vmem:[%s1505 + $0x98] sm:$0xff]
    %v1526 = vld [vmem:[%s1505 + $0xa0] sm:$0xff]
    %v1527 = vld [vmem:[%s1505 + $0xa8] sm:$0xff]
    %v1528 = vld [vmem:[%s1505 + $0xb0] sm:$0xff]
    %v1529 = vld [vmem:[%s1505 + $0xb8] sm:$0xff]
    %v1530 = vld [vmem:[%s1505 + $0xc0] sm:$0xff]
    %v1531 = vld [vmem:[%s1505 + $0xc8] sm:$0xff]
    %v1532 = vld [vmem:[%s1505 + $0xd0] sm:$0xff]
    %v1533 = vld [vmem:[%s1505 + $0xd8] sm:$0xff]
    %v1534 = vld [vmem:[%s1505 + $0xe0] sm:$0xff]
    %v1535 = vld [vmem:[%s1505 + $0xe8] sm:$0xff]
    %v1536 = vld [vmem:[%s1505 + $0xf0] sm:$0xff]
    %v1537 = vld [vmem:[%s1505 + $0xf8] sm:$0xff]
    %v1538 = vld [vmem:[%s1505 + $0x100] sm:$0xff]
    %v1539 = vld [vmem:[%s1505 + $0x108] sm:$0xff]
    %v1540 = vld [vmem:[%s1505 + $0x110] sm:$0xff]
    %v1541 = vld [vmem:[%s1505 + $0x118] sm:$0xff]
    %v1542 = vld [vmem:[%s1505 + $0x120] sm:$0xff]
    %v1543 = vld [vmem:[%s1505 + $0x128] sm:$0xff]
    %v1544 = vld [vmem:[%s1505 + $0x130] sm:$0xff]
    %v1545 = vld [vmem:[%s1505 + $0x138] sm:$0xff]
    %v1546 = vld [vmem:[%s1505 + $0x140] sm:$0xff]
    %v1547 = vld [vmem:[%s1505 + $0x148] sm:$0xff]
    %v1548 = vld [vmem:[%s1505 + $0x150] sm:$0xff]
    %v1549 = vld [vmem:[%s1505 + $0x158] sm:$0xff]
    %v1550 = vld [vmem:[%s1505 + $0x160] sm:$0xff]
    %v1551 = vld [vmem:[%s1505 + $0x168] sm:$0xff]
    %v1552 = vld [vmem:[%s1505 + $0x170] sm:$0xff]
    %v1553 = vld [vmem:[%s1505 + $0x178] sm:$0xff]
    %v1554 = vld [vmem:[%s1505 + $0x180] sm:$0xff]
    %v1555 = vld [vmem:[%s1505 + $0x188] sm:$0xff]
    %v1556 = vld [vmem:[%s1505 + $0x190] sm:$0xff]
    %v1557 = vld [vmem:[%s1505 + $0x198] sm:$0xff]
    %v1558 = vld [vmem:[%s1505 + $0x1a0] sm:$0xff]
    %v1559 = vld [vmem:[%s1505 + $0x1a8] sm:$0xff]
    %v1560 = vld [vmem:[%s1505 + $0x1b0] sm:$0xff]
    %v1561 = vld [vmem:[%s1505 + $0x1b8] sm:$0xff]
    %v1562 = vld [vmem:[%s1505 + $0x1c0] sm:$0xff]
    %v1563 = vld [vmem:[%s1505 + $0x1c8] sm:$0xff]
    %v1564 = vld [vmem:[%s1505 + $0x1d0] sm:$0xff]
    %v1565 = vld [vmem:[%s1505 + $0x1d8] sm:$0xff]
    %v1566 = vld [vmem:[%s1505 + $0x1e0] sm:$0xff]
    %v1567 = vld [vmem:[%s1505 + $0x1e8] sm:$0xff]
    %v1568 = vld [vmem:[%s1505 + $0x1f0] sm:$0xff]
    %v1569 = vld [vmem:[%s1505 + $0x1f8] sm:$0xff]
    %1570 = vmatpush.msra.mxu0 %v1536
    %1571 = vmatpush.msra.mxu0 %v1534
    %1572 = vmatpush.msra.mxu0 %v1532
    %1573 = vmatpush.msra.mxu0 %v1530
    %1574 = vmatpush.msra.mxu0 %v1528
    %1575 = vmatpush.msra.mxu0 %v1526
    %1576 = vmatpush.msra.mxu0 %v1524
    %1577 = vmatpush.msra.mxu0 %v1522
    %1578 = vmatpush.msra.mxu0 %v1520
    %1579 = vmatpush.msra.mxu0 %v1518
    %1580 = vmatpush.msra.mxu0 %v1516
    %1581 = vmatpush.msra.mxu0 %v1514
    %1582 = vmatpush.msra.mxu0 %v1512
    %1583 = vmatpush.msra.mxu0 %v1510
    %1584 = vmatpush.msra.mxu0 %v1508
    %1585 = vmatpush.msra.mxu0 %v1506
    %1586 = vmatmul.f32.gmra.mxu0 %v1483
    %v1587 = vpop.f32.mrf.mxu0
    %v1588 = vadd.f32 0.0, %v1587
    %1589 = vdwg.mxu0
    %1590 = vmatpush.msra.mxu0 %v1568
    %1591 = vmatpush.msra.mxu0 %v1566
    %1592 = vmatpush.msra.mxu0 %v1564
    %1593 = vmatpush.msra.mxu0 %v1562
    %1594 = vmatpush.msra.mxu0 %v1560
    %1595 = vmatpush.msra.mxu0 %v1558
    %1596 = vmatpush.msra.mxu0 %v1556
    %1597 = vmatpush.msra.mxu0 %v1554
    %1598 = vmatpush.msra.mxu0 %v1552
    %1599 = vmatpush.msra.mxu0 %v1550
    %1600 = vmatpush.msra.mxu0 %v1548
    %1601 = vmatpush.msra.mxu0 %v1546
    %1602 = vmatpush.msra.mxu0 %v1544
    %1603 = vmatpush.msra.mxu0 %v1542
    %1604 = vmatpush.msra.mxu0 %v1540
    %1605 = vmatpush.msra.mxu0 %v1538
    %1606 = vmatmul.f32.gmra.mxu0 %v1503
    %v1607 = vpop.f32.mrf.mxu0
    %v1608 = vadd.f32 %v1588, %v1607
    %1609 = vdwg.mxu0
    %1610 = vmatpush.msra.mxu0 %v1537
    %1611 = vmatpush.msra.mxu0 %v1535
    %1612 = vmatpush.msra.mxu0 %v1533
    %1613 = vmatpush.msra.mxu0 %v1531
    %1614 = vmatpush.msra.mxu0 %v1529
    %1615 = vmatpush.msra.mxu0 %v1527
    %1616 = vmatpush.msra.mxu0 %v1525
    %1617 = vmatpush.msra.mxu0 %v1523
    %1618 = vmatpush.msra.mxu0 %v1521
    %1619 = vmatpush.msra.mxu0 %v1519
    %1620 = vmatpush.msra.mxu0 %v1517
    %1621 = vmatpush.msra.mxu0 %v1515
    %1622 = vmatpush.msra.mxu0 %v1513
    %1623 = vmatpush.msra.mxu0 %v1511
    %1624 = vmatpush.msra.mxu0 %v1509
    %1625 = vmatpush.msra.mxu0 %v1507
    %1626 = vmatmul.f32.gmra.mxu0 %v1483
    %v1627 = vpop.f32.mrf.mxu0
    %v1628 = vadd.f32 0.0, %v1627
    %1629 = vdwg.mxu0
    %1630 = vmatpush.msra.mxu0 %v1569
    %1631 = vmatpush.msra.mxu0 %v1567
    %1632 = vmatpush.msra.mxu0 %v1565
    %1633 = vmatpush.msra.mxu0 %v1563
    %1634 = vmatpush.msra.mxu0 %v1561
    %1635 = vmatpush.msra.mxu0 %v1559
    %1636 = vmatpush.msra.mxu0 %v1557
    %1637 = vmatpush.msra.mxu0 %v1555
    %1638 = vmatpush.msra.mxu0 %v1553
    %1639 = vmatpush.msra.mxu0 %v1551
    %1640 = vmatpush.msra.mxu0 %v1549
    %1641 = vmatpush.msra.mxu0 %v1547
    %1642 = vmatpush.msra.mxu0 %v1545
    %1643 = vmatpush.msra.mxu0 %v1543
    %1644 = vmatpush.msra.mxu0 %v1541
    %1645 = vmatpush.msra.mxu0 %v1539
    %1646 = vmatmul.f32.gmra.mxu0 %v1503
    %v1647 = vpop.f32.mrf.mxu0
    %v1648 = vadd.f32 %v1628, %v1647
    %1649 = vdwg.mxu0
    %v1650 = vadd.f32 %v1418, %v1608
    %v1651 = vadd.f32 %v1458, %v1648
    %vm1652 = vcmask 1045504
    %v1653 = vsel %vm1652, %v1650, 0.0
    %v1654 = vrot.slane %v1653, 4
    %v1655 = vadd.f32 %v1653, %v1654
    %v1656 = vrot.slane %v1655, 2
    %v1657 = vadd.f32 %v1655, %v1656
    %v1658 = vrot.slane %v1657, 1
    %v1659 = vadd.f32 %v1657, %v1658
    %vm1660 = vcmask 521216
    %v1661 = vsel %vm1660, %v1651, 0.0
    %v1662 = vrot.slane %v1661, 4
    %v1663 = vadd.f32 %v1661, %v1662
    %v1664 = vrot.slane %v1663, 2
    %v1665 = vadd.f32 %v1663, %v1664
    %v1666 = vrot.slane %v1665, 1
    %v1667 = vadd.f32 %v1665, %v1666
    %v1668 = vmul.f32 %v1650, %v1650
    %v1669 = vmul.f32 %v1651, %v1651
    %v1670 = vsel %vm1652, %v1668, 0.0
    %v1671 = vrot.slane %v1670, 4
    %v1672 = vadd.f32 %v1670, %v1671
    %v1673 = vrot.slane %v1672, 2
    %v1674 = vadd.f32 %v1672, %v1673
    %v1675 = vrot.slane %v1674, 1
    %v1676 = vadd.f32 %v1674, %v1675
    %v1677 = vsel %vm1660, %v1669, 0.0
    %v1678 = vrot.slane %v1677, 4
    %v1679 = vadd.f32 %v1677, %v1678
    %v1680 = vrot.slane %v1679, 2
    %v1681 = vadd.f32 %v1679, %v1680
    %v1682 = vrot.slane %v1681, 1
    %v1683 = vadd.f32 %v1681, %v1682
    %v1684 = vadd.f32 %v1659, 0.0
    %v1685 = vadd.f32 %v1676, 0.0
    %1687 = vrot.lane.b32.xlu0 %v1659, 64
    %v1688 = vpop.permute.xlu0 %1687
    %v1690 = vadd.f32 %v1684, %v1688
    %1692 = vrot.lane.b32.xlu0 %v1676, 64
    %v1693 = vpop.permute.xlu0 %1692
    %v1695 = vadd.f32 %v1685, %v1693
    %v1696 = vadd.f32 %v1690, %v1667
    %v1697 = vadd.f32 %v1695, %v1683
    %v1698 = vrcp.pop 18.0
    %v1699 = vmul.f32 18.0, %v1698
    %v1700 = vsub.f32 1.0, %v1699
    %v1701 = vmul.f32 %v1698, %v1700
    %v1702 = vadd.f32 %v1698, %v1701
    %vm1703 = vweird.f32 %v1698
    %v1704 = vsel %vm1703, %v1698, %v1702
    %v1705 = vmul.f32 %v1696, %v1704
    %v1706 = vmul.f32 %v1697, %v1704
    %v1707 = vmul.f32 %v1705, %v1705
    %v1708 = vsub.f32 %v1706, %v1707
    %v1709 = vmax.f32 %v1708, 0.0
    %v1710 = vld [vmem:[%s7] sm:$0x1]
    %v1711 = vadd.f32 %v1709, 1e-05
    %v1712 = vrsqrt.pop %v1711
    %v1713 = vmul.f32 %v1712, %v1711
    %v1714 = vmul.f32 %v1713, %v1712
    %v1715 = vmul.f32 0.5, %v1714
    %v1716 = vsub.f32 1.5, %v1715
    %v1717 = vmul.f32 %v1712, %v1716
    %vm1718 = vweird.f32 %v1711
    %vm1719 = vweird.f32 %v1712
    %vm1720 = vmor %vm1718, %vm1719
    %v1721 = vsel %vm1720, %v1712, %v1717
    %v1722 = vmul.f32 %v1710, %v1721
    %v1723 = vld [vmem:[%s8] sm:$0x1]
    %v1724 = vmul.f32 %v1705, %v1722
    %v1725 = vsub.f32 %v1723, %v1724
    %v1727 = vperm.slane %v1722, 0
    %v1729 = vmul.f32 %v1650, %v1727
    %v1731 = vperm.slane %v1725, 0
    %v1733 = vadd.f32 %v1729, %v1731
    %v1734 = vmax.f32 %v1733, 0.0
    %v1736 = vrot.slane %v1734, 7
    %1737 = vrot.lane.b32.xlu0 %v1736, 64
    %v1738 = vpop.permute.xlu0 %1737
    %vm1740 = vcmask 1043969
    %1741 = vst.msk [vmem:[#allocation3] sm:$0xe] %vm1740, %v1738
    %1742 = vrot.lane.b32.xlu0 %v1727, 64
    %v1743 = vpop.permute.xlu0 %1742
    %v1745 = vmul.f32 %v1650, %v1743
    %1746 = vrot.lane.b32.xlu0 %v1731, 64
    %v1747 = vpop.permute.xlu0 %1746
    %v1749 = vadd.f32 %v1745, %v1747
    %v1750 = vmax.f32 %v1749, 0.0
    %v1752 = vrot.slane %v1750, 7
    %1753 = vrot.lane.b32.xlu0 %v1752, 64
    %v1754 = vpop.permute.xlu0 %1753
    %vm1756 = vcmask 519169
    %1757 = vst.msk [vmem:[#allocation3 + $0x8] sm:$0xe] %vm1756, %v1754
    %v1758 = vmul.f32 %v1651, %v1727
    %v1759 = vadd.f32 %v1758, %v1731
    %v1760 = vmax.f32 %v1759, 0.0
    %v1762 = vrot.slane %v1760, 7
    %1763 = vrot.lane.b32.xlu0 %v1762, 64
    %v1764 = vpop.permute.xlu0 %1763
    %1766 = vst.msk [vmem:[#allocation3 + $0x8] sm:$0xe] %vm1740, %v1764
    %v1767 = vrot.slane %v1734, 5
    %1768 = vrot.lane.b32.xlu0 %v1767, 64
    %v1769 = vpop.permute.xlu0 %1768
    %vm1771 = vcmask 1048070
    %1772 = vst.msk [vmem:[#allocation3] sm:$0xc0] %vm1771, %v1769
    %vm1773 = vcmask 1040896
    %1774 = vst.msk [vmem:[#allocation3 + $0x18] sm:$0x1] %vm1773, %v1769
    %v1775 = vrot.slane %v1750, 5
    %1776 = vrot.lane.b32.xlu0 %v1775, 64
    %v1777 = vpop.permute.xlu0 %1776
    %vm1779 = vcmask 523270
    %1780 = vst.msk [vmem:[#allocation3 + $0x8] sm:$0xc0] %vm1779, %v1777
    %vm1781 = vcmask 516096
    %1782 = vst.msk [vmem:[#allocation3 + $0x20] sm:$0x1] %vm1781, %v1777
    %v1783 = vrot.slane %v1760, 5
    %1784 = vrot.lane.b32.xlu0 %v1783, 64
    %v1785 = vpop.permute.xlu0 %1784
    %1787 = vst.msk [vmem:[#allocation3 + $0x8] sm:$0xc0] %vm1771, %v1785
    %1788 = vst.msk [vmem:[#allocation3 + $0x20] sm:$0x1] %vm1773, %v1785
    %v1789 = vld [vmem:[#allocation3] sm:$0xff]
    %v1790 = vld [vmem:[#allocation3 + $0x8] sm:$0xff]
    %v1791 = vld [vmem:[#allocation3 + $0x10] sm:$0xff]
    %v1792 = vld [vmem:[#allocation3 + $0x18] sm:$0x3]
    %v1793 = vld [vmem:[#allocation3 + $0x20] sm:$0x3]
    %v1794 = vld [vmem:[#allocation3 + $0x28] sm:$0x3]
    %v1795 = vld [vmem:[%s9] sm:$0xf]
    %vm1796 = vcmask 80896
    %v1798 = vsel %vm1796, %v1795, 0
    %vm1800 = vcmask 1041408
    %v1802 = vsel %vm1800, %v1792, 0
    %v1805 = vsel %vm1800, %v1793, 0
    %v1808 = vsel %vm1800, %v1794, 0
    %1810 = vmatpush.msra.mxu0 0.0
    %1811 = vmatpush.msra.mxu0 0.0
    %1812 = vmatpush.msra.mxu0 0.0
    %1813 = vmatpush.msra.mxu0 0.0
    %1814 = vmatpush.msra.mxu0 0.0
    %1815 = vmatpush.msra.mxu0 0.0
    %1816 = vmatpush.msra.mxu0 0.0
    %1817 = vmatpush.msra.mxu0 0.0
    %1818 = vmatpush.msra.mxu0 0.0
    %1819 = vmatpush.msra.mxu0 0.0
    %1820 = vmatpush.msra.mxu0 0.0
    %1821 = vmatpush.msra.mxu0 0.0
    %1822 = vmatpush.msra.mxu0 0.0
    %1823 = vmatpush.msra.mxu0 0.0
    %1824 = vmatpush.msra.mxu0 %v1802
    %1825 = vmatpush.msra.mxu0 %v1789
    %1826 = vmatmul.f32.gmra.mxu0 %v1798
    %v1827 = vpop.f32.mrf.mxu0
    %v1828 = vadd.f32 0.0, %v1827
    %1829 = vdwg.mxu0
    %1830 = vmatpush.msra.mxu0 0.0
    %1831 = vmatpush.msra.mxu0 0.0
    %1832 = vmatpush.msra.mxu0 0.0
    %1833 = vmatpush.msra.mxu0 0.0
    %1834 = vmatpush.msra.mxu0 0.0
    %1835 = vmatpush.msra.mxu0 0.0
    %1836 = vmatpush.msra.mxu0 0.0
    %1837 = vmatpush.msra.mxu0 0.0
    %1838 = vmatpush.msra.mxu0 0.0
    %1839 = vmatpush.msra.mxu0 0.0
    %1840 = vmatpush.msra.mxu0 0.0
    %1841 = vmatpush.msra.mxu0 0.0
    %1842 = vmatpush.msra.mxu0 0.0
    %1843 = vmatpush.msra.mxu0 0.0
    %1844 = vmatpush.msra.mxu0 %v1805
    %1845 = vmatpush.msra.mxu0 %v1790
    %1846 = vmatmul.f32.gmra.mxu0 %v1798
    %v1847 = vpop.f32.mrf.mxu0
    %v1848 = vadd.f32 0.0, %v1847
    %1849 = vdwg.mxu0
    %1850 = vmatpush.msra.mxu0 0.0
    %1851 = vmatpush.msra.mxu0 0.0
    %1852 = vmatpush.msra.mxu0 0.0
    %1853 = vmatpush.msra.mxu0 0.0
    %1854 = vmatpush.msra.mxu0 0.0
    %1855 = vmatpush.msra.mxu0 0.0
    %1856 = vmatpush.msra.mxu0 0.0
    %1857 = vmatpush.msra.mxu0 0.0
    %1858 = vmatpush.msra.mxu0 0.0
    %1859 = vmatpush.msra.mxu0 0.0
    %1860 = vmatpush.msra.mxu0 0.0
    %1861 = vmatpush.msra.mxu0 0.0
    %1862 = vmatpush.msra.mxu0 0.0
    %1863 = vmatpush.msra.mxu0 0.0
    %1864 = vmatpush.msra.mxu0 %v1808
    %1865 = vmatpush.msra.mxu0 %v1791
    %1866 = vmatmul.f32.gmra.mxu0 %v1798
    %v1867 = vpop.f32.mrf.mxu0
    %v1868 = vadd.f32 0.0, %v1867
    %1869 = vdwg.mxu0
    %v1870 = vld [vmem:[%s10] sm:$0xff]
    %v1871 = vld [vmem:[%s10 + $0x8] sm:$0xff]
    %v1872 = vld [vmem:[%s10 + $0x10] sm:$0xff]
    %v1873 = vld [vmem:[%s10 + $0x18] sm:$0xff]
    %v1874 = vld [vmem:[%s10 + $0x20] sm:$0xff]
    %v1875 = vld [vmem:[%s10 + $0x28] sm:$0xff]
    %v1876 = vld [vmem:[%s10 + $0x30] sm:$0xff]
    %v1877 = vld [vmem:[%s10 + $0x38] sm:$0xff]
    %v1878 = vld [vmem:[%s10 + $0x40] sm:$0xff]
    %v1879 = vld [vmem:[%s10 + $0x48] sm:$0xff]
    %v1880 = vld [vmem:[%s10 + $0x50] sm:$0xff]
    %v1881 = vld [vmem:[%s10 + $0x58] sm:$0xff]
    %v1882 = vld [vmem:[%s10 + $0x60] sm:$0xff]
    %v1883 = vld [vmem:[%s10 + $0x68] sm:$0xff]
    %v1884 = vld [vmem:[%s10 + $0x70] sm:$0xff]
    %v1885 = vld [vmem:[%s10 + $0x78] sm:$0xff]
    %v1886 = vld [vmem:[%s10 + $0x80] sm:$0xff]
    %v1887 = vld [vmem:[%s10 + $0x88] sm:$0xff]
    %v1888 = vld [vmem:[%s10 + $0x90] sm:$0xff]
    %v1889 = vld [vmem:[%s10 + $0x98] sm:$0xff]
    %v1890 = vld [vmem:[%s10 + $0xa0] sm:$0xff]
    %v1891 = vld [vmem:[%s10 + $0xa8] sm:$0xff]
    %v1892 = vld [vmem:[%s10 + $0xb0] sm:$0xff]
    %v1893 = vld [vmem:[%s10 + $0xb8] sm:$0xff]
    %v1894 = vld [vmem:[%s10 + $0xc0] sm:$0xff]
    %v1895 = vld [vmem:[%s10 + $0xc8] sm:$0xff]
    %v1896 = vld [vmem:[%s10 + $0xd0] sm:$0xff]
    %v1897 = vld [vmem:[%s10 + $0xd8] sm:$0xff]
    %v1898 = vld [vmem:[%s10 + $0xe0] sm:$0xff]
    %v1899 = vld [vmem:[%s10 + $0xe8] sm:$0xff]
    %v1900 = vld [vmem:[%s10 + $0xf0] sm:$0xff]
    %v1901 = vld [vmem:[%s10 + $0xf8] sm:$0xff]
    %v1902 = vld [vmem:[%s10 + $0x100] sm:$0xff]
    %v1903 = vld [vmem:[%s10 + $0x108] sm:$0xff]
    %v1904 = vld [vmem:[%s10 + $0x110] sm:$0xff]
    %v1905 = vld [vmem:[%s10 + $0x118] sm:$0xff]
    %v1906 = vld [vmem:[%s10 + $0x120] sm:$0xff]
    %v1907 = vld [vmem:[%s10 + $0x128] sm:$0xff]
    %v1908 = vld [vmem:[%s10 + $0x130] sm:$0xff]
    %v1909 = vld [vmem:[%s10 + $0x138] sm:$0xff]
    %s1910 = scalar_lea.vmem %s9, 4
    %v1911 = vld [vmem:[%s1910] sm:$0xf]
    %v1913 = vsel %vm1796, %v1911, 0
    %1915 = vmatpush.msra.mxu0 0.0
    %1916 = vmatpush.msra.mxu0 0.0
    %1917 = vmatpush.msra.mxu0 0.0
    %1918 = vmatpush.msra.mxu0 0.0
    %1919 = vmatpush.msra.mxu0 0.0
    %1920 = vmatpush.msra.mxu0 0.0
    %1921 = vmatpush.msra.mxu0 0.0
    %1922 = vmatpush.msra.mxu0 0.0
    %1923 = vmatpush.msra.mxu0 0.0
    %1924 = vmatpush.msra.mxu0 0.0
    %1925 = vmatpush.msra.mxu0 0.0
    %1926 = vmatpush.msra.mxu0 0.0
    %1927 = vmatpush.msra.mxu0 0.0
    %1928 = vmatpush.msra.mxu0 0.0
    %1929 = vmatpush.msra.mxu0 %v1802
    %1930 = vmatpush.msra.mxu0 %v1789
    %1931 = vmatmul.f32.gmra.mxu0 %v1913
    %v1932 = vpop.f32.mrf.mxu0
    %v1933 = vadd.f32 0.0, %v1932
    %1934 = vdwg.mxu0
    %1935 = vmatpush.msra.mxu0 0.0
    %1936 = vmatpush.msra.mxu0 0.0
    %1937 = vmatpush.msra.mxu0 0.0
    %1938 = vmatpush.msra.mxu0 0.0
    %1939 = vmatpush.msra.mxu0 0.0
    %1940 = vmatpush.msra.mxu0 0.0
    %1941 = vmatpush.msra.mxu0 0.0
    %1942 = vmatpush.msra.mxu0 0.0
    %1943 = vmatpush.msra.mxu0 0.0
    %1944 = vmatpush.msra.mxu0 0.0
    %1945 = vmatpush.msra.mxu0 0.0
    %1946 = vmatpush.msra.mxu0 0.0
    %1947 = vmatpush.msra.mxu0 0.0
    %1948 = vmatpush.msra.mxu0 0.0
    %1949 = vmatpush.msra.mxu0 %v1805
    %1950 = vmatpush.msra.mxu0 %v1790
    %1951 = vmatmul.f32.gmra.mxu0 %v1913
    %v1952 = vpop.f32.mrf.mxu0
    %v1953 = vadd.f32 0.0, %v1952
    %1954 = vdwg.mxu0
    %1955 = vmatpush.msra.mxu0 0.0
    %1956 = vmatpush.msra.mxu0 0.0
    %1957 = vmatpush.msra.mxu0 0.0
    %1958 = vmatpush.msra.mxu0 0.0
    %1959 = vmatpush.msra.mxu0 0.0
    %1960 = vmatpush.msra.mxu0 0.0
    %1961 = vmatpush.msra.mxu0 0.0
    %1962 = vmatpush.msra.mxu0 0.0
    %1963 = vmatpush.msra.mxu0 0.0
    %1964 = vmatpush.msra.mxu0 0.0
    %1965 = vmatpush.msra.mxu0 0.0
    %1966 = vmatpush.msra.mxu0 0.0
    %1967 = vmatpush.msra.mxu0 0.0
    %1968 = vmatpush.msra.mxu0 0.0
    %1969 = vmatpush.msra.mxu0 %v1808
    %1970 = vmatpush.msra.mxu0 %v1791
    %1971 = vmatmul.f32.gmra.mxu0 %v1913
    %v1972 = vpop.f32.mrf.mxu0
    %v1973 = vadd.f32 0.0, %v1972
    %1974 = vdwg.mxu0
    %s1975 = scalar_lea.vmem %s10, 320
    %v1976 = vld [vmem:[%s1975] sm:$0xff]
    %v1977 = vld [vmem:[%s1975 + $0x8] sm:$0xff]
    %v1978 = vld [vmem:[%s1975 + $0x10] sm:$0xff]
    %v1979 = vld [vmem:[%s1975 + $0x18] sm:$0xff]
    %v1980 = vld [vmem:[%s1975 + $0x20] sm:$0xff]
    %v1981 = vld [vmem:[%s1975 + $0x28] sm:$0xff]
    %v1982 = vld [vmem:[%s1975 + $0x30] sm:$0xff]
    %v1983 = vld [vmem:[%s1975 + $0x38] sm:$0xff]
    %v1984 = vld [vmem:[%s1975 + $0x40] sm:$0xff]
    %v1985 = vld [vmem:[%s1975 + $0x48] sm:$0xff]
    %v1986 = vld [vmem:[%s1975 + $0x50] sm:$0xff]
    %v1987 = vld [vmem:[%s1975 + $0x58] sm:$0xff]
    %v1988 = vld [vmem:[%s1975 + $0x60] sm:$0xff]
    %v1989 = vld [vmem:[%s1975 + $0x68] sm:$0xff]
    %v1990 = vld [vmem:[%s1975 + $0x70] sm:$0xff]
    %v1991 = vld [vmem:[%s1975 + $0x78] sm:$0xff]
    %v1992 = vld [vmem:[%s1975 + $0x80] sm:$0xff]
    %v1993 = vld [vmem:[%s1975 + $0x88] sm:$0xff]
    %v1994 = vld [vmem:[%s1975 + $0x90] sm:$0xff]
    %v1995 = vld [vmem:[%s1975 + $0x98] sm:$0xff]
    %v1996 = vld [vmem:[%s1975 + $0xa0] sm:$0xff]
    %v1997 = vld [vmem:[%s1975 + $0xa8] sm:$0xff]
    %v1998 = vld [vmem:[%s1975 + $0xb0] sm:$0xff]
    %v1999 = vld [vmem:[%s1975 + $0xb8] sm:$0xff]
    %v2000 = vld [vmem:[%s1975 + $0xc0] sm:$0xff]
    %v2001 = vld [vmem:[%s1975 + $0xc8] sm:$0xff]
    %v2002 = vld [vmem:[%s1975 + $0xd0] sm:$0xff]
    %v2003 = vld [vmem:[%s1975 + $0xd8] sm:$0xff]
    %v2004 = vld [vmem:[%s1975 + $0xe0] sm:$0xff]
    %v2005 = vld [vmem:[%s1975 + $0xe8] sm:$0xff]
    %v2006 = vld [vmem:[%s1975 + $0xf0] sm:$0xff]
    %v2007 = vld [vmem:[%s1975 + $0xf8] sm:$0xff]
    %v2008 = vld [vmem:[%s1975 + $0x100] sm:$0xff]
    %v2009 = vld [vmem:[%s1975 + $0x108] sm:$0xff]
    %v2010 = vld [vmem:[%s1975 + $0x110] sm:$0xff]
    %v2011 = vld [vmem:[%s1975 + $0x118] sm:$0xff]
    %v2012 = vld [vmem:[%s1975 + $0x120] sm:$0xff]
    %v2013 = vld [vmem:[%s1975 + $0x128] sm:$0xff]
    %v2014 = vld [vmem:[%s1975 + $0x130] sm:$0xff]
    %v2015 = vld [vmem:[%s1975 + $0x138] sm:$0xff]
    %v2017 = vsel %vm63, %v1973, 0
    %2019 = vmatpush.msra.mxu0 %v1991
    %2020 = vmatpush.msra.mxu0 %v1990
    %2021 = vmatpush.msra.mxu0 %v1989
    %2022 = vmatpush.msra.mxu0 %v1988
    %2023 = vmatpush.msra.mxu0 %v1987
    %2024 = vmatpush.msra.mxu0 %v1986
    %2025 = vmatpush.msra.mxu0 %v1985
    %2026 = vmatpush.msra.mxu0 %v1984
    %2027 = vmatpush.msra.mxu0 %v1983
    %2028 = vmatpush.msra.mxu0 %v1982
    %2029 = vmatpush.msra.mxu0 %v1981
    %2030 = vmatpush.msra.mxu0 %v1980
    %2031 = vmatpush.msra.mxu0 %v1979
    %2032 = vmatpush.msra.mxu0 %v1978
    %2033 = vmatpush.msra.mxu0 %v1977
    %2034 = vmatpush.msra.mxu0 %v1976
    %2035 = vmatmul.f32.gmra.mxu0 %v1933
    %v2036 = vpop.f32.mrf.mxu0
    %v2037 = vadd.f32 0.0, %v2036
    %2038 = vdwg.mxu0
    %2039 = vmatpush.msra.mxu0 %v2007
    %2040 = vmatpush.msra.mxu0 %v2006
    %2041 = vmatpush.msra.mxu0 %v2005
    %2042 = vmatpush.msra.mxu0 %v2004
    %2043 = vmatpush.msra.mxu0 %v2003
    %2044 = vmatpush.msra.mxu0 %v2002
    %2045 = vmatpush.msra.mxu0 %v2001
    %2046 = vmatpush.msra.mxu0 %v2000
    %2047 = vmatpush.msra.mxu0 %v1999
    %2048 = vmatpush.msra.mxu0 %v1998
    %2049 = vmatpush.msra.mxu0 %v1997
    %2050 = vmatpush.msra.mxu0 %v1996
    %2051 = vmatpush.msra.mxu0 %v1995
    %2052 = vmatpush.msra.mxu0 %v1994
    %2053 = vmatpush.msra.mxu0 %v1993
    %2054 = vmatpush.msra.mxu0 %v1992
    %2055 = vmatmul.f32.gmra.mxu0 %v1953
    %v2056 = vpop.f32.mrf.mxu0
    %v2057 = vadd.f32 %v2037, %v2056
    %2058 = vdwg.mxu0
    %2059 = vmatpush.msra.mxu0 0.0
    %2060 = vmatpush.msra.mxu0 0.0
    %2061 = vmatpush.msra.mxu0 0.0
    %2062 = vmatpush.msra.mxu0 0.0
    %2063 = vmatpush.msra.mxu0 0.0
    %2064 = vmatpush.msra.mxu0 0.0
    %2065 = vmatpush.msra.mxu0 0.0
    %2066 = vmatpush.msra.mxu0 0.0
    %2067 = vmatpush.msra.mxu0 %v2015
    %2068 = vmatpush.msra.mxu0 %v2014
    %2069 = vmatpush.msra.mxu0 %v2013
    %2070 = vmatpush.msra.mxu0 %v2012
    %2071 = vmatpush.msra.mxu0 %v2011
    %2072 = vmatpush.msra.mxu0 %v2010
    %2073 = vmatpush.msra.mxu0 %v2009
    %2074 = vmatpush.msra.mxu0 %v2008
    %2075 = vmatmul.f32.gmra.mxu0 %v2017
    %v2076 = vpop.f32.mrf.mxu0
    %v2077 = vadd.f32 %v2057, %v2076
    %2078 = vdwg.mxu0
    %v2080 = vsel %vm63, %v1868, 0
    %2082 = vmatpush.msra.mxu0 %v1885
    %2083 = vmatpush.msra.mxu0 %v1884
    %2084 = vmatpush.msra.mxu0 %v1883
    %2085 = vmatpush.msra.mxu0 %v1882
    %2086 = vmatpush.msra.mxu0 %v1881
    %2087 = vmatpush.msra.mxu0 %v1880
    %2088 = vmatpush.msra.mxu0 %v1879
    %2089 = vmatpush.msra.mxu0 %v1878
    %2090 = vmatpush.msra.mxu0 %v1877
    %2091 = vmatpush.msra.mxu0 %v1876
    %2092 = vmatpush.msra.mxu0 %v1875
    %2093 = vmatpush.msra.mxu0 %v1874
    %2094 = vmatpush.msra.mxu0 %v1873
    %2095 = vmatpush.msra.mxu0 %v1872
    %2096 = vmatpush.msra.mxu0 %v1871
    %2097 = vmatpush.msra.mxu0 %v1870
    %2098 = vmatmul.f32.gmra.mxu0 %v1828
    %v2099 = vpop.f32.mrf.mxu0
    %v2100 = vadd.f32 %v2077, %v2099
    %2101 = vdwg.mxu0
    %2102 = vmatpush.msra.mxu0 %v1901
    %2103 = vmatpush.msra.mxu0 %v1900
    %2104 = vmatpush.msra.mxu0 %v1899
    %2105 = vmatpush.msra.mxu0 %v1898
    %2106 = vmatpush.msra.mxu0 %v1897
    %2107 = vmatpush.msra.mxu0 %v1896
    %2108 = vmatpush.msra.mxu0 %v1895
    %2109 = vmatpush.msra.mxu0 %v1894
    %2110 = vmatpush.msra.mxu0 %v1893
    %2111 = vmatpush.msra.mxu0 %v1892
    %2112 = vmatpush.msra.mxu0 %v1891
    %2113 = vmatpush.msra.mxu0 %v1890
    %2114 = vmatpush.msra.mxu0 %v1889
    %2115 = vmatpush.msra.mxu0 %v1888
    %2116 = vmatpush.msra.mxu0 %v1887
    %2117 = vmatpush.msra.mxu0 %v1886
    %2118 = vmatmul.f32.gmra.mxu0 %v1848
    %v2119 = vpop.f32.mrf.mxu0
    %v2120 = vadd.f32 %v2100, %v2119
    %2121 = vdwg.mxu0
    %2122 = vmatpush.msra.mxu0 0.0
    %2123 = vmatpush.msra.mxu0 0.0
    %2124 = vmatpush.msra.mxu0 0.0
    %2125 = vmatpush.msra.mxu0 0.0
    %2126 = vmatpush.msra.mxu0 0.0
    %2127 = vmatpush.msra.mxu0 0.0
    %2128 = vmatpush.msra.mxu0 0.0
    %2129 = vmatpush.msra.mxu0 0.0
    %2130 = vmatpush.msra.mxu0 %v1909
    %2131 = vmatpush.msra.mxu0 %v1908
    %2132 = vmatpush.msra.mxu0 %v1907
    %2133 = vmatpush.msra.mxu0 %v1906
    %2134 = vmatpush.msra.mxu0 %v1905
    %2135 = vmatpush.msra.mxu0 %v1904
    %2136 = vmatpush.msra.mxu0 %v1903
    %2137 = vmatpush.msra.mxu0 %v1902
    %2138 = vmatmul.f32.gmra.mxu0 %v2080
    %v2139 = vpop.f32.mrf.mxu0
    %v2140 = vadd.f32 %v2120, %v2139
    %2141 = vdwg.mxu0
    %s2142 = scalar_lea.vmem %s9, 8
    %v2143 = vld [vmem:[%s2142] sm:$0xf]
    %v2145 = vsel %vm1796, %v2143, 0
    %2147 = vmatpush.msra.mxu0 0.0
    %2148 = vmatpush.msra.mxu0 0.0
    %2149 = vmatpush.msra.mxu0 0.0
    %2150 = vmatpush.msra.mxu0 0.0
    %2151 = vmatpush.msra.mxu0 0.0
    %2152 = vmatpush.msra.mxu0 0.0
    %2153 = vmatpush.msra.mxu0 0.0
    %2154 = vmatpush.msra.mxu0 0.0
    %2155 = vmatpush.msra.mxu0 0.0
    %2156 = vmatpush.msra.mxu0 0.0
    %2157 = vmatpush.msra.mxu0 0.0
    %2158 = vmatpush.msra.mxu0 0.0
    %2159 = vmatpush.msra.mxu0 0.0
    %2160 = vmatpush.msra.mxu0 0.0
    %2161 = vmatpush.msra.mxu0 %v1802
    %2162 = vmatpush.msra.mxu0 %v1789
    %2163 = vmatmul.f32.gmra.mxu0 %v2145
    %v2164 = vpop.f32.mrf.mxu0
    %v2165 = vadd.f32 0.0, %v2164
    %2166 = vdwg.mxu0
    %2167 = vmatpush.msra.mxu0 0.0
    %2168 = vmatpush.msra.mxu0 0.0
    %2169 = vmatpush.msra.mxu0 0.0
    %2170 = vmatpush.msra.mxu0 0.0
    %2171 = vmatpush.msra.mxu0 0.0
    %2172 = vmatpush.msra.mxu0 0.0
    %2173 = vmatpush.msra.mxu0 0.0
    %2174 = vmatpush.msra.mxu0 0.0
    %2175 = vmatpush.msra.mxu0 0.0
    %2176 = vmatpush.msra.mxu0 0.0
    %2177 = vmatpush.msra.mxu0 0.0
    %2178 = vmatpush.msra.mxu0 0.0
    %2179 = vmatpush.msra.mxu0 0.0
    %2180 = vmatpush.msra.mxu0 0.0
    %2181 = vmatpush.msra.mxu0 %v1805
    %2182 = vmatpush.msra.mxu0 %v1790
    %2183 = vmatmul.f32.gmra.mxu0 %v2145
    %v2184 = vpop.f32.mrf.mxu0
    %v2185 = vadd.f32 0.0, %v2184
    %2186 = vdwg.mxu0
    %2187 = vmatpush.msra.mxu0 0.0
    %2188 = vmatpush.msra.mxu0 0.0
    %2189 = vmatpush.msra.mxu0 0.0
    %2190 = vmatpush.msra.mxu0 0.0
    %2191 = vmatpush.msra.mxu0 0.0
    %2192 = vmatpush.msra.mxu0 0.0
    %2193 = vmatpush.msra.mxu0 0.0
    %2194 = vmatpush.msra.mxu0 0.0
    %2195 = vmatpush.msra.mxu0 0.0
    %2196 = vmatpush.msra.mxu0 0.0
    %2197 = vmatpush.msra.mxu0 0.0
    %2198 = vmatpush.msra.mxu0 0.0
    %2199 = vmatpush.msra.mxu0 0.0
    %2200 = vmatpush.msra.mxu0 0.0
    %2201 = vmatpush.msra.mxu0 %v1808
    %2202 = vmatpush.msra.mxu0 %v1791
    %2203 = vmatmul.f32.gmra.mxu0 %v2145
    %v2204 = vpop.f32.mrf.mxu0
    %v2205 = vadd.f32 0.0, %v2204
    %2206 = vdwg.mxu0
    %s2207 = scalar_lea.vmem %s10, 640
    %v2208 = vld [vmem:[%s2207] sm:$0xff]
    %v2209 = vld [vmem:[%s2207 + $0x8] sm:$0xff]
    %v2210 = vld [vmem:[%s2207 + $0x10] sm:$0xff]
    %v2211 = vld [vmem:[%s2207 + $0x18] sm:$0xff]
    %v2212 = vld [vmem:[%s2207 + $0x20] sm:$0xff]
    %v2213 = vld [vmem:[%s2207 + $0x28] sm:$0xff]
    %v2214 = vld [vmem:[%s2207 + $0x30] sm:$0xff]
    %v2215 = vld [vmem:[%s2207 + $0x38] sm:$0xff]
    %v2216 = vld [vmem:[%s2207 + $0x40] sm:$0xff]
    %v2217 = vld [vmem:[%s2207 + $0x48] sm:$0xff]
    %v2218 = vld [vmem:[%s2207 + $0x50] sm:$0xff]
    %v2219 = vld [vmem:[%s2207 + $0x58] sm:$0xff]
    %v2220 = vld [vmem:[%s2207 + $0x60] sm:$0xff]
    %v2221 = vld [vmem:[%s2207 + $0x68] sm:$0xff]
    %v2222 = vld [vmem:[%s2207 + $0x70] sm:$0xff]
    %v2223 = vld [vmem:[%s2207 + $0x78] sm:$0xff]
    %v2224 = vld [vmem:[%s2207 + $0x80] sm:$0xff]
    %v2225 = vld [vmem:[%s2207 + $0x88] sm:$0xff]
    %v2226 = vld [vmem:[%s2207 + $0x90] sm:$0xff]
    %v2227 = vld [vmem:[%s2207 + $0x98] sm:$0xff]
    %v2228 = vld [vmem:[%s2207 + $0xa0] sm:$0xff]
    %v2229 = vld [vmem:[%s2207 + $0xa8] sm:$0xff]
    %v2230 = vld [vmem:[%s2207 + $0xb0] sm:$0xff]
    %v2231 = vld [vmem:[%s2207 + $0xb8] sm:$0xff]
    %v2232 = vld [vmem:[%s2207 + $0xc0] sm:$0xff]
    %v2233 = vld [vmem:[%s2207 + $0xc8] sm:$0xff]
    %v2234 = vld [vmem:[%s2207 + $0xd0] sm:$0xff]
    %v2235 = vld [vmem:[%s2207 + $0xd8] sm:$0xff]
    %v2236 = vld [vmem:[%s2207 + $0xe0] sm:$0xff]
    %v2237 = vld [vmem:[%s2207 + $0xe8] sm:$0xff]
    %v2238 = vld [vmem:[%s2207 + $0xf0] sm:$0xff]
    %v2239 = vld [vmem:[%s2207 + $0xf8] sm:$0xff]
    %v2240 = vld [vmem:[%s2207 + $0x100] sm:$0xff]
    %v2241 = vld [vmem:[%s2207 + $0x108] sm:$0xff]
    %v2242 = vld [vmem:[%s2207 + $0x110] sm:$0xff]
    %v2243 = vld [vmem:[%s2207 + $0x118] sm:$0xff]
    %v2244 = vld [vmem:[%s2207 + $0x120] sm:$0xff]
    %v2245 = vld [vmem:[%s2207 + $0x128] sm:$0xff]
    %v2246 = vld [vmem:[%s2207 + $0x130] sm:$0xff]
    %v2247 = vld [vmem:[%s2207 + $0x138] sm:$0xff]
    %v2249 = vsel %vm63, %v2205, 0
    %2251 = vmatpush.msra.mxu0 %v2223
    %2252 = vmatpush.msra.mxu0 %v2222
    %2253 = vmatpush.msra.mxu0 %v2221
    %2254 = vmatpush.msra.mxu0 %v2220
    %2255 = vmatpush.msra.mxu0 %v2219
    %2256 = vmatpush.msra.mxu0 %v2218
    %2257 = vmatpush.msra.mxu0 %v2217
    %2258 = vmatpush.msra.mxu0 %v2216
    %2259 = vmatpush.msra.mxu0 %v2215
    %2260 = vmatpush.msra.mxu0 %v2214
    %2261 = vmatpush.msra.mxu0 %v2213
    %2262 = vmatpush.msra.mxu0 %v2212
    %2263 = vmatpush.msra.mxu0 %v2211
    %2264 = vmatpush.msra.mxu0 %v2210
    %2265 = vmatpush.msra.mxu0 %v2209
    %2266 = vmatpush.msra.mxu0 %v2208
    %2267 = vmatmul.f32.gmra.mxu0 %v2165
    %v2268 = vpop.f32.mrf.mxu0
    %v2269 = vadd.f32 0.0, %v2268
    %2270 = vdwg.mxu0
    %2271 = vmatpush.msra.mxu0 %v2239
    %2272 = vmatpush.msra.mxu0 %v2238
    %2273 = vmatpush.msra.mxu0 %v2237
    %2274 = vmatpush.msra.mxu0 %v2236
    %2275 = vmatpush.msra.mxu0 %v2235
    %2276 = vmatpush.msra.mxu0 %v2234
    %2277 = vmatpush.msra.mxu0 %v2233
    %2278 = vmatpush.msra.mxu0 %v2232
    %2279 = vmatpush.msra.mxu0 %v2231
    %2280 = vmatpush.msra.mxu0 %v2230
    %2281 = vmatpush.msra.mxu0 %v2229
    %2282 = vmatpush.msra.mxu0 %v2228
    %2283 = vmatpush.msra.mxu0 %v2227
    %2284 = vmatpush.msra.mxu0 %v2226
    %2285 = vmatpush.msra.mxu0 %v2225
    %2286 = vmatpush.msra.mxu0 %v2224
    %2287 = vmatmul.f32.gmra.mxu0 %v2185
    %v2288 = vpop.f32.mrf.mxu0
    %v2289 = vadd.f32 %v2269, %v2288
    %2290 = vdwg.mxu0
    %2291 = vmatpush.msra.mxu0 0.0
    %2292 = vmatpush.msra.mxu0 0.0
    %2293 = vmatpush.msra.mxu0 0.0
    %2294 = vmatpush.msra.mxu0 0.0
    %2295 = vmatpush.msra.mxu0 0.0
    %2296 = vmatpush.msra.mxu0 0.0
    %2297 = vmatpush.msra.mxu0 0.0
    %2298 = vmatpush.msra.mxu0 0.0
    %2299 = vmatpush.msra.mxu0 %v2247
    %2300 = vmatpush.msra.mxu0 %v2246
    %2301 = vmatpush.msra.mxu0 %v2245
    %2302 = vmatpush.msra.mxu0 %v2244
    %2303 = vmatpush.msra.mxu0 %v2243
    %2304 = vmatpush.msra.mxu0 %v2242
    %2305 = vmatpush.msra.mxu0 %v2241
    %2306 = vmatpush.msra.mxu0 %v2240
    %2307 = vmatmul.f32.gmra.mxu0 %v2249
    %v2308 = vpop.f32.mrf.mxu0
    %v2309 = vadd.f32 %v2289, %v2308
    %2310 = vdwg.mxu0
    %v2311 = vadd.f32 %v2140, %v2309
    %v2312 = vsel %vm85, %v2311, 0.0
    %v2313 = vrot.slane %v2312, 4
    %v2314 = vadd.f32 %v2312, %v2313
    %v2315 = vrot.slane %v2314, 2
    %v2316 = vadd.f32 %v2314, %v2315
    %v2317 = vrot.slane %v2316, 1
    %v2318 = vadd.f32 %v2316, %v2317
    %v2319 = vmul.f32 %v2311, %v2311
    %v2320 = vsel %vm85, %v2319, 0.0
    %v2321 = vrot.slane %v2320, 4
    %v2322 = vadd.f32 %v2320, %v2321
    %v2323 = vrot.slane %v2322, 2
    %v2324 = vadd.f32 %v2322, %v2323
    %v2325 = vrot.slane %v2324, 1
    %v2326 = vadd.f32 %v2324, %v2325
    %v2327 = vadd.f32 %v2318, 0.0
    %v2328 = vadd.f32 %v2326, 0.0
    %2330 = vrot.lane.b32.xlu0 %v2318, 64
    %v2331 = vpop.permute.xlu0 %2330
    %v2333 = vadd.f32 %v2327, %v2331
    %2335 = vrot.lane.b32.xlu0 %v2326, 64
    %v2336 = vpop.permute.xlu0 %2335
    %v2338 = vadd.f32 %v2328, %v2336
    %v2339 = vrcp.pop 8.0
    %v2340 = vmul.f32 8.0, %v2339
    %v2341 = vsub.f32 1.0, %v2340
    %v2342 = vmul.f32 %v2339, %v2341
    %v2343 = vadd.f32 %v2339, %v2342
    %vm2344 = vweird.f32 %v2339
    %v2345 = vsel %vm2344, %v2339, %v2343
    %v2346 = vmul.f32 %v2333, %v2345
    %v2347 = vmul.f32 %v2338, %v2345
    %v2348 = vmul.f32 %v2346, %v2346
    %v2349 = vsub.f32 %v2347, %v2348
    %v2350 = vmax.f32 %v2349, 0.0
    %v2351 = vld [vmem:[%s11] sm:$0x1]
    %v2352 = vadd.f32 %v2350, 1e-05
    %v2353 = vrsqrt.pop %v2352
    %v2354 = vmul.f32 %v2353, %v2352
    %v2355 = vmul.f32 %v2354, %v2353
    %v2356 = vmul.f32 0.5, %v2355
    %v2357 = vsub.f32 1.5, %v2356
    %v2358 = vmul.f32 %v2353, %v2357
    %vm2359 = vweird.f32 %v2352
    %vm2360 = vweird.f32 %v2353
    %vm2361 = vmor %vm2359, %vm2360
    %v2362 = vsel %vm2361, %v2353, %v2358
    %v2363 = vmul.f32 %v2351, %v2362
    %v2364 = vld [vmem:[%s12] sm:$0x1]
    %v2365 = vmul.f32 %v2346, %v2363
    %v2366 = vsub.f32 %v2364, %v2365
    %v2368 = vperm.slane %v2363, 0
    %v2370 = vmul.f32 %v2311, %v2368
    %v2372 = vperm.slane %v2366, 0
    %v2374 = vadd.f32 %v2370, %v2372
    %v2375 = vmax.f32 %v2374, 0.0
    %v2377 = vrot.slane %v2375, 7
    %2378 = vrot.lane.b32.xlu0 %v2377, 64
    %v2379 = vpop.permute.xlu0 %2378
    %vm2381 = vcmask 1042945
    %2382 = vst.msk [vmem:[#allocation4] sm:$0x6] %vm2381, %v2379
    %2383 = vrot.lane.b32.xlu0 %v2368, 64
    %v2384 = vpop.permute.xlu0 %2383
    %v2386 = vmul.f32 %v2311, %v2384
    %2387 = vrot.lane.b32.xlu0 %v2372, 64
    %v2388 = vpop.permute.xlu0 %2387
    %v2390 = vadd.f32 %v2386, %v2388
    %v2391 = vmax.f32 %v2390, 0.0
    %v2393 = vrot.slane %v2391, 7
    %2394 = vrot.lane.b32.xlu0 %v2393, 64
    %v2395 = vpop.permute.xlu0 %2394
    %vm2397 = vcmask 518145
    %2398 = vst.msk [vmem:[#allocation4 + $0x8] sm:$0x6] %vm2397, %v2395
    %v2399 = vrot.slane %v2375, 5
    %2400 = vrot.lane.b32.xlu0 %v2399, 64
    %v2401 = vpop.permute.xlu0 %2400
    %vm2403 = vcmask 1047045
    %2404 = vst.msk [vmem:[#allocation4] sm:$0x60] %vm2403, %v2401
    %v2405 = vrot.slane %v2391, 5
    %2406 = vrot.lane.b32.xlu0 %v2405, 64
    %v2407 = vpop.permute.xlu0 %2406
    %vm2409 = vcmask 522245
    %2410 = vst.msk [vmem:[#allocation4 + $0x8] sm:$0x60] %vm2409, %v2407
    %v2411 = vld [vmem:[#allocation4] sm:$0xff]
    %v2412 = vld [vmem:[#allocation4 + $0x8] sm:$0xff]
    %v2413 = vld [vmem:[%s13] sm:$0x3]
    %vm2414 = vcmask 64512
    %v2416 = vsel %vm2414, %v2413, 0
    %2418 = vmatpush.msra.mxu0 0.0
    %2419 = vmatpush.msra.mxu0 0.0
    %2420 = vmatpush.msra.mxu0 0.0
    %2421 = vmatpush.msra.mxu0 0.0
    %2422 = vmatpush.msra.mxu0 0.0
    %2423 = vmatpush.msra.mxu0 0.0
    %2424 = vmatpush.msra.mxu0 0.0
    %2425 = vmatpush.msra.mxu0 0.0
    %2426 = vmatpush.msra.mxu0 0.0
    %2427 = vmatpush.msra.mxu0 0.0
    %2428 = vmatpush.msra.mxu0 0.0
    %2429 = vmatpush.msra.mxu0 0.0
    %2430 = vmatpush.msra.mxu0 0.0
    %2431 = vmatpush.msra.mxu0 0.0
    %2432 = vmatpush.msra.mxu0 0.0
    %2433 = vmatpush.msra.mxu0 %v2411
    %2434 = vmatmul.f32.gmra.mxu0 %v2416
    %v2435 = vpop.f32.mrf.mxu0
    %v2436 = vadd.f32 0.0, %v2435
    %2437 = vdwg.mxu0
    %2438 = vmatpush.msra.mxu0 0.0
    %2439 = vmatpush.msra.mxu0 0.0
    %2440 = vmatpush.msra.mxu0 0.0
    %2441 = vmatpush.msra.mxu0 0.0
    %2442 = vmatpush.msra.mxu0 0.0
    %2443 = vmatpush.msra.mxu0 0.0
    %2444 = vmatpush.msra.mxu0 0.0
    %2445 = vmatpush.msra.mxu0 0.0
    %2446 = vmatpush.msra.mxu0 0.0
    %2447 = vmatpush.msra.mxu0 0.0
    %2448 = vmatpush.msra.mxu0 0.0
    %2449 = vmatpush.msra.mxu0 0.0
    %2450 = vmatpush.msra.mxu0 0.0
    %2451 = vmatpush.msra.mxu0 0.0
    %2452 = vmatpush.msra.mxu0 0.0
    %2453 = vmatpush.msra.mxu0 %v2412
    %2454 = vmatmul.f32.gmra.mxu0 %v2416
    %v2455 = vpop.f32.mrf.mxu0
    %v2456 = vadd.f32 0.0, %v2455
    %2457 = vdwg.mxu0
    %v2458 = vld [vmem:[%s14] sm:$0xff]
    %v2459 = vld [vmem:[%s14 + $0x8] sm:$0xff]
    %v2460 = vld [vmem:[%s14 + $0x10] sm:$0xff]
    %v2461 = vld [vmem:[%s14 + $0x18] sm:$0xff]
    %v2462 = vld [vmem:[%s14 + $0x20] sm:$0xff]
    %v2463 = vld [vmem:[%s14 + $0x28] sm:$0xff]
    %v2464 = vld [vmem:[%s14 + $0x30] sm:$0xff]
    %v2465 = vld [vmem:[%s14 + $0x38] sm:$0xff]
    %v2466 = vld [vmem:[%s14 + $0x40] sm:$0xff]
    %v2467 = vld [vmem:[%s14 + $0x48] sm:$0xff]
    %v2468 = vld [vmem:[%s14 + $0x50] sm:$0xff]
    %v2469 = vld [vmem:[%s14 + $0x58] sm:$0xff]
    %v2470 = vld [vmem:[%s14 + $0x60] sm:$0xff]
    %v2471 = vld [vmem:[%s14 + $0x68] sm:$0xff]
    %v2472 = vld [vmem:[%s14 + $0x70] sm:$0xff]
    %v2473 = vld [vmem:[%s14 + $0x78] sm:$0xff]
    %v2474 = vld [vmem:[%s14 + $0x80] sm:$0xff]
    %v2475 = vld [vmem:[%s14 + $0x88] sm:$0xff]
    %v2476 = vld [vmem:[%s14 + $0x90] sm:$0xff]
    %v2477 = vld [vmem:[%s14 + $0x98] sm:$0xff]
    %v2478 = vld [vmem:[%s14 + $0xa0] sm:$0xff]
    %v2479 = vld [vmem:[%s14 + $0xa8] sm:$0xff]
    %v2480 = vld [vmem:[%s14 + $0xb0] sm:$0xff]
    %v2481 = vld [vmem:[%s14 + $0xb8] sm:$0xff]
    %v2482 = vld [vmem:[%s14 + $0xc0] sm:$0xff]
    %v2483 = vld [vmem:[%s14 + $0xc8] sm:$0xff]
    %v2484 = vld [vmem:[%s14 + $0xd0] sm:$0xff]
    %v2485 = vld [vmem:[%s14 + $0xd8] sm:$0xff]
    %v2486 = vld [vmem:[%s14 + $0xe0] sm:$0xff]
    %v2487 = vld [vmem:[%s14 + $0xe8] sm:$0xff]
    %v2488 = vld [vmem:[%s14 + $0xf0] sm:$0xff]
    %v2489 = vld [vmem:[%s14 + $0xf8] sm:$0xff]
    %s2490 = scalar_lea.vmem %s13, 2
    %v2491 = vld [vmem:[%s2490] sm:$0x3]
    %v2493 = vsel %vm2414, %v2491, 0
    %2495 = vmatpush.msra.mxu0 0.0
    %2496 = vmatpush.msra.mxu0 0.0
    %2497 = vmatpush.msra.mxu0 0.0
    %2498 = vmatpush.msra.mxu0 0.0
    %2499 = vmatpush.msra.mxu0 0.0
    %2500 = vmatpush.msra.mxu0 0.0
    %2501 = vmatpush.msra.mxu0 0.0
    %2502 = vmatpush.msra.mxu0 0.0
    %2503 = vmatpush.msra.mxu0 0.0
    %2504 = vmatpush.msra.mxu0 0.0
    %2505 = vmatpush.msra.mxu0 0.0
    %2506 = vmatpush.msra.mxu0 0.0
    %2507 = vmatpush.msra.mxu0 0.0
    %2508 = vmatpush.msra.mxu0 0.0
    %2509 = vmatpush.msra.mxu0 0.0
    %2510 = vmatpush.msra.mxu0 %v2411
    %2511 = vmatmul.f32.gmra.mxu0 %v2493
    %v2512 = vpop.f32.mrf.mxu0
    %v2513 = vadd.f32 0.0, %v2512
    %2514 = vdwg.mxu0
    %2515 = vmatpush.msra.mxu0 0.0
    %2516 = vmatpush.msra.mxu0 0.0
    %2517 = vmatpush.msra.mxu0 0.0
    %2518 = vmatpush.msra.mxu0 0.0
    %2519 = vmatpush.msra.mxu0 0.0
    %2520 = vmatpush.msra.mxu0 0.0
    %2521 = vmatpush.msra.mxu0 0.0
    %2522 = vmatpush.msra.mxu0 0.0
    %2523 = vmatpush.msra.mxu0 0.0
    %2524 = vmatpush.msra.mxu0 0.0
    %2525 = vmatpush.msra.mxu0 0.0
    %2526 = vmatpush.msra.mxu0 0.0
    %2527 = vmatpush.msra.mxu0 0.0
    %2528 = vmatpush.msra.mxu0 0.0
    %2529 = vmatpush.msra.mxu0 0.0
    %2530 = vmatpush.msra.mxu0 %v2412
    %2531 = vmatmul.f32.gmra.mxu0 %v2493
    %v2532 = vpop.f32.mrf.mxu0
    %v2533 = vadd.f32 0.0, %v2532
    %2534 = vdwg.mxu0
    %s2535 = scalar_lea.vmem %s14, 256
    %v2536 = vld [vmem:[%s2535] sm:$0xff]
    %v2537 = vld [vmem:[%s2535 + $0x8] sm:$0xff]
    %v2538 = vld [vmem:[%s2535 + $0x10] sm:$0xff]
    %v2539 = vld [vmem:[%s2535 + $0x18] sm:$0xff]
    %v2540 = vld [vmem:[%s2535 + $0x20] sm:$0xff]
    %v2541 = vld [vmem:[%s2535 + $0x28] sm:$0xff]
    %v2542 = vld [vmem:[%s2535 + $0x30] sm:$0xff]
    %v2543 = vld [vmem:[%s2535 + $0x38] sm:$0xff]
    %v2544 = vld [vmem:[%s2535 + $0x40] sm:$0xff]
    %v2545 = vld [vmem:[%s2535 + $0x48] sm:$0xff]
    %v2546 = vld [vmem:[%s2535 + $0x50] sm:$0xff]
    %v2547 = vld [vmem:[%s2535 + $0x58] sm:$0xff]
    %v2548 = vld [vmem:[%s2535 + $0x60] sm:$0xff]
    %v2549 = vld [vmem:[%s2535 + $0x68] sm:$0xff]
    %v2550 = vld [vmem:[%s2535 + $0x70] sm:$0xff]
    %v2551 = vld [vmem:[%s2535 + $0x78] sm:$0xff]
    %v2552 = vld [vmem:[%s2535 + $0x80] sm:$0xff]
    %v2553 = vld [vmem:[%s2535 + $0x88] sm:$0xff]
    %v2554 = vld [vmem:[%s2535 + $0x90] sm:$0xff]
    %v2555 = vld [vmem:[%s2535 + $0x98] sm:$0xff]
    %v2556 = vld [vmem:[%s2535 + $0xa0] sm:$0xff]
    %v2557 = vld [vmem:[%s2535 + $0xa8] sm:$0xff]
    %v2558 = vld [vmem:[%s2535 + $0xb0] sm:$0xff]
    %v2559 = vld [vmem:[%s2535 + $0xb8] sm:$0xff]
    %v2560 = vld [vmem:[%s2535 + $0xc0] sm:$0xff]
    %v2561 = vld [vmem:[%s2535 + $0xc8] sm:$0xff]
    %v2562 = vld [vmem:[%s2535 + $0xd0] sm:$0xff]
    %v2563 = vld [vmem:[%s2535 + $0xd8] sm:$0xff]
    %v2564 = vld [vmem:[%s2535 + $0xe0] sm:$0xff]
    %v2565 = vld [vmem:[%s2535 + $0xe8] sm:$0xff]
    %v2566 = vld [vmem:[%s2535 + $0xf0] sm:$0xff]
    %v2567 = vld [vmem:[%s2535 + $0xf8] sm:$0xff]
    %2568 = vmatpush.msra.mxu0 %v2551
    %2569 = vmatpush.msra.mxu0 %v2550
    %2570 = vmatpush.msra.mxu0 %v2549
    %2571 = vmatpush.msra.mxu0 %v2548
    %2572 = vmatpush.msra.mxu0 %v2547
    %2573 = vmatpush.msra.mxu0 %v2546
    %2574 = vmatpush.msra.mxu0 %v2545
    %2575 = vmatpush.msra.mxu0 %v2544
    %2576 = vmatpush.msra.mxu0 %v2543
    %2577 = vmatpush.msra.mxu0 %v2542
    %2578 = vmatpush.msra.mxu0 %v2541
    %2579 = vmatpush.msra.mxu0 %v2540
    %2580 = vmatpush.msra.mxu0 %v2539
    %2581 = vmatpush.msra.mxu0 %v2538
    %2582 = vmatpush.msra.mxu0 %v2537
    %2583 = vmatpush.msra.mxu0 %v2536
    %2584 = vmatmul.f32.gmra.mxu0 %v2513
    %v2585 = vpop.f32.mrf.mxu0
    %v2586 = vadd.f32 0.0, %v2585
    %2587 = vdwg.mxu0
    %2588 = vmatpush.msra.mxu0 %v2567
    %2589 = vmatpush.msra.mxu0 %v2566
    %2590 = vmatpush.msra.mxu0 %v2565
    %2591 = vmatpush.msra.mxu0 %v2564
    %2592 = vmatpush.msra.mxu0 %v2563
    %2593 = vmatpush.msra.mxu0 %v2562
    %2594 = vmatpush.msra.mxu0 %v2561
    %2595 = vmatpush.msra.mxu0 %v2560
    %2596 = vmatpush.msra.mxu0 %v2559
    %2597 = vmatpush.msra.mxu0 %v2558
    %2598 = vmatpush.msra.mxu0 %v2557
    %2599 = vmatpush.msra.mxu0 %v2556
    %2600 = vmatpush.msra.mxu0 %v2555
    %2601 = vmatpush.msra.mxu0 %v2554
    %2602 = vmatpush.msra.mxu0 %v2553
    %2603 = vmatpush.msra.mxu0 %v2552
    %2604 = vmatmul.f32.gmra.mxu0 %v2533
    %v2605 = vpop.f32.mrf.mxu0
    %v2606 = vadd.f32 %v2586, %v2605
    %2607 = vdwg.mxu0
    %2608 = vmatpush.msra.mxu0 %v2473
    %2609 = vmatpush.msra.mxu0 %v2472
    %2610 = vmatpush.msra.mxu0 %v2471
    %2611 = vmatpush.msra.mxu0 %v2470
    %2612 = vmatpush.msra.mxu0 %v2469
    %2613 = vmatpush.msra.mxu0 %v2468
    %2614 = vmatpush.msra.mxu0 %v2467
    %2615 = vmatpush.msra.mxu0 %v2466
    %2616 = vmatpush.msra.mxu0 %v2465
    %2617 = vmatpush.msra.mxu0 %v2464
    %2618 = vmatpush.msra.mxu0 %v2463
    %2619 = vmatpush.msra.mxu0 %v2462
    %2620 = vmatpush.msra.mxu0 %v2461
    %2621 = vmatpush.msra.mxu0 %v2460
    %2622 = vmatpush.msra.mxu0 %v2459
    %2623 = vmatpush.msra.mxu0 %v2458
    %2624 = vmatmul.f32.gmra.mxu0 %v2436
    %v2625 = vpop.f32.mrf.mxu0
    %v2626 = vadd.f32 %v2606, %v2625
    %2627 = vdwg.mxu0
    %2628 = vmatpush.msra.mxu0 %v2489
    %2629 = vmatpush.msra.mxu0 %v2488
    %2630 = vmatpush.msra.mxu0 %v2487
    %2631 = vmatpush.msra.mxu0 %v2486
    %2632 = vmatpush.msra.mxu0 %v2485
    %2633 = vmatpush.msra.mxu0 %v2484
    %2634 = vmatpush.msra.mxu0 %v2483
    %2635 = vmatpush.msra.mxu0 %v2482
    %2636 = vmatpush.msra.mxu0 %v2481
    %2637 = vmatpush.msra.mxu0 %v2480
    %2638 = vmatpush.msra.mxu0 %v2479
    %2639 = vmatpush.msra.mxu0 %v2478
    %2640 = vmatpush.msra.mxu0 %v2477
    %2641 = vmatpush.msra.mxu0 %v2476
    %2642 = vmatpush.msra.mxu0 %v2475
    %2643 = vmatpush.msra.mxu0 %v2474
    %2644 = vmatmul.f32.gmra.mxu0 %v2456
    %v2645 = vpop.f32.mrf.mxu0
    %v2646 = vadd.f32 %v2626, %v2645
    %2647 = vdwg.mxu0
    %s2648 = scalar_lea.vmem %s13, 4
    %v2649 = vld [vmem:[%s2648] sm:$0x3]
    %v2651 = vsel %vm2414, %v2649, 0
    %2653 = vmatpush.msra.mxu0 0.0
    %2654 = vmatpush.msra.mxu0 0.0
    %2655 = vmatpush.msra.mxu0 0.0
    %2656 = vmatpush.msra.mxu0 0.0
    %2657 = vmatpush.msra.mxu0 0.0
    %2658 = vmatpush.msra.mxu0 0.0
    %2659 = vmatpush.msra.mxu0 0.0
    %2660 = vmatpush.msra.mxu0 0.0
    %2661 = vmatpush.msra.mxu0 0.0
    %2662 = vmatpush.msra.mxu0 0.0
    %2663 = vmatpush.msra.mxu0 0.0
    %2664 = vmatpush.msra.mxu0 0.0
    %2665 = vmatpush.msra.mxu0 0.0
    %2666 = vmatpush.msra.mxu0 0.0
    %2667 = vmatpush.msra.mxu0 0.0
    %2668 = vmatpush.msra.mxu0 %v2411
    %2669 = vmatmul.f32.gmra.mxu0 %v2651
    %v2670 = vpop.f32.mrf.mxu0
    %v2671 = vadd.f32 0.0, %v2670
    %2672 = vdwg.mxu0
    %2673 = vmatpush.msra.mxu0 0.0
    %2674 = vmatpush.msra.mxu0 0.0
    %2675 = vmatpush.msra.mxu0 0.0
    %2676 = vmatpush.msra.mxu0 0.0
    %2677 = vmatpush.msra.mxu0 0.0
    %2678 = vmatpush.msra.mxu0 0.0
    %2679 = vmatpush.msra.mxu0 0.0
    %2680 = vmatpush.msra.mxu0 0.0
    %2681 = vmatpush.msra.mxu0 0.0
    %2682 = vmatpush.msra.mxu0 0.0
    %2683 = vmatpush.msra.mxu0 0.0
    %2684 = vmatpush.msra.mxu0 0.0
    %2685 = vmatpush.msra.mxu0 0.0
    %2686 = vmatpush.msra.mxu0 0.0
    %2687 = vmatpush.msra.mxu0 0.0
    %2688 = vmatpush.msra.mxu0 %v2412
    %2689 = vmatmul.f32.gmra.mxu0 %v2651
    %v2690 = vpop.f32.mrf.mxu0
    %v2691 = vadd.f32 0.0, %v2690
    %2692 = vdwg.mxu0
    %s2693 = scalar_lea.vmem %s14, 512
    %v2694 = vld [vmem:[%s2693] sm:$0xff]
    %v2695 = vld [vmem:[%s2693 + $0x8] sm:$0xff]
    %v2696 = vld [vmem:[%s2693 + $0x10] sm:$0xff]
    %v2697 = vld [vmem:[%s2693 + $0x18] sm:$0xff]
    %v2698 = vld [vmem:[%s2693 + $0x20] sm:$0xff]
    %v2699 = vld [vmem:[%s2693 + $0x28] sm:$0xff]
    %v2700 = vld [vmem:[%s2693 + $0x30] sm:$0xff]
    %v2701 = vld [vmem:[%s2693 + $0x38] sm:$0xff]
    %v2702 = vld [vmem:[%s2693 + $0x40] sm:$0xff]
    %v2703 = vld [vmem:[%s2693 + $0x48] sm:$0xff]
    %v2704 = vld [vmem:[%s2693 + $0x50] sm:$0xff]
    %v2705 = vld [vmem:[%s2693 + $0x58] sm:$0xff]
    %v2706 = vld [vmem:[%s2693 + $0x60] sm:$0xff]
    %v2707 = vld [vmem:[%s2693 + $0x68] sm:$0xff]
    %v2708 = vld [vmem:[%s2693 + $0x70] sm:$0xff]
    %v2709 = vld [vmem:[%s2693 + $0x78] sm:$0xff]
    %v2710 = vld [vmem:[%s2693 + $0x80] sm:$0xff]
    %v2711 = vld [vmem:[%s2693 + $0x88] sm:$0xff]
    %v2712 = vld [vmem:[%s2693 + $0x90] sm:$0xff]
    %v2713 = vld [vmem:[%s2693 + $0x98] sm:$0xff]
    %v2714 = vld [vmem:[%s2693 + $0xa0] sm:$0xff]
    %v2715 = vld [vmem:[%s2693 + $0xa8] sm:$0xff]
    %v2716 = vld [vmem:[%s2693 + $0xb0] sm:$0xff]
    %v2717 = vld [vmem:[%s2693 + $0xb8] sm:$0xff]
    %v2718 = vld [vmem:[%s2693 + $0xc0] sm:$0xff]
    %v2719 = vld [vmem:[%s2693 + $0xc8] sm:$0xff]
    %v2720 = vld [vmem:[%s2693 + $0xd0] sm:$0xff]
    %v2721 = vld [vmem:[%s2693 + $0xd8] sm:$0xff]
    %v2722 = vld [vmem:[%s2693 + $0xe0] sm:$0xff]
    %v2723 = vld [vmem:[%s2693 + $0xe8] sm:$0xff]
    %v2724 = vld [vmem:[%s2693 + $0xf0] sm:$0xff]
    %v2725 = vld [vmem:[%s2693 + $0xf8] sm:$0xff]
    %2726 = vmatpush.msra.mxu0 %v2709
    %2727 = vmatpush.msra.mxu0 %v2708
    %2728 = vmatpush.msra.mxu0 %v2707
    %2729 = vmatpush.msra.mxu0 %v2706
    %2730 = vmatpush.msra.mxu0 %v2705
    %2731 = vmatpush.msra.mxu0 %v2704
    %2732 = vmatpush.msra.mxu0 %v2703
    %2733 = vmatpush.msra.mxu0 %v2702
    %2734 = vmatpush.msra.mxu0 %v2701
    %2735 = vmatpush.msra.mxu0 %v2700
    %2736 = vmatpush.msra.mxu0 %v2699
    %2737 = vmatpush.msra.mxu0 %v2698
    %2738 = vmatpush.msra.mxu0 %v2697
    %2739 = vmatpush.msra.mxu0 %v2696
    %2740 = vmatpush.msra.mxu0 %v2695
    %2741 = vmatpush.msra.mxu0 %v2694
    %2742 = vmatmul.f32.gmra.mxu0 %v2671
    %v2743 = vpop.f32.mrf.mxu0
    %v2744 = vadd.f32 0.0, %v2743
    %2745 = vdwg.mxu0
    %2746 = vmatpush.msra.mxu0 %v2725
    %2747 = vmatpush.msra.mxu0 %v2724
    %2748 = vmatpush.msra.mxu0 %v2723
    %2749 = vmatpush.msra.mxu0 %v2722
    %2750 = vmatpush.msra.mxu0 %v2721
    %2751 = vmatpush.msra.mxu0 %v2720
    %2752 = vmatpush.msra.mxu0 %v2719
    %2753 = vmatpush.msra.mxu0 %v2718
    %2754 = vmatpush.msra.mxu0 %v2717
    %2755 = vmatpush.msra.mxu0 %v2716
    %2756 = vmatpush.msra.mxu0 %v2715
    %2757 = vmatpush.msra.mxu0 %v2714
    %2758 = vmatpush.msra.mxu0 %v2713
    %2759 = vmatpush.msra.mxu0 %v2712
    %2760 = vmatpush.msra.mxu0 %v2711
    %2761 = vmatpush.msra.mxu0 %v2710
    %2762 = vmatmul.f32.gmra.mxu0 %v2691
    %v2763 = vpop.f32.mrf.mxu0
    %v2764 = vadd.f32 %v2744, %v2763
    %2765 = vdwg.mxu0
    %v2766 = vadd.f32 %v2646, %v2764
    %v2767 = vsel %vm1800, %v2766, 0.0
    %v2768 = vrot.slane %v2767, 4
    %v2769 = vadd.f32 %v2767, %v2768
    %v2770 = vrot.slane %v2769, 2
    %v2771 = vadd.f32 %v2769, %v2770
    %v2772 = vrot.slane %v2771, 1
    %v2773 = vadd.f32 %v2771, %v2772
    %v2774 = vmul.f32 %v2766, %v2766
    %v2775 = vsel %vm1800, %v2774, 0.0
    %v2776 = vrot.slane %v2775, 4
    %v2777 = vadd.f32 %v2775, %v2776
    %v2778 = vrot.slane %v2777, 2
    %v2779 = vadd.f32 %v2777, %v2778
    %v2780 = vrot.slane %v2779, 1
    %v2781 = vadd.f32 %v2779, %v2780
    %v2782 = vadd.f32 %v2773, 0.0
    %v2783 = vadd.f32 %v2781, 0.0
    %v2784 = vrcp.pop 2.0
    %v2785 = vmul.f32 2.0, %v2784
    %v2786 = vsub.f32 1.0, %v2785
    %v2787 = vmul.f32 %v2784, %v2786
    %v2788 = vadd.f32 %v2784, %v2787
    %vm2789 = vweird.f32 %v2784
    %v2790 = vsel %vm2789, %v2784, %v2788
    %v2791 = vmul.f32 %v2782, %v2790
    %v2792 = vmul.f32 %v2783, %v2790
    %v2793 = vmul.f32 %v2791, %v2791
    %v2794 = vsub.f32 %v2792, %v2793
    %v2795 = vmax.f32 %v2794, 0.0
    %v2796 = vld [vmem:[%s15] sm:$0x1]
    %v2797 = vadd.f32 %v2795, 1e-05
    %v2798 = vrsqrt.pop %v2797
    %v2799 = vmul.f32 %v2798, %v2797
    %v2800 = vmul.f32 %v2799, %v2798
    %v2801 = vmul.f32 0.5, %v2800
    %v2802 = vsub.f32 1.5, %v2801
    %v2803 = vmul.f32 %v2798, %v2802
    %vm2804 = vweird.f32 %v2797
    %vm2805 = vweird.f32 %v2798
    %vm2806 = vmor %vm2804, %vm2805
    %v2807 = vsel %vm2806, %v2798, %v2803
    %v2808 = vmul.f32 %v2796, %v2807
    %v2809 = vld [vmem:[%s16] sm:$0x1]
    %v2810 = vmul.f32 %v2791, %v2808
    %v2811 = vsub.f32 %v2809, %v2810
    %v2813 = vperm.slane %v2808, 0
    %v2815 = vmul.f32 %v2766, %v2813
    %v2817 = vperm.slane %v2811, 0
    %v2819 = vadd.f32 %v2815, %v2817
    %v2820 = vmax.f32 %v2819, 0.0
    %2821 = vst [vmem:[#allocation5] sm:$0x3] %v2820
    // Predicated region
    $region70: #{tpu_custom_call.1} parent=1 // pred_check
      _
    $region71: #{tpu_custom_call.1} parent=1 // pred_check_branch
      %2823 = sbr.rel (0) target = $region73
    $region72: #{tpu_custom_call.1} parent=1 // pred_region
      %2825 = vsyncadd [#allocation6], 0
      %s2827 = sshll.u32 [#allocation5], 4
      %s2828 = int_to_ptr.vmem [resolvable:$true] %s2827
      %s2829 = sshll.u32 %s17, 4
      %s2830 = int_to_ptr.hbm [resolvable:$true] %s2829
      %2832 = dma.vmem_to_hbm [thread:$0]  %s2828, 32, %s2830, [#allocation6]
    $region73: #{tpu_custom_call.1} parent=1 // pred_fallthru
      _
    // Predicated region
    $region74: #{tpu_custom_call.1} parent=1 // pred_check
      _
    $region75: #{tpu_custom_call.1} parent=1 // pred_check_branch
      %2834 = sbr.rel (0) target = $region77
    $region76: #{tpu_custom_call.1} parent=1 // pred_region
      %2836 = dma.done [#allocation6], 32
    $region77: #{tpu_custom_call.1} parent=1 // pred_fallthru
      _
    %2837 = vsyncpa [#allocation6], 1

</llo_original>
